<compile_context>
chip_gen: v7x
topology: tpu7x:2x2x1
jax: 0.10.0
libtpu: 0.0.40
codegen_flags: <defaults>
</compile_context>

<pallas_src>
import math

import jax
import jax.numpy as jnp
from jax.experimental import pallas as pl
from jax.experimental.pallas import tpu as pltpu

# ---------------- model hyper-parameters (small, synthetic) -----------------
VOCAB = 64
SEQ = 8
HIDDEN = 32
NUM_HEADS = 4
HEAD_DIM = HIDDEN // NUM_HEADS
FFN = 64
NUM_LAYERS = 2
BATCH = 2
LN_EPS = 1e-12
TOKENS = BATCH * SEQ


# ------------------------------- helpers ------------------------------------
def _layernorm(x, g, b, eps=LN_EPS):
    mu = jnp.mean(x, axis=-1, keepdims=True)
    var = jnp.mean((x - mu) ** 2, axis=-1, keepdims=True)
    return (x - mu) * jax.lax.rsqrt(var + eps) * g + b


def _gelu(x):
    # tanh-approximate GELU (EUP-friendly). HF BERT default is exact erf GELU.
    # TODO(synk): switch to erf GELU if bit-matching a real HF checkpoint is required.
    return 0.5 * x * (1.0 + jnp.tanh(0.7978845608028654 * (x + 0.044715 * x * x * x)))


def _attention(q, k, v):
    """q: (B, Q, H) f32, k/v: (B, S, H) f32 -> (B*Q, H) f32 context."""
    scale = 1.0 / math.sqrt(HEAD_DIM)
    qb = q.astype(jnp.bfloat16)
    kb = k.astype(jnp.bfloat16)
    vb = v.astype(jnp.bfloat16)
    heads = []
    for h in range(NUM_HEADS):                       # static unroll over heads
        lo = h * HEAD_DIM
        # contract on last dim of both operands (RHS consumed untransposed)
        s = jnp.einsum('bqd,bkd->bqk',
                       qb[:, :, lo:lo + HEAD_DIM],
                       kb[:, :, lo:lo + HEAD_DIM],
                       preferred_element_type=jnp.float32) * scale
        # TODO(synk): attention_mask handling omitted (all tokens assumed valid).
        s = s - jnp.max(s, axis=-1, keepdims=True)
        p = jnp.exp(s)
        # approx reciprocal uses the EUP slot; use approx=False for exact parity.
        p = p * pl.reciprocal(jnp.sum(p, axis=-1, keepdims=True), approx=True)
        heads.append(jnp.einsum('bqk,bkd->bqd',
                                p.astype(jnp.bfloat16),
                                vb[:, :, lo:lo + HEAD_DIM],
                                preferred_element_type=jnp.float32))
    # head outputs stay in registers; one lane-dim concatenate, no VMEM scratch.
    ctx = jnp.concatenate(heads, axis=-1)            # (B, Q, H)
    return ctx.reshape(q.shape[0] * q.shape[1], HIDDEN)


# -------------------------- fused Pallas kernel ------------------------------
def fused_encoder_kernel(ids_ref, tok_ref, pos_ref, eg_ref, eb_ref,
                         wqkv_ref, bqkv_ref, wo_ref, bo_ref,
                         g1_ref, b1_ref, wf1_ref, bf1_ref,
                         wf2_ref, bf2_ref, g2_ref, b2_ref,
                         o_ref):
    # ---- embedding: one-hot gather (bf16 MXU) + position add + LayerNorm ----
    ids = ids_ref[...]                                              # (T, 1) int32
    vocab_iota = jax.lax.broadcasted_iota(jnp.int32, (TOKENS, VOCAB), 1)
    onehot = jnp.where(ids == vocab_iota, 1.0, 0.0).astype(jnp.bfloat16)
    x = jnp.dot(onehot, tok_ref[...], preferred_element_type=jnp.float32)   # (T, H) f32
    # broadcast-add (SEQ, H) position rows over the batch dim inside the kernel
    x = (x.reshape(BATCH, SEQ, HIDDEN) + pos_ref[...]).reshape(TOKENS, HIDDEN)
    x = _layernorm(x, eg_ref[...], eb_ref[...])                     # (T, H) f32

    for l in range(NUM_LAYERS):                                     # static unroll
        last = (l == NUM_LAYERS - 1)

        # ---- fused QKV projection over the whole token slab (bf16 MXU) ----
        qkv = jnp.dot(x.astype(jnp.bfloat16), wqkv_ref[l],
                      preferred_element_type=jnp.float32) + bqkv_ref[l]
        q = qkv[:, 0 * HIDDEN:1 * HIDDEN].reshape(BATCH, SEQ, HIDDEN)
        k = qkv[:, 1 * HIDDEN:2 * HIDDEN].reshape(BATCH, SEQ, HIDDEN)
        v = qkv[:, 2 * HIDDEN:3 * HIDDEN].reshape(BATCH, SEQ, HIDDEN)

        if last:
            # Only the CLS token is returned -> restrict queries / residual /
            # out-proj / FFN / LayerNorms of the final layer to the CLS rows.
            q = q[:, :1, :]                                          # (B, 1, H)
            x_res = x.reshape(BATCH, SEQ, HIDDEN)[:, :1, :].reshape(BATCH, HIDDEN)
        else:
            x_res = x                                                # (T, H)

        ctx = _attention(q, k, v)                                    # (rows, H) f32
        attn = jnp.dot(ctx.astype(jnp.bfloat16), wo_ref[l],
                       preferred_element_type=jnp.float32) + bo_ref[l]
        h1 = _layernorm(x_res + attn, g1_ref[l], b1_ref[l])          # residual + post-LN

        # ---- feed-forward (bf16 MXU operands, f32 accumulate & elementwise) ----
        ff = jnp.dot(h1.astype(jnp.bfloat16), wf1_ref[l],
                     preferred_element_type=jnp.float32) + bf1_ref[l]
        ff = _gelu(ff)
        ff = jnp.dot(ff.astype(jnp.bfloat16), wf2_ref[l],
                     preferred_element_type=jnp.float32) + bf2_ref[l]
        x = _layernorm(h1 + ff, g2_ref[l], b2_ref[l])

    # after the CLS-only last layer, x is already the (BATCH, HIDDEN) CLS slab
    o_ref[...] = x.astype(o_ref.dtype)


# -------------------------- parameter construction ---------------------------
def init_params(key):
    def norm(k, shape, scale=0.02, dtype=jnp.bfloat16):
        return (scale * jax.random.normal(k, shape, dtype=jnp.float32)).astype(dtype)

    keys = jax.random.split(key, 8)
    L = NUM_LAYERS
    return {
        # matmul weights stored in bf16 (MXU operands); biases / LN params stay f32
        "tok_emb": norm(keys[0], (VOCAB, HIDDEN)),
        "pos_emb": norm(keys[1], (SEQ, HIDDEN), dtype=jnp.float32),
        "emb_ln_g": jnp.ones((1, HIDDEN), jnp.float32),
        "emb_ln_b": jnp.zeros((1, HIDDEN), jnp.float32),
        # per-layer weights stacked on a leading layer axis (indexed statically in-kernel)
        "w_qkv": norm(keys[2], (L, HIDDEN, 3 * HIDDEN)),
        "b_qkv": jnp.zeros((L, 1, 3 * HIDDEN), jnp.float32),
        "w_o": norm(keys[3], (L, HIDDEN, HIDDEN)),
        "b_o": jnp.zeros((L, 1, HIDDEN), jnp.float32),
        "ln1_g": jnp.ones((L, 1, HIDDEN), jnp.float32),
        "ln1_b": jnp.zeros((L, 1, HIDDEN), jnp.float32),
        "w_ff1": norm(keys[4], (L, HIDDEN, FFN)),
        "b_ff1": jnp.zeros((L, 1, FFN), jnp.float32),
        "w_ff2": norm(keys[5], (L, FFN, HIDDEN)),
        "b_ff2": jnp.zeros((L, 1, HIDDEN), jnp.float32),
        "ln2_g": jnp.ones((L, 1, HIDDEN), jnp.float32),
        "ln2_b": jnp.zeros((L, 1, HIDDEN), jnp.float32),
    }


def _cost_estimate():
    T, B, S, H, F, V, NH, D = TOKENS, BATCH, SEQ, HIDDEN, FFN, VOCAB, NUM_HEADS, HEAD_DIM
    emb = 2 * T * V * H
    full_layer = (2 * T * H * 3 * H                      # qkv proj
                  + 4 * B * NH * S * S * D               # scores + ctx
                  + 2 * T * H * H                        # out proj
                  + 4 * T * H * F)                       # ff1 + ff2
    last_layer = (2 * T * H * 3 * H
                  + 4 * B * NH * S * D                   # CLS-only queries
                  + 2 * B * H * H
                  + 4 * B * H * F)
    flops = emb + (NUM_LAYERS - 1) * full_layer + last_layer
    transc = ((NUM_LAYERS - 1) * (T * F + B * NH * S * S + 2 * T)
              + (B * F + B * NH * S + 2 * B))
    bytes_accessed = (4 * T                                           # ids (int32)
                      + 2 * V * H + 4 * S * H + 2 * 4 * H             # embeddings + emb LN
                      + NUM_LAYERS * (2 * H * 3 * H + 4 * 3 * H       # qkv (bf16 w, f32 b)
                                      + 2 * H * H + 4 * H             # out proj
                                      + 2 * H * F + 4 * F             # ff1
                                      + 2 * F * H + 4 * H             # ff2
                                      + 4 * 4 * H)                    # LN params
                      + 4 * B * H)                                    # output
    return pl.CostEstimate(flops=flops, transcendentals=transc,
                           bytes_accessed=bytes_accessed)


# ------------------------------ forward pass --------------------------------
@jax.jit
def text_encoder_forward(input_ids, params):
    """Equivalent of TextEncoder.forward: returns CLS-token hidden state (B, H)."""
    ids = input_ids.reshape(TOKENS, 1).astype(jnp.int32)

    vmem = pl.BlockSpec(memory_space=pltpu.MemorySpace.VMEM)
    return pl.pallas_call(
        fused_encoder_kernel,
        out_shape=jax.ShapeDtypeStruct((BATCH, HIDDEN), jnp.float32),
        in_specs=[vmem] * 17,
        out_specs=vmem,
        cost_estimate=_cost_estimate(),
    )(ids, params["tok_emb"], params["pos_emb"], params["emb_ln_g"], params["emb_ln_b"],
      params["w_qkv"], params["b_qkv"], params["w_o"], params["b_o"],
      params["ln1_g"], params["ln1_b"], params["w_ff1"], params["b_ff1"],
      params["w_ff2"], params["b_ff2"], params["ln2_g"], params["ln2_b"])


# ---------------------------------- main -------------------------------------
if __name__ == "__main__":
    key = jax.random.PRNGKey(0)
    pkey, ikey = jax.random.split(key)
    params = init_params(pkey)
    input_ids = jax.random.randint(ikey, (BATCH, SEQ), 0, VOCAB, dtype=jnp.int32)

    out = text_encoder_forward(input_ids, params)
    out = jax.block_until_ready(out)
    assert out.shape == (BATCH, HIDDEN)
    assert bool(jnp.all(jnp.isfinite(out)))
    print("KERNEL_OK")
</pallas_src>

<mosaic_0001>
module attributes {stable_mosaic.version = 11 : i64} {
  func.func @fused_encoder_kernel(%arg0: memref<16x1xi32, #tpu.memory_space<vmem>>, %arg1: memref<64x32xbf16, #tpu.memory_space<vmem>>, %arg2: memref<8x32xf32, #tpu.memory_space<vmem>>, %arg3: memref<1x32xf32, #tpu.memory_space<vmem>>, %arg4: memref<1x32xf32, #tpu.memory_space<vmem>>, %arg5: memref<2x32x96xbf16, #tpu.memory_space<vmem>>, %arg6: memref<2x1x96xf32, #tpu.memory_space<vmem>>, %arg7: memref<2x32x32xbf16, #tpu.memory_space<vmem>>, %arg8: memref<2x1x32xf32, #tpu.memory_space<vmem>>, %arg9: memref<2x1x32xf32, #tpu.memory_space<vmem>>, %arg10: memref<2x1x32xf32, #tpu.memory_space<vmem>>, %arg11: memref<2x32x64xbf16, #tpu.memory_space<vmem>>, %arg12: memref<2x1x64xf32, #tpu.memory_space<vmem>>, %arg13: memref<2x64x32xbf16, #tpu.memory_space<vmem>>, %arg14: memref<2x1x32xf32, #tpu.memory_space<vmem>>, %arg15: memref<2x1x32xf32, #tpu.memory_space<vmem>>, %arg16: memref<2x1x32xf32, #tpu.memory_space<vmem>>, %arg17: memref<2x32xf32, #tpu.memory_space<vmem>>) attributes {dimension_semantics = [], scalar_prefetch = 0 : i64, scratch_operands = 0 : i64, tpu.core_type = #tpu.core_type<tc>} {
    %c0 = arith.constant 0 : index
    %c0_0 = arith.constant 0 : index
    %0 = vector.load %arg0[%c0, %c0_0] : memref<16x1xi32, #tpu.memory_space<vmem>>, vector<16x1xi32>
    %1 = tpu.iota {dimensions = array<i32: 1>} : vector<16x64xi32>
    %2 = vector.broadcast %0 : vector<16x1xi32> to vector<16x64xi32>
    %3 = arith.cmpi eq, %2, %1 : vector<16x64xi32>
    %cst = arith.constant 1.000000e+00 : f32
    %cst_1 = arith.constant 0.000000e+00 : f32
    %4 = vector.broadcast %cst : f32 to vector<16x64xf32>
    %5 = vector.broadcast %cst_1 : f32 to vector<16x64xf32>
    %6 = arith.select %3, %4, %5 : vector<16x64xi1>, vector<16x64xf32>
    %7 = arith.truncf %6 : vector<16x64xf32> to vector<16x64xbf16>
    %c0_2 = arith.constant 0 : index
    %c0_3 = arith.constant 0 : index
    %8 = vector.load %arg1[%c0_2, %c0_3] : memref<64x32xbf16, #tpu.memory_space<vmem>>, vector<64x32xbf16>
    %cst_4 = arith.constant dense<0.000000e+00> : vector<16x32xf32>
    %9 = tpu.matmul %7, %8, %cst_4 {dimension_numbers = #tpu.dot_dimension_numbers<[1], [0], [0], [1], [0, 0, 1, 1], [], []>} : vector<16x64xbf16>, vector<64x32xbf16>, vector<16x32xf32> -> vector<16x32xf32>
    %10 = vector.shape_cast %9 : vector<16x32xf32> to vector<2x8x32xf32>
    %c0_5 = arith.constant 0 : index
    %c0_6 = arith.constant 0 : index
    %11 = vector.load %arg2[%c0_5, %c0_6] : memref<8x32xf32, #tpu.memory_space<vmem>>, vector<8x32xf32>
    %12 = vector.shape_cast %11 : vector<8x32xf32> to vector<1x8x32xf32>
    %13 = vector.broadcast %12 : vector<1x8x32xf32> to vector<2x8x32xf32>
    %14 = arith.addf %10, %13 : vector<2x8x32xf32>
    %15 = vector.shape_cast %14 : vector<2x8x32xf32> to vector<16x32xf32>
    %c0_7 = arith.constant 0 : index
    %c0_8 = arith.constant 0 : index
    %16 = vector.load %arg3[%c0_7, %c0_8] : memref<1x32xf32, #tpu.memory_space<vmem>>, vector<1x32xf32>
    %c0_9 = arith.constant 0 : index
    %c0_10 = arith.constant 0 : index
    %17 = vector.load %arg4[%c0_9, %c0_10] : memref<1x32xf32, #tpu.memory_space<vmem>>, vector<1x32xf32>
    %cst_11 = arith.constant dense<0.000000e+00> : vector<16xf32>
    %18 = vector.multi_reduction <add>, %15, %cst_11 [1] : vector<16x32xf32> to vector<16xf32>
    %19 = vector.shape_cast %18 : vector<16xf32> to vector<16x1xf32>
    %cst_12 = arith.constant 3.200000e+01 : f32
    %20 = vector.broadcast %cst_12 : f32 to vector<16x1xf32>
    %21 = arith.divf %19, %20 : vector<16x1xf32>
    %22 = vector.broadcast %21 : vector<16x1xf32> to vector<16x32xf32>
    %23 = arith.subf %15, %22 : vector<16x32xf32>
    %24 = arith.mulf %23, %23 : vector<16x32xf32>
    %cst_13 = arith.constant dense<0.000000e+00> : vector<16xf32>
    %25 = vector.multi_reduction <add>, %24, %cst_13 [1] : vector<16x32xf32> to vector<16xf32>
    %26 = vector.shape_cast %25 : vector<16xf32> to vector<16x1xf32>
    %cst_14 = arith.constant 3.200000e+01 : f32
    %27 = vector.broadcast %cst_14 : f32 to vector<16x1xf32>
    %28 = arith.divf %26, %27 : vector<16x1xf32>
    %29 = vector.broadcast %21 : vector<16x1xf32> to vector<16x32xf32>
    %30 = arith.subf %15, %29 : vector<16x32xf32>
    %cst_15 = arith.constant 9.99999996E-13 : f32
    %31 = vector.broadcast %cst_15 : f32 to vector<16x1xf32>
    %32 = arith.addf %28, %31 : vector<16x1xf32>
    %33 = math.rsqrt %32 : vector<16x1xf32>
    %34 = vector.broadcast %33 : vector<16x1xf32> to vector<16x32xf32>
    %35 = arith.mulf %30, %34 : vector<16x32xf32>
    %36 = vector.broadcast %16 : vector<1x32xf32> to vector<16x32xf32>
    %37 = arith.mulf %35, %36 : vector<16x32xf32>
    %38 = vector.broadcast %17 : vector<1x32xf32> to vector<16x32xf32>
    %39 = arith.addf %37, %38 : vector<16x32xf32>
    %40 = arith.truncf %39 : vector<16x32xf32> to vector<16x32xbf16>
    %c0_16 = arith.constant 0 : index
    %c0_17 = arith.constant 0 : index
    %c0_18 = arith.constant 0 : index
    %41 = vector.load %arg5[%c0_16, %c0_17, %c0_18] : memref<2x32x96xbf16, #tpu.memory_space<vmem>>, vector<1x32x96xbf16>
    %42 = vector.shape_cast %41 : vector<1x32x96xbf16> to vector<32x96xbf16>
    %cst_19 = arith.constant dense<0.000000e+00> : vector<16x96xf32>
    %43 = tpu.matmul %40, %42, %cst_19 {dimension_numbers = #tpu.dot_dimension_numbers<[1], [0], [0], [1], [0, 0, 1, 1], [], []>} : vector<16x32xbf16>, vector<32x96xbf16>, vector<16x96xf32> -> vector<16x96xf32>
    %c0_20 = arith.constant 0 : index
    %c0_21 = arith.constant 0 : index
    %c0_22 = arith.constant 0 : index
    %44 = vector.load %arg6[%c0_20, %c0_21, %c0_22] : memref<2x1x96xf32, #tpu.memory_space<vmem>>, vector<1x1x96xf32>
    %45 = vector.shape_cast %44 : vector<1x1x96xf32> to vector<1x96xf32>
    %46 = vector.broadcast %45 : vector<1x96xf32> to vector<16x96xf32>
    %47 = arith.addf %43, %46 : vector<16x96xf32>
    %48 = vector.extract_strided_slice %47 {offsets = [0, 0], sizes = [16, 32], strides = [1, 1]} : vector<16x96xf32> to vector<16x32xf32>
    %49 = vector.shape_cast %48 : vector<16x32xf32> to vector<2x8x32xf32>
    %50 = vector.extract_strided_slice %47 {offsets = [0, 32], sizes = [16, 32], strides = [1, 1]} : vector<16x96xf32> to vector<16x32xf32>
    %51 = vector.shape_cast %50 : vector<16x32xf32> to vector<2x8x32xf32>
    %52 = vector.extract_strided_slice %47 {offsets = [0, 64], sizes = [16, 32], strides = [1, 1]} : vector<16x96xf32> to vector<16x32xf32>
    %53 = vector.shape_cast %52 : vector<16x32xf32> to vector<2x8x32xf32>
    %54 = arith.truncf %49 : vector<2x8x32xf32> to vector<2x8x32xbf16>
    %55 = arith.truncf %51 : vector<2x8x32xf32> to vector<2x8x32xbf16>
    %56 = arith.truncf %53 : vector<2x8x32xf32> to vector<2x8x32xbf16>
    %57 = vector.extract_strided_slice %54 {offsets = [0, 0, 0], sizes = [2, 8, 8], strides = [1, 1, 1]} : vector<2x8x32xbf16> to vector<2x8x8xbf16>
    %58 = vector.extract_strided_slice %55 {offsets = [0, 0, 0], sizes = [2, 8, 8], strides = [1, 1, 1]} : vector<2x8x32xbf16> to vector<2x8x8xbf16>
    "tpu.trace_start"() <{level = 10 : i32, message = "bqd,bkd->bqk"}> : () -> ()
    %cst_23 = arith.constant dense<0.000000e+00> : vector<2x8x8xf32>
    %59 = tpu.matmul %57, %58, %cst_23 {dimension_numbers = #tpu.dot_dimension_numbers<[2], [2], [1], [1], [0, 0, 0, 1, 1, 1], [0], [0]>} : vector<2x8x8xbf16>, vector<2x8x8xbf16>, vector<2x8x8xf32> -> vector<2x8x8xf32>
    "tpu.trace_stop"() : () -> ()
    %cst_24 = arith.constant 0.353553385 : f32
    %60 = vector.broadcast %cst_24 : f32 to vector<2x8x8xf32>
    %61 = arith.mulf %59, %60 : vector<2x8x8xf32>
    %cst_25 = arith.constant dense<0xFF800000> : vector<2x8xf32>
    %62 = vector.multi_reduction <maximumf>, %61, %cst_25 [2] : vector<2x8x8xf32> to vector<2x8xf32>
    %63 = vector.shape_cast %62 : vector<2x8xf32> to vector<2x8x1xf32>
    %64 = vector.broadcast %63 : vector<2x8x1xf32> to vector<2x8x8xf32>
    %65 = arith.subf %61, %64 : vector<2x8x8xf32>
    %66 = math.exp %65 : vector<2x8x8xf32>
    %cst_26 = arith.constant dense<0.000000e+00> : vector<2x8xf32>
    %67 = vector.multi_reduction <add>, %66, %cst_26 [2] : vector<2x8x8xf32> to vector<2x8xf32>
    %68 = vector.shape_cast %67 : vector<2x8xf32> to vector<2x8x1xf32>
    %69 = tpu.reciprocal %68 {approx = true} : vector<2x8x1xf32> -> vector<2x8x1xf32>
    %70 = vector.broadcast %69 : vector<2x8x1xf32> to vector<2x8x8xf32>
    %71 = arith.mulf %66, %70 : vector<2x8x8xf32>
    %72 = arith.truncf %71 : vector<2x8x8xf32> to vector<2x8x8xbf16>
    %73 = vector.extract_strided_slice %56 {offsets = [0, 0, 0], sizes = [2, 8, 8], strides = [1, 1, 1]} : vector<2x8x32xbf16> to vector<2x8x8xbf16>
    "tpu.trace_start"() <{level = 10 : i32, message = "bqk,bkd->bqd"}> : () -> ()
    %cst_27 = arith.constant dense<0.000000e+00> : vector<2x8x8xf32>
    %74 = tpu.matmul %72, %73, %cst_27 {dimension_numbers = #tpu.dot_dimension_numbers<[2], [1], [1], [2], [0, 0, 0, 1, 1, 2], [0], [0]>} : vector<2x8x8xbf16>, vector<2x8x8xbf16>, vector<2x8x8xf32> -> vector<2x8x8xf32>
    "tpu.trace_stop"() : () -> ()
    %75 = vector.extract_strided_slice %54 {offsets = [0, 0, 8], sizes = [2, 8, 8], strides = [1, 1, 1]} : vector<2x8x32xbf16> to vector<2x8x8xbf16>
    %76 = vector.extract_strided_slice %55 {offsets = [0, 0, 8], sizes = [2, 8, 8], strides = [1, 1, 1]} : vector<2x8x32xbf16> to vector<2x8x8xbf16>
    "tpu.trace_start"() <{level = 10 : i32, message = "bqd,bkd->bqk"}> : () -> ()
    %cst_28 = arith.constant dense<0.000000e+00> : vector<2x8x8xf32>
    %77 = tpu.matmul %75, %76, %cst_28 {dimension_numbers = #tpu.dot_dimension_numbers<[2], [2], [1], [1], [0, 0, 0, 1, 1, 1], [0], [0]>} : vector<2x8x8xbf16>, vector<2x8x8xbf16>, vector<2x8x8xf32> -> vector<2x8x8xf32>
    "tpu.trace_stop"() : () -> ()
    %cst_29 = arith.constant 0.353553385 : f32
    %78 = vector.broadcast %cst_29 : f32 to vector<2x8x8xf32>
    %79 = arith.mulf %77, %78 : vector<2x8x8xf32>
    %cst_30 = arith.constant dense<0xFF800000> : vector<2x8xf32>
    %80 = vector.multi_reduction <maximumf>, %79, %cst_30 [2] : vector<2x8x8xf32> to vector<2x8xf32>
    %81 = vector.shape_cast %80 : vector<2x8xf32> to vector<2x8x1xf32>
    %82 = vector.broadcast %81 : vector<2x8x1xf32> to vector<2x8x8xf32>
    %83 = arith.subf %79, %82 : vector<2x8x8xf32>
    %84 = math.exp %83 : vector<2x8x8xf32>
    %cst_31 = arith.constant dense<0.000000e+00> : vector<2x8xf32>
    %85 = vector.multi_reduction <add>, %84, %cst_31 [2] : vector<2x8x8xf32> to vector<2x8xf32>
    %86 = vector.shape_cast %85 : vector<2x8xf32> to vector<2x8x1xf32>
    %87 = tpu.reciprocal %86 {approx = true} : vector<2x8x1xf32> -> vector<2x8x1xf32>
    %88 = vector.broadcast %87 : vector<2x8x1xf32> to vector<2x8x8xf32>
    %89 = arith.mulf %84, %88 : vector<2x8x8xf32>
    %90 = arith.truncf %89 : vector<2x8x8xf32> to vector<2x8x8xbf16>
    %91 = vector.extract_strided_slice %56 {offsets = [0, 0, 8], sizes = [2, 8, 8], strides = [1, 1, 1]} : vector<2x8x32xbf16> to vector<2x8x8xbf16>
    "tpu.trace_start"() <{level = 10 : i32, message = "bqk,bkd->bqd"}> : () -> ()
    %cst_32 = arith.constant dense<0.000000e+00> : vector<2x8x8xf32>
    %92 = tpu.matmul %90, %91, %cst_32 {dimension_numbers = #tpu.dot_dimension_numbers<[2], [1], [1], [2], [0, 0, 0, 1, 1, 2], [0], [0]>} : vector<2x8x8xbf16>, vector<2x8x8xbf16>, vector<2x8x8xf32> -> vector<2x8x8xf32>
    "tpu.trace_stop"() : () -> ()
    %93 = vector.extract_strided_slice %54 {offsets = [0, 0, 16], sizes = [2, 8, 8], strides = [1, 1, 1]} : vector<2x8x32xbf16> to vector<2x8x8xbf16>
    %94 = vector.extract_strided_slice %55 {offsets = [0, 0, 16], sizes = [2, 8, 8], strides = [1, 1, 1]} : vector<2x8x32xbf16> to vector<2x8x8xbf16>
    "tpu.trace_start"() <{level = 10 : i32, message = "bqd,bkd->bqk"}> : () -> ()
    %cst_33 = arith.constant dense<0.000000e+00> : vector<2x8x8xf32>
    %95 = tpu.matmul %93, %94, %cst_33 {dimension_numbers = #tpu.dot_dimension_numbers<[2], [2], [1], [1], [0, 0, 0, 1, 1, 1], [0], [0]>} : vector<2x8x8xbf16>, vector<2x8x8xbf16>, vector<2x8x8xf32> -> vector<2x8x8xf32>
    "tpu.trace_stop"() : () -> ()
    %cst_34 = arith.constant 0.353553385 : f32
    %96 = vector.broadcast %cst_34 : f32 to vector<2x8x8xf32>
    %97 = arith.mulf %95, %96 : vector<2x8x8xf32>
    %cst_35 = arith.constant dense<0xFF800000> : vector<2x8xf32>
    %98 = vector.multi_reduction <maximumf>, %97, %cst_35 [2] : vector<2x8x8xf32> to vector<2x8xf32>
    %99 = vector.shape_cast %98 : vector<2x8xf32> to vector<2x8x1xf32>
    %100 = vector.broadcast %99 : vector<2x8x1xf32> to vector<2x8x8xf32>
    %101 = arith.subf %97, %100 : vector<2x8x8xf32>
    %102 = math.exp %101 : vector<2x8x8xf32>
    %cst_36 = arith.constant dense<0.000000e+00> : vector<2x8xf32>
    %103 = vector.multi_reduction <add>, %102, %cst_36 [2] : vector<2x8x8xf32> to vector<2x8xf32>
    %104 = vector.shape_cast %103 : vector<2x8xf32> to vector<2x8x1xf32>
    %105 = tpu.reciprocal %104 {approx = true} : vector<2x8x1xf32> -> vector<2x8x1xf32>
    %106 = vector.broadcast %105 : vector<2x8x1xf32> to vector<2x8x8xf32>
    %107 = arith.mulf %102, %106 : vector<2x8x8xf32>
    %108 = arith.truncf %107 : vector<2x8x8xf32> to vector<2x8x8xbf16>
    %109 = vector.extract_strided_slice %56 {offsets = [0, 0, 16], sizes = [2, 8, 8], strides = [1, 1, 1]} : vector<2x8x32xbf16> to vector<2x8x8xbf16>
    "tpu.trace_start"() <{level = 10 : i32, message = "bqk,bkd->bqd"}> : () -> ()
    %cst_37 = arith.constant dense<0.000000e+00> : vector<2x8x8xf32>
    %110 = tpu.matmul %108, %109, %cst_37 {dimension_numbers = #tpu.dot_dimension_numbers<[2], [1], [1], [2], [0, 0, 0, 1, 1, 2], [0], [0]>} : vector<2x8x8xbf16>, vector<2x8x8xbf16>, vector<2x8x8xf32> -> vector<2x8x8xf32>
    "tpu.trace_stop"() : () -> ()
    %111 = vector.extract_strided_slice %54 {offsets = [0, 0, 24], sizes = [2, 8, 8], strides = [1, 1, 1]} : vector<2x8x32xbf16> to vector<2x8x8xbf16>
    %112 = vector.extract_strided_slice %55 {offsets = [0, 0, 24], sizes = [2, 8, 8], strides = [1, 1, 1]} : vector<2x8x32xbf16> to vector<2x8x8xbf16>
    "tpu.trace_start"() <{level = 10 : i32, message = "bqd,bkd->bqk"}> : () -> ()
    %cst_38 = arith.constant dense<0.000000e+00> : vector<2x8x8xf32>
    %113 = tpu.matmul %111, %112, %cst_38 {dimension_numbers = #tpu.dot_dimension_numbers<[2], [2], [1], [1], [0, 0, 0, 1, 1, 1], [0], [0]>} : vector<2x8x8xbf16>, vector<2x8x8xbf16>, vector<2x8x8xf32> -> vector<2x8x8xf32>
    "tpu.trace_stop"() : () -> ()
    %cst_39 = arith.constant 0.353553385 : f32
    %114 = vector.broadcast %cst_39 : f32 to vector<2x8x8xf32>
    %115 = arith.mulf %113, %114 : vector<2x8x8xf32>
    %cst_40 = arith.constant dense<0xFF800000> : vector<2x8xf32>
    %116 = vector.multi_reduction <maximumf>, %115, %cst_40 [2] : vector<2x8x8xf32> to vector<2x8xf32>
    %117 = vector.shape_cast %116 : vector<2x8xf32> to vector<2x8x1xf32>
    %118 = vector.broadcast %117 : vector<2x8x1xf32> to vector<2x8x8xf32>
    %119 = arith.subf %115, %118 : vector<2x8x8xf32>
    %120 = math.exp %119 : vector<2x8x8xf32>
    %cst_41 = arith.constant dense<0.000000e+00> : vector<2x8xf32>
    %121 = vector.multi_reduction <add>, %120, %cst_41 [2] : vector<2x8x8xf32> to vector<2x8xf32>
    %122 = vector.shape_cast %121 : vector<2x8xf32> to vector<2x8x1xf32>
    %123 = tpu.reciprocal %122 {approx = true} : vector<2x8x1xf32> -> vector<2x8x1xf32>
    %124 = vector.broadcast %123 : vector<2x8x1xf32> to vector<2x8x8xf32>
    %125 = arith.mulf %120, %124 : vector<2x8x8xf32>
    %126 = arith.truncf %125 : vector<2x8x8xf32> to vector<2x8x8xbf16>
    %127 = vector.extract_strided_slice %56 {offsets = [0, 0, 24], sizes = [2, 8, 8], strides = [1, 1, 1]} : vector<2x8x32xbf16> to vector<2x8x8xbf16>
    "tpu.trace_start"() <{level = 10 : i32, message = "bqk,bkd->bqd"}> : () -> ()
    %cst_42 = arith.constant dense<0.000000e+00> : vector<2x8x8xf32>
    %128 = tpu.matmul %126, %127, %cst_42 {dimension_numbers = #tpu.dot_dimension_numbers<[2], [1], [1], [2], [0, 0, 0, 1, 1, 2], [0], [0]>} : vector<2x8x8xbf16>, vector<2x8x8xbf16>, vector<2x8x8xf32> -> vector<2x8x8xf32>
    "tpu.trace_stop"() : () -> ()
    %129 = tpu.concatenate %74, %92, %110, %128 in 2 : vector<2x8x8xf32>, vector<2x8x8xf32>, vector<2x8x8xf32>, vector<2x8x8xf32> -> vector<2x8x32xf32>
    %130 = vector.shape_cast %129 : vector<2x8x32xf32> to vector<16x32xf32>
    %131 = arith.truncf %130 : vector<16x32xf32> to vector<16x32xbf16>
    %c0_43 = arith.constant 0 : index
    %c0_44 = arith.constant 0 : index
    %c0_45 = arith.constant 0 : index
    %132 = vector.load %arg7[%c0_43, %c0_44, %c0_45] : memref<2x32x32xbf16, #tpu.memory_space<vmem>>, vector<1x32x32xbf16>
    %133 = vector.shape_cast %132 : vector<1x32x32xbf16> to vector<32x32xbf16>
    %cst_46 = arith.constant dense<0.000000e+00> : vector<16x32xf32>
    %134 = tpu.matmul %131, %133, %cst_46 {dimension_numbers = #tpu.dot_dimension_numbers<[1], [0], [0], [1], [0, 0, 1, 1], [], []>} : vector<16x32xbf16>, vector<32x32xbf16>, vector<16x32xf32> -> vector<16x32xf32>
    %c0_47 = arith.constant 0 : index
    %c0_48 = arith.constant 0 : index
    %c0_49 = arith.constant 0 : index
    %135 = vector.load %arg8[%c0_47, %c0_48, %c0_49] : memref<2x1x32xf32, #tpu.memory_space<vmem>>, vector<1x1x32xf32>
    %136 = vector.shape_cast %135 : vector<1x1x32xf32> to vector<1x32xf32>
    %137 = vector.broadcast %136 : vector<1x32xf32> to vector<16x32xf32>
    %138 = arith.addf %134, %137 : vector<16x32xf32>
    %139 = arith.addf %39, %138 : vector<16x32xf32>
    %c0_50 = arith.constant 0 : index
    %c0_51 = arith.constant 0 : index
    %c0_52 = arith.constant 0 : index
    %140 = vector.load %arg9[%c0_50, %c0_51, %c0_52] : memref<2x1x32xf32, #tpu.memory_space<vmem>>, vector<1x1x32xf32>
    %141 = vector.shape_cast %140 : vector<1x1x32xf32> to vector<1x32xf32>
    %c0_53 = arith.constant 0 : index
    %c0_54 = arith.constant 0 : index
    %c0_55 = arith.constant 0 : index
    %142 = vector.load %arg10[%c0_53, %c0_54, %c0_55] : memref<2x1x32xf32, #tpu.memory_space<vmem>>, vector<1x1x32xf32>
    %143 = vector.shape_cast %142 : vector<1x1x32xf32> to vector<1x32xf32>
    %cst_56 = arith.constant dense<0.000000e+00> : vector<16xf32>
    %144 = vector.multi_reduction <add>, %139, %cst_56 [1] : vector<16x32xf32> to vector<16xf32>
    %145 = vector.shape_cast %144 : vector<16xf32> to vector<16x1xf32>
    %cst_57 = arith.constant 3.200000e+01 : f32
    %146 = vector.broadcast %cst_57 : f32 to vector<16x1xf32>
    %147 = arith.divf %145, %146 : vector<16x1xf32>
    %148 = vector.broadcast %147 : vector<16x1xf32> to vector<16x32xf32>
    %149 = arith.subf %139, %148 : vector<16x32xf32>
    %150 = arith.mulf %149, %149 : vector<16x32xf32>
    %cst_58 = arith.constant dense<0.000000e+00> : vector<16xf32>
    %151 = vector.multi_reduction <add>, %150, %cst_58 [1] : vector<16x32xf32> to vector<16xf32>
    %152 = vector.shape_cast %151 : vector<16xf32> to vector<16x1xf32>
    %cst_59 = arith.constant 3.200000e+01 : f32
    %153 = vector.broadcast %cst_59 : f32 to vector<16x1xf32>
    %154 = arith.divf %152, %153 : vector<16x1xf32>
    %155 = vector.broadcast %147 : vector<16x1xf32> to vector<16x32xf32>
    %156 = arith.subf %139, %155 : vector<16x32xf32>
    %cst_60 = arith.constant 9.99999996E-13 : f32
    %157 = vector.broadcast %cst_60 : f32 to vector<16x1xf32>
    %158 = arith.addf %154, %157 : vector<16x1xf32>
    %159 = math.rsqrt %158 : vector<16x1xf32>
    %160 = vector.broadcast %159 : vector<16x1xf32> to vector<16x32xf32>
    %161 = arith.mulf %156, %160 : vector<16x32xf32>
    %162 = vector.broadcast %141 : vector<1x32xf32> to vector<16x32xf32>
    %163 = arith.mulf %161, %162 : vector<16x32xf32>
    %164 = vector.broadcast %143 : vector<1x32xf32> to vector<16x32xf32>
    %165 = arith.addf %163, %164 : vector<16x32xf32>
    %166 = arith.truncf %165 : vector<16x32xf32> to vector<16x32xbf16>
    %c0_61 = arith.constant 0 : index
    %c0_62 = arith.constant 0 : index
    %c0_63 = arith.constant 0 : index
    %167 = vector.load %arg11[%c0_61, %c0_62, %c0_63] : memref<2x32x64xbf16, #tpu.memory_space<vmem>>, vector<1x32x64xbf16>
    %168 = vector.shape_cast %167 : vector<1x32x64xbf16> to vector<32x64xbf16>
    %cst_64 = arith.constant dense<0.000000e+00> : vector<16x64xf32>
    %169 = tpu.matmul %166, %168, %cst_64 {dimension_numbers = #tpu.dot_dimension_numbers<[1], [0], [0], [1], [0, 0, 1, 1], [], []>} : vector<16x32xbf16>, vector<32x64xbf16>, vector<16x64xf32> -> vector<16x64xf32>
    %c0_65 = arith.constant 0 : index
    %c0_66 = arith.constant 0 : index
    %c0_67 = arith.constant 0 : index
    %170 = vector.load %arg12[%c0_65, %c0_66, %c0_67] : memref<2x1x64xf32, #tpu.memory_space<vmem>>, vector<1x1x64xf32>
    %171 = vector.shape_cast %170 : vector<1x1x64xf32> to vector<1x64xf32>
    %172 = vector.broadcast %171 : vector<1x64xf32> to vector<16x64xf32>
    %173 = arith.addf %169, %172 : vector<16x64xf32>
    %cst_68 = arith.constant 5.000000e-01 : f32
    %174 = vector.broadcast %cst_68 : f32 to vector<16x64xf32>
    %175 = arith.mulf %174, %173 : vector<16x64xf32>
    %cst_69 = arith.constant 4.471500e-02 : f32
    %176 = vector.broadcast %cst_69 : f32 to vector<16x64xf32>
    %177 = arith.mulf %176, %173 : vector<16x64xf32>
    %178 = arith.mulf %177, %173 : vector<16x64xf32>
    %179 = arith.mulf %178, %173 : vector<16x64xf32>
    %180 = arith.addf %173, %179 : vector<16x64xf32>
    %cst_70 = arith.constant 0.797884583 : f32
    %181 = vector.broadcast %cst_70 : f32 to vector<16x64xf32>
    %182 = arith.mulf %181, %180 : vector<16x64xf32>
    %183 = math.tanh %182 : vector<16x64xf32>
    %cst_71 = arith.constant 1.000000e+00 : f32
    %184 = vector.broadcast %cst_71 : f32 to vector<16x64xf32>
    %185 = arith.addf %184, %183 : vector<16x64xf32>
    %186 = arith.mulf %175, %185 : vector<16x64xf32>
    %187 = arith.truncf %186 : vector<16x64xf32> to vector<16x64xbf16>
    %c0_72 = arith.constant 0 : index
    %c0_73 = arith.constant 0 : index
    %c0_74 = arith.constant 0 : index
    %188 = vector.load %arg13[%c0_72, %c0_73, %c0_74] : memref<2x64x32xbf16, #tpu.memory_space<vmem>>, vector<1x64x32xbf16>
    %189 = vector.shape_cast %188 : vector<1x64x32xbf16> to vector<64x32xbf16>
    %cst_75 = arith.constant dense<0.000000e+00> : vector<16x32xf32>
    %190 = tpu.matmul %187, %189, %cst_75 {dimension_numbers = #tpu.dot_dimension_numbers<[1], [0], [0], [1], [0, 0, 1, 1], [], []>} : vector<16x64xbf16>, vector<64x32xbf16>, vector<16x32xf32> -> vector<16x32xf32>
    %c0_76 = arith.constant 0 : index
    %c0_77 = arith.constant 0 : index
    %c0_78 = arith.constant 0 : index
    %191 = vector.load %arg14[%c0_76, %c0_77, %c0_78] : memref<2x1x32xf32, #tpu.memory_space<vmem>>, vector<1x1x32xf32>
    %192 = vector.shape_cast %191 : vector<1x1x32xf32> to vector<1x32xf32>
    %193 = vector.broadcast %192 : vector<1x32xf32> to vector<16x32xf32>
    %194 = arith.addf %190, %193 : vector<16x32xf32>
    %195 = arith.addf %165, %194 : vector<16x32xf32>
    %c0_79 = arith.constant 0 : index
    %c0_80 = arith.constant 0 : index
    %c0_81 = arith.constant 0 : index
    %196 = vector.load %arg15[%c0_79, %c0_80, %c0_81] : memref<2x1x32xf32, #tpu.memory_space<vmem>>, vector<1x1x32xf32>
    %197 = vector.shape_cast %196 : vector<1x1x32xf32> to vector<1x32xf32>
    %c0_82 = arith.constant 0 : index
    %c0_83 = arith.constant 0 : index
    %c0_84 = arith.constant 0 : index
    %198 = vector.load %arg16[%c0_82, %c0_83, %c0_84] : memref<2x1x32xf32, #tpu.memory_space<vmem>>, vector<1x1x32xf32>
    %199 = vector.shape_cast %198 : vector<1x1x32xf32> to vector<1x32xf32>
    %cst_85 = arith.constant dense<0.000000e+00> : vector<16xf32>
    %200 = vector.multi_reduction <add>, %195, %cst_85 [1] : vector<16x32xf32> to vector<16xf32>
    %201 = vector.shape_cast %200 : vector<16xf32> to vector<16x1xf32>
    %cst_86 = arith.constant 3.200000e+01 : f32
    %202 = vector.broadcast %cst_86 : f32 to vector<16x1xf32>
    %203 = arith.divf %201, %202 : vector<16x1xf32>
    %204 = vector.broadcast %203 : vector<16x1xf32> to vector<16x32xf32>
    %205 = arith.subf %195, %204 : vector<16x32xf32>
    %206 = arith.mulf %205, %205 : vector<16x32xf32>
    %cst_87 = arith.constant dense<0.000000e+00> : vector<16xf32>
    %207 = vector.multi_reduction <add>, %206, %cst_87 [1] : vector<16x32xf32> to vector<16xf32>
    %208 = vector.shape_cast %207 : vector<16xf32> to vector<16x1xf32>
    %cst_88 = arith.constant 3.200000e+01 : f32
    %209 = vector.broadcast %cst_88 : f32 to vector<16x1xf32>
    %210 = arith.divf %208, %209 : vector<16x1xf32>
    %211 = vector.broadcast %203 : vector<16x1xf32> to vector<16x32xf32>
    %212 = arith.subf %195, %211 : vector<16x32xf32>
    %cst_89 = arith.constant 9.99999996E-13 : f32
    %213 = vector.broadcast %cst_89 : f32 to vector<16x1xf32>
    %214 = arith.addf %210, %213 : vector<16x1xf32>
    %215 = math.rsqrt %214 : vector<16x1xf32>
    %216 = vector.broadcast %215 : vector<16x1xf32> to vector<16x32xf32>
    %217 = arith.mulf %212, %216 : vector<16x32xf32>
    %218 = vector.broadcast %197 : vector<1x32xf32> to vector<16x32xf32>
    %219 = arith.mulf %217, %218 : vector<16x32xf32>
    %220 = vector.broadcast %199 : vector<1x32xf32> to vector<16x32xf32>
    %221 = arith.addf %219, %220 : vector<16x32xf32>
    %222 = arith.truncf %221 : vector<16x32xf32> to vector<16x32xbf16>
    %c1 = arith.constant 1 : index
    %c0_90 = arith.constant 0 : index
    %c0_91 = arith.constant 0 : index
    %223 = vector.load %arg5[%c1, %c0_90, %c0_91] : memref<2x32x96xbf16, #tpu.memory_space<vmem>>, vector<1x32x96xbf16>
    %224 = vector.shape_cast %223 : vector<1x32x96xbf16> to vector<32x96xbf16>
    %cst_92 = arith.constant dense<0.000000e+00> : vector<16x96xf32>
    %225 = tpu.matmul %222, %224, %cst_92 {dimension_numbers = #tpu.dot_dimension_numbers<[1], [0], [0], [1], [0, 0, 1, 1], [], []>} : vector<16x32xbf16>, vector<32x96xbf16>, vector<16x96xf32> -> vector<16x96xf32>
    %c1_93 = arith.constant 1 : index
    %c0_94 = arith.constant 0 : index
    %c0_95 = arith.constant 0 : index
    %226 = vector.load %arg6[%c1_93, %c0_94, %c0_95] : memref<2x1x96xf32, #tpu.memory_space<vmem>>, vector<1x1x96xf32>
    %227 = vector.shape_cast %226 : vector<1x1x96xf32> to vector<1x96xf32>
    %228 = vector.broadcast %227 : vector<1x96xf32> to vector<16x96xf32>
    %229 = arith.addf %225, %228 : vector<16x96xf32>
    %230 = vector.extract_strided_slice %229 {offsets = [0, 0], sizes = [16, 32], strides = [1, 1]} : vector<16x96xf32> to vector<16x32xf32>
    %231 = vector.shape_cast %230 : vector<16x32xf32> to vector<2x8x32xf32>
    %232 = vector.extract_strided_slice %229 {offsets = [0, 32], sizes = [16, 32], strides = [1, 1]} : vector<16x96xf32> to vector<16x32xf32>
    %233 = vector.shape_cast %232 : vector<16x32xf32> to vector<2x8x32xf32>
    %234 = vector.extract_strided_slice %229 {offsets = [0, 64], sizes = [16, 32], strides = [1, 1]} : vector<16x96xf32> to vector<16x32xf32>
    %235 = vector.shape_cast %234 : vector<16x32xf32> to vector<2x8x32xf32>
    %236 = vector.extract_strided_slice %231 {offsets = [0, 0, 0], sizes = [2, 1, 32], strides = [1, 1, 1]} : vector<2x8x32xf32> to vector<2x1x32xf32>
    %237 = vector.shape_cast %221 : vector<16x32xf32> to vector<2x8x32xf32>
    %238 = vector.extract_strided_slice %237 {offsets = [0, 0, 0], sizes = [2, 1, 32], strides = [1, 1, 1]} : vector<2x8x32xf32> to vector<2x1x32xf32>
    %239 = vector.shape_cast %238 : vector<2x1x32xf32> to vector<2x32xf32>
    %240 = arith.truncf %236 : vector<2x1x32xf32> to vector<2x1x32xbf16>
    %241 = arith.truncf %233 : vector<2x8x32xf32> to vector<2x8x32xbf16>
    %242 = arith.truncf %235 : vector<2x8x32xf32> to vector<2x8x32xbf16>
    %243 = vector.extract_strided_slice %240 {offsets = [0, 0, 0], sizes = [2, 1, 8], strides = [1, 1, 1]} : vector<2x1x32xbf16> to vector<2x1x8xbf16>
    %244 = vector.extract_strided_slice %241 {offsets = [0, 0, 0], sizes = [2, 8, 8], strides = [1, 1, 1]} : vector<2x8x32xbf16> to vector<2x8x8xbf16>
    "tpu.trace_start"() <{level = 10 : i32, message = "bqd,bkd->bqk"}> : () -> ()
    %cst_96 = arith.constant dense<0.000000e+00> : vector<2x1x8xf32>
    %245 = tpu.matmul %243, %244, %cst_96 {dimension_numbers = #tpu.dot_dimension_numbers<[2], [2], [1], [1], [0, 0, 0, 1, 1, 1], [0], [0]>} : vector<2x1x8xbf16>, vector<2x8x8xbf16>, vector<2x1x8xf32> -> vector<2x1x8xf32>
    "tpu.trace_stop"() : () -> ()
    %cst_97 = arith.constant 0.353553385 : f32
    %246 = vector.broadcast %cst_97 : f32 to vector<2x1x8xf32>
    %247 = arith.mulf %245, %246 : vector<2x1x8xf32>
    %cst_98 = arith.constant dense<0xFF800000> : vector<2x1xf32>
    %248 = vector.multi_reduction <maximumf>, %247, %cst_98 [2] : vector<2x1x8xf32> to vector<2x1xf32>
    %249 = vector.shape_cast %248 : vector<2x1xf32> to vector<2x1x1xf32>
    %250 = vector.broadcast %249 : vector<2x1x1xf32> to vector<2x1x8xf32>
    %251 = arith.subf %247, %250 : vector<2x1x8xf32>
    %252 = math.exp %251 : vector<2x1x8xf32>
    %cst_99 = arith.constant dense<0.000000e+00> : vector<2x1xf32>
    %253 = vector.multi_reduction <add>, %252, %cst_99 [2] : vector<2x1x8xf32> to vector<2x1xf32>
    %254 = vector.shape_cast %253 : vector<2x1xf32> to vector<2x1x1xf32>
    %255 = tpu.reciprocal %254 {approx = true} : vector<2x1x1xf32> -> vector<2x1x1xf32>
    %256 = vector.broadcast %255 : vector<2x1x1xf32> to vector<2x1x8xf32>
    %257 = arith.mulf %252, %256 : vector<2x1x8xf32>
    %258 = arith.truncf %257 : vector<2x1x8xf32> to vector<2x1x8xbf16>
    %259 = vector.extract_strided_slice %242 {offsets = [0, 0, 0], sizes = [2, 8, 8], strides = [1, 1, 1]} : vector<2x8x32xbf16> to vector<2x8x8xbf16>
    "tpu.trace_start"() <{level = 10 : i32, message = "bqk,bkd->bqd"}> : () -> ()
    %cst_100 = arith.constant dense<0.000000e+00> : vector<2x1x8xf32>
    %260 = tpu.matmul %258, %259, %cst_100 {dimension_numbers = #tpu.dot_dimension_numbers<[2], [1], [1], [2], [0, 0, 0, 1, 1, 2], [0], [0]>} : vector<2x1x8xbf16>, vector<2x8x8xbf16>, vector<2x1x8xf32> -> vector<2x1x8xf32>
    "tpu.trace_stop"() : () -> ()
    %261 = vector.extract_strided_slice %240 {offsets = [0, 0, 8], sizes = [2, 1, 8], strides = [1, 1, 1]} : vector<2x1x32xbf16> to vector<2x1x8xbf16>
    %262 = vector.extract_strided_slice %241 {offsets = [0, 0, 8], sizes = [2, 8, 8], strides = [1, 1, 1]} : vector<2x8x32xbf16> to vector<2x8x8xbf16>
    "tpu.trace_start"() <{level = 10 : i32, message = "bqd,bkd->bqk"}> : () -> ()
    %cst_101 = arith.constant dense<0.000000e+00> : vector<2x1x8xf32>
    %263 = tpu.matmul %261, %262, %cst_101 {dimension_numbers = #tpu.dot_dimension_numbers<[2], [2], [1], [1], [0, 0, 0, 1, 1, 1], [0], [0]>} : vector<2x1x8xbf16>, vector<2x8x8xbf16>, vector<2x1x8xf32> -> vector<2x1x8xf32>
    "tpu.trace_stop"() : () -> ()
    %cst_102 = arith.constant 0.353553385 : f32
    %264 = vector.broadcast %cst_102 : f32 to vector<2x1x8xf32>
    %265 = arith.mulf %263, %264 : vector<2x1x8xf32>
    %cst_103 = arith.constant dense<0xFF800000> : vector<2x1xf32>
    %266 = vector.multi_reduction <maximumf>, %265, %cst_103 [2] : vector<2x1x8xf32> to vector<2x1xf32>
    %267 = vector.shape_cast %266 : vector<2x1xf32> to vector<2x1x1xf32>
    %268 = vector.broadcast %267 : vector<2x1x1xf32> to vector<2x1x8xf32>
    %269 = arith.subf %265, %268 : vector<2x1x8xf32>
    %270 = math.exp %269 : vector<2x1x8xf32>
    %cst_104 = arith.constant dense<0.000000e+00> : vector<2x1xf32>
    %271 = vector.multi_reduction <add>, %270, %cst_104 [2] : vector<2x1x8xf32> to vector<2x1xf32>
    %272 = vector.shape_cast %271 : vector<2x1xf32> to vector<2x1x1xf32>
    %273 = tpu.reciprocal %272 {approx = true} : vector<2x1x1xf32> -> vector<2x1x1xf32>
    %274 = vector.broadcast %273 : vector<2x1x1xf32> to vector<2x1x8xf32>
    %275 = arith.mulf %270, %274 : vector<2x1x8xf32>
    %276 = arith.truncf %275 : vector<2x1x8xf32> to vector<2x1x8xbf16>
    %277 = vector.extract_strided_slice %242 {offsets = [0, 0, 8], sizes = [2, 8, 8], strides = [1, 1, 1]} : vector<2x8x32xbf16> to vector<2x8x8xbf16>
    "tpu.trace_start"() <{level = 10 : i32, message = "bqk,bkd->bqd"}> : () -> ()
    %cst_105 = arith.constant dense<0.000000e+00> : vector<2x1x8xf32>
    %278 = tpu.matmul %276, %277, %cst_105 {dimension_numbers = #tpu.dot_dimension_numbers<[2], [1], [1], [2], [0, 0, 0, 1, 1, 2], [0], [0]>} : vector<2x1x8xbf16>, vector<2x8x8xbf16>, vector<2x1x8xf32> -> vector<2x1x8xf32>
    "tpu.trace_stop"() : () -> ()
    %279 = vector.extract_strided_slice %240 {offsets = [0, 0, 16], sizes = [2, 1, 8], strides = [1, 1, 1]} : vector<2x1x32xbf16> to vector<2x1x8xbf16>
    %280 = vector.extract_strided_slice %241 {offsets = [0, 0, 16], sizes = [2, 8, 8], strides = [1, 1, 1]} : vector<2x8x32xbf16> to vector<2x8x8xbf16>
    "tpu.trace_start"() <{level = 10 : i32, message = "bqd,bkd->bqk"}> : () -> ()
    %cst_106 = arith.constant dense<0.000000e+00> : vector<2x1x8xf32>
    %281 = tpu.matmul %279, %280, %cst_106 {dimension_numbers = #tpu.dot_dimension_numbers<[2], [2], [1], [1], [0, 0, 0, 1, 1, 1], [0], [0]>} : vector<2x1x8xbf16>, vector<2x8x8xbf16>, vector<2x1x8xf32> -> vector<2x1x8xf32>
    "tpu.trace_stop"() : () -> ()
    %cst_107 = arith.constant 0.353553385 : f32
    %282 = vector.broadcast %cst_107 : f32 to vector<2x1x8xf32>
    %283 = arith.mulf %281, %282 : vector<2x1x8xf32>
    %cst_108 = arith.constant dense<0xFF800000> : vector<2x1xf32>
    %284 = vector.multi_reduction <maximumf>, %283, %cst_108 [2] : vector<2x1x8xf32> to vector<2x1xf32>
    %285 = vector.shape_cast %284 : vector<2x1xf32> to vector<2x1x1xf32>
    %286 = vector.broadcast %285 : vector<2x1x1xf32> to vector<2x1x8xf32>
    %287 = arith.subf %283, %286 : vector<2x1x8xf32>
    %288 = math.exp %287 : vector<2x1x8xf32>
    %cst_109 = arith.constant dense<0.000000e+00> : vector<2x1xf32>
    %289 = vector.multi_reduction <add>, %288, %cst_109 [2] : vector<2x1x8xf32> to vector<2x1xf32>
    %290 = vector.shape_cast %289 : vector<2x1xf32> to vector<2x1x1xf32>
    %291 = tpu.reciprocal %290 {approx = true} : vector<2x1x1xf32> -> vector<2x1x1xf32>
    %292 = vector.broadcast %291 : vector<2x1x1xf32> to vector<2x1x8xf32>
    %293 = arith.mulf %288, %292 : vector<2x1x8xf32>
    %294 = arith.truncf %293 : vector<2x1x8xf32> to vector<2x1x8xbf16>
    %295 = vector.extract_strided_slice %242 {offsets = [0, 0, 16], sizes = [2, 8, 8], strides = [1, 1, 1]} : vector<2x8x32xbf16> to vector<2x8x8xbf16>
    "tpu.trace_start"() <{level = 10 : i32, message = "bqk,bkd->bqd"}> : () -> ()
    %cst_110 = arith.constant dense<0.000000e+00> : vector<2x1x8xf32>
    %296 = tpu.matmul %294, %295, %cst_110 {dimension_numbers = #tpu.dot_dimension_numbers<[2], [1], [1], [2], [0, 0, 0, 1, 1, 2], [0], [0]>} : vector<2x1x8xbf16>, vector<2x8x8xbf16>, vector<2x1x8xf32> -> vector<2x1x8xf32>
    "tpu.trace_stop"() : () -> ()
    %297 = vector.extract_strided_slice %240 {offsets = [0, 0, 24], sizes = [2, 1, 8], strides = [1, 1, 1]} : vector<2x1x32xbf16> to vector<2x1x8xbf16>
    %298 = vector.extract_strided_slice %241 {offsets = [0, 0, 24], sizes = [2, 8, 8], strides = [1, 1, 1]} : vector<2x8x32xbf16> to vector<2x8x8xbf16>
    "tpu.trace_start"() <{level = 10 : i32, message = "bqd,bkd->bqk"}> : () -> ()
    %cst_111 = arith.constant dense<0.000000e+00> : vector<2x1x8xf32>
    %299 = tpu.matmul %297, %298, %cst_111 {dimension_numbers = #tpu.dot_dimension_numbers<[2], [2], [1], [1], [0, 0, 0, 1, 1, 1], [0], [0]>} : vector<2x1x8xbf16>, vector<2x8x8xbf16>, vector<2x1x8xf32> -> vector<2x1x8xf32>
    "tpu.trace_stop"() : () -> ()
    %cst_112 = arith.constant 0.353553385 : f32
    %300 = vector.broadcast %cst_112 : f32 to vector<2x1x8xf32>
    %301 = arith.mulf %299, %300 : vector<2x1x8xf32>
    %cst_113 = arith.constant dense<0xFF800000> : vector<2x1xf32>
    %302 = vector.multi_reduction <maximumf>, %301, %cst_113 [2] : vector<2x1x8xf32> to vector<2x1xf32>
    %303 = vector.shape_cast %302 : vector<2x1xf32> to vector<2x1x1xf32>
    %304 = vector.broadcast %303 : vector<2x1x1xf32> to vector<2x1x8xf32>
    %305 = arith.subf %301, %304 : vector<2x1x8xf32>
    %306 = math.exp %305 : vector<2x1x8xf32>
    %cst_114 = arith.constant dense<0.000000e+00> : vector<2x1xf32>
    %307 = vector.multi_reduction <add>, %306, %cst_114 [2] : vector<2x1x8xf32> to vector<2x1xf32>
    %308 = vector.shape_cast %307 : vector<2x1xf32> to vector<2x1x1xf32>
    %309 = tpu.reciprocal %308 {approx = true} : vector<2x1x1xf32> -> vector<2x1x1xf32>
    %310 = vector.broadcast %309 : vector<2x1x1xf32> to vector<2x1x8xf32>
    %311 = arith.mulf %306, %310 : vector<2x1x8xf32>
    %312 = arith.truncf %311 : vector<2x1x8xf32> to vector<2x1x8xbf16>
    %313 = vector.extract_strided_slice %242 {offsets = [0, 0, 24], sizes = [2, 8, 8], strides = [1, 1, 1]} : vector<2x8x32xbf16> to vector<2x8x8xbf16>
    "tpu.trace_start"() <{level = 10 : i32, message = "bqk,bkd->bqd"}> : () -> ()
    %cst_115 = arith.constant dense<0.000000e+00> : vector<2x1x8xf32>
    %314 = tpu.matmul %312, %313, %cst_115 {dimension_numbers = #tpu.dot_dimension_numbers<[2], [1], [1], [2], [0, 0, 0, 1, 1, 2], [0], [0]>} : vector<2x1x8xbf16>, vector<2x8x8xbf16>, vector<2x1x8xf32> -> vector<2x1x8xf32>
    "tpu.trace_stop"() : () -> ()
    %315 = tpu.concatenate %260, %278, %296, %314 in 2 : vector<2x1x8xf32>, vector<2x1x8xf32>, vector<2x1x8xf32>, vector<2x1x8xf32> -> vector<2x1x32xf32>
    %316 = vector.shape_cast %315 : vector<2x1x32xf32> to vector<2x32xf32>
    %317 = arith.truncf %316 : vector<2x32xf32> to vector<2x32xbf16>
    %c1_116 = arith.constant 1 : index
    %c0_117 = arith.constant 0 : index
    %c0_118 = arith.constant 0 : index
    %318 = vector.load %arg7[%c1_116, %c0_117, %c0_118] : memref<2x32x32xbf16, #tpu.memory_space<vmem>>, vector<1x32x32xbf16>
    %319 = vector.shape_cast %318 : vector<1x32x32xbf16> to vector<32x32xbf16>
    %cst_119 = arith.constant dense<0.000000e+00> : vector<2x32xf32>
    %320 = tpu.matmul %317, %319, %cst_119 {dimension_numbers = #tpu.dot_dimension_numbers<[1], [0], [0], [1], [0, 0, 1, 1], [], []>} : vector<2x32xbf16>, vector<32x32xbf16>, vector<2x32xf32> -> vector<2x32xf32>
    %c1_120 = arith.constant 1 : index
    %c0_121 = arith.constant 0 : index
    %c0_122 = arith.constant 0 : index
    %321 = vector.load %arg8[%c1_120, %c0_121, %c0_122] : memref<2x1x32xf32, #tpu.memory_space<vmem>>, vector<1x1x32xf32>
    %322 = vector.shape_cast %321 : vector<1x1x32xf32> to vector<1x32xf32>
    %323 = vector.broadcast %322 : vector<1x32xf32> to vector<2x32xf32>
    %324 = arith.addf %320, %323 : vector<2x32xf32>
    %325 = arith.addf %239, %324 : vector<2x32xf32>
    %c1_123 = arith.constant 1 : index
    %c0_124 = arith.constant 0 : index
    %c0_125 = arith.constant 0 : index
    %326 = vector.load %arg9[%c1_123, %c0_124, %c0_125] : memref<2x1x32xf32, #tpu.memory_space<vmem>>, vector<1x1x32xf32>
    %327 = vector.shape_cast %326 : vector<1x1x32xf32> to vector<1x32xf32>
    %c1_126 = arith.constant 1 : index
    %c0_127 = arith.constant 0 : index
    %c0_128 = arith.constant 0 : index
    %328 = vector.load %arg10[%c1_126, %c0_127, %c0_128] : memref<2x1x32xf32, #tpu.memory_space<vmem>>, vector<1x1x32xf32>
    %329 = vector.shape_cast %328 : vector<1x1x32xf32> to vector<1x32xf32>
    %cst_129 = arith.constant dense<0.000000e+00> : vector<2xf32>
    %330 = vector.multi_reduction <add>, %325, %cst_129 [1] : vector<2x32xf32> to vector<2xf32>
    %331 = vector.shape_cast %330 : vector<2xf32> to vector<2x1xf32>
    %cst_130 = arith.constant 3.200000e+01 : f32
    %332 = vector.broadcast %cst_130 : f32 to vector<2x1xf32>
    %333 = arith.divf %331, %332 : vector<2x1xf32>
    %334 = vector.broadcast %333 : vector<2x1xf32> to vector<2x32xf32>
    %335 = arith.subf %325, %334 : vector<2x32xf32>
    %336 = arith.mulf %335, %335 : vector<2x32xf32>
    %cst_131 = arith.constant dense<0.000000e+00> : vector<2xf32>
    %337 = vector.multi_reduction <add>, %336, %cst_131 [1] : vector<2x32xf32> to vector<2xf32>
    %338 = vector.shape_cast %337 : vector<2xf32> to vector<2x1xf32>
    %cst_132 = arith.constant 3.200000e+01 : f32
    %339 = vector.broadcast %cst_132 : f32 to vector<2x1xf32>
    %340 = arith.divf %338, %339 : vector<2x1xf32>
    %341 = vector.broadcast %333 : vector<2x1xf32> to vector<2x32xf32>
    %342 = arith.subf %325, %341 : vector<2x32xf32>
    %cst_133 = arith.constant 9.99999996E-13 : f32
    %343 = vector.broadcast %cst_133 : f32 to vector<2x1xf32>
    %344 = arith.addf %340, %343 : vector<2x1xf32>
    %345 = math.rsqrt %344 : vector<2x1xf32>
    %346 = vector.broadcast %345 : vector<2x1xf32> to vector<2x32xf32>
    %347 = arith.mulf %342, %346 : vector<2x32xf32>
    %348 = vector.broadcast %327 : vector<1x32xf32> to vector<2x32xf32>
    %349 = arith.mulf %347, %348 : vector<2x32xf32>
    %350 = vector.broadcast %329 : vector<1x32xf32> to vector<2x32xf32>
    %351 = arith.addf %349, %350 : vector<2x32xf32>
    %352 = arith.truncf %351 : vector<2x32xf32> to vector<2x32xbf16>
    %c1_134 = arith.constant 1 : index
    %c0_135 = arith.constant 0 : index
    %c0_136 = arith.constant 0 : index
    %353 = vector.load %arg11[%c1_134, %c0_135, %c0_136] : memref<2x32x64xbf16, #tpu.memory_space<vmem>>, vector<1x32x64xbf16>
    %354 = vector.shape_cast %353 : vector<1x32x64xbf16> to vector<32x64xbf16>
    %cst_137 = arith.constant dense<0.000000e+00> : vector<2x64xf32>
    %355 = tpu.matmul %352, %354, %cst_137 {dimension_numbers = #tpu.dot_dimension_numbers<[1], [0], [0], [1], [0, 0, 1, 1], [], []>} : vector<2x32xbf16>, vector<32x64xbf16>, vector<2x64xf32> -> vector<2x64xf32>
    %c1_138 = arith.constant 1 : index
    %c0_139 = arith.constant 0 : index
    %c0_140 = arith.constant 0 : index
    %356 = vector.load %arg12[%c1_138, %c0_139, %c0_140] : memref<2x1x64xf32, #tpu.memory_space<vmem>>, vector<1x1x64xf32>
    %357 = vector.shape_cast %356 : vector<1x1x64xf32> to vector<1x64xf32>
    %358 = vector.broadcast %357 : vector<1x64xf32> to vector<2x64xf32>
    %359 = arith.addf %355, %358 : vector<2x64xf32>
    %cst_141 = arith.constant 5.000000e-01 : f32
    %360 = vector.broadcast %cst_141 : f32 to vector<2x64xf32>
    %361 = arith.mulf %360, %359 : vector<2x64xf32>
    %cst_142 = arith.constant 4.471500e-02 : f32
    %362 = vector.broadcast %cst_142 : f32 to vector<2x64xf32>
    %363 = arith.mulf %362, %359 : vector<2x64xf32>
    %364 = arith.mulf %363, %359 : vector<2x64xf32>
    %365 = arith.mulf %364, %359 : vector<2x64xf32>
    %366 = arith.addf %359, %365 : vector<2x64xf32>
    %cst_143 = arith.constant 0.797884583 : f32
    %367 = vector.broadcast %cst_143 : f32 to vector<2x64xf32>
    %368 = arith.mulf %367, %366 : vector<2x64xf32>
    %369 = math.tanh %368 : vector<2x64xf32>
    %cst_144 = arith.constant 1.000000e+00 : f32
    %370 = vector.broadcast %cst_144 : f32 to vector<2x64xf32>
    %371 = arith.addf %370, %369 : vector<2x64xf32>
    %372 = arith.mulf %361, %371 : vector<2x64xf32>
    %373 = arith.truncf %372 : vector<2x64xf32> to vector<2x64xbf16>
    %c1_145 = arith.constant 1 : index
    %c0_146 = arith.constant 0 : index
    %c0_147 = arith.constant 0 : index
    %374 = vector.load %arg13[%c1_145, %c0_146, %c0_147] : memref<2x64x32xbf16, #tpu.memory_space<vmem>>, vector<1x64x32xbf16>
    %375 = vector.shape_cast %374 : vector<1x64x32xbf16> to vector<64x32xbf16>
    %cst_148 = arith.constant dense<0.000000e+00> : vector<2x32xf32>
    %376 = tpu.matmul %373, %375, %cst_148 {dimension_numbers = #tpu.dot_dimension_numbers<[1], [0], [0], [1], [0, 0, 1, 1], [], []>} : vector<2x64xbf16>, vector<64x32xbf16>, vector<2x32xf32> -> vector<2x32xf32>
    %c1_149 = arith.constant 1 : index
    %c0_150 = arith.constant 0 : index
    %c0_151 = arith.constant 0 : index
    %377 = vector.load %arg14[%c1_149, %c0_150, %c0_151] : memref<2x1x32xf32, #tpu.memory_space<vmem>>, vector<1x1x32xf32>
    %378 = vector.shape_cast %377 : vector<1x1x32xf32> to vector<1x32xf32>
    %379 = vector.broadcast %378 : vector<1x32xf32> to vector<2x32xf32>
    %380 = arith.addf %376, %379 : vector<2x32xf32>
    %381 = arith.addf %351, %380 : vector<2x32xf32>
    %c1_152 = arith.constant 1 : index
    %c0_153 = arith.constant 0 : index
    %c0_154 = arith.constant 0 : index
    %382 = vector.load %arg15[%c1_152, %c0_153, %c0_154] : memref<2x1x32xf32, #tpu.memory_space<vmem>>, vector<1x1x32xf32>
    %383 = vector.shape_cast %382 : vector<1x1x32xf32> to vector<1x32xf32>
    %c1_155 = arith.constant 1 : index
    %c0_156 = arith.constant 0 : index
    %c0_157 = arith.constant 0 : index
    %384 = vector.load %arg16[%c1_155, %c0_156, %c0_157] : memref<2x1x32xf32, #tpu.memory_space<vmem>>, vector<1x1x32xf32>
    %385 = vector.shape_cast %384 : vector<1x1x32xf32> to vector<1x32xf32>
    %cst_158 = arith.constant dense<0.000000e+00> : vector<2xf32>
    %386 = vector.multi_reduction <add>, %381, %cst_158 [1] : vector<2x32xf32> to vector<2xf32>
    %387 = vector.shape_cast %386 : vector<2xf32> to vector<2x1xf32>
    %cst_159 = arith.constant 3.200000e+01 : f32
    %388 = vector.broadcast %cst_159 : f32 to vector<2x1xf32>
    %389 = arith.divf %387, %388 : vector<2x1xf32>
    %390 = vector.broadcast %389 : vector<2x1xf32> to vector<2x32xf32>
    %391 = arith.subf %381, %390 : vector<2x32xf32>
    %392 = arith.mulf %391, %391 : vector<2x32xf32>
    %cst_160 = arith.constant dense<0.000000e+00> : vector<2xf32>
    %393 = vector.multi_reduction <add>, %392, %cst_160 [1] : vector<2x32xf32> to vector<2xf32>
    %394 = vector.shape_cast %393 : vector<2xf32> to vector<2x1xf32>
    %cst_161 = arith.constant 3.200000e+01 : f32
    %395 = vector.broadcast %cst_161 : f32 to vector<2x1xf32>
    %396 = arith.divf %394, %395 : vector<2x1xf32>
    %397 = vector.broadcast %389 : vector<2x1xf32> to vector<2x32xf32>
    %398 = arith.subf %381, %397 : vector<2x32xf32>
    %cst_162 = arith.constant 9.99999996E-13 : f32
    %399 = vector.broadcast %cst_162 : f32 to vector<2x1xf32>
    %400 = arith.addf %396, %399 : vector<2x1xf32>
    %401 = math.rsqrt %400 : vector<2x1xf32>
    %402 = vector.broadcast %401 : vector<2x1xf32> to vector<2x32xf32>
    %403 = arith.mulf %398, %402 : vector<2x32xf32>
    %404 = vector.broadcast %383 : vector<1x32xf32> to vector<2x32xf32>
    %405 = arith.mulf %403, %404 : vector<2x32xf32>
    %406 = vector.broadcast %385 : vector<1x32xf32> to vector<2x32xf32>
    %407 = arith.addf %405, %406 : vector<2x32xf32>
    %c0_163 = arith.constant 0 : index
    %c0_164 = arith.constant 0 : index
    %408 = vector.load %arg17[%c0_163, %c0_164] : memref<2x32xf32, #tpu.memory_space<vmem>>, vector<2x32xf32>
    tpu.vector_store %arg17[%c0_163, %c0_164], %407 {strides = array<i32>} : memref<2x32xf32, #tpu.memory_space<vmem>>, vector<2x32xf32>,
    return
  }
}

</mosaic_0001>

<llo_original>
// kernel: text_encoder_forward.1
$region0: #{text_encoder_forward.1}
  #allocation0 [shape = 'u32[]', space=smem, size = 0x4, offset = 0x4, fixed_abs, tag = 'smem constant byte address 0x4 - core index']
  #allocation1 [shape = 'u32[144,128]{1,0:T(1,128)}', space=vmem, size = 0x12000, scoped, tag = 'internal scratch']
  %s0 = inlined_call_operand.vmem [shape: s32[16,1], index: 0, kind: input, shape index: {}]
  %s1 = inlined_call_operand.vmem [shape: bf16[64,32], index: 1, kind: input, shape index: {}]
  %s2 = inlined_call_operand.vmem [shape: f32[8,32], index: 2, kind: input, shape index: {}]
  %s3 = inlined_call_operand.vmem [shape: f32[1,32], index: 3, kind: input, shape index: {}]
  %s4 = inlined_call_operand.vmem [shape: f32[1,32], index: 4, kind: input, shape index: {}]
  %s5 = inlined_call_operand.vmem [shape: bf16[2,32,96], index: 5, kind: input, shape index: {}]
  %s6 = inlined_call_operand.vmem [shape: f32[2,1,96], index: 6, kind: input, shape index: {}]
  %s7 = inlined_call_operand.vmem [shape: bf16[2,32,32], index: 7, kind: input, shape index: {}]
  %s8 = inlined_call_operand.vmem [shape: f32[2,1,32], index: 8, kind: input, shape index: {}]
  %s9 = inlined_call_operand.vmem [shape: f32[2,1,32], index: 9, kind: input, shape index: {}]
  %s10 = inlined_call_operand.vmem [shape: f32[2,1,32], index: 10, kind: input, shape index: {}]
  %s11 = inlined_call_operand.vmem [shape: bf16[2,32,64], index: 11, kind: input, shape index: {}]
  %s12 = inlined_call_operand.vmem [shape: f32[2,1,64], index: 12, kind: input, shape index: {}]
  %s13 = inlined_call_operand.vmem [shape: bf16[2,64,32], index: 13, kind: input, shape index: {}]
  %s14 = inlined_call_operand.vmem [shape: f32[2,1,32], index: 14, kind: input, shape index: {}]
  %s15 = inlined_call_operand.vmem [shape: f32[2,1,32], index: 15, kind: input, shape index: {}]
  %s16 = inlined_call_operand.vmem [shape: f32[2,1,32], index: 16, kind: input, shape index: {}]
  %s17 = inlined_call_operand.hbm [shape: f32[2,32], index: 17, kind: output, shape index: {}]
  %s18 = sld [smem:[#allocation0]]
  $region78: #{text_encoder_forward.1} parent=0
    _
  %s20 = ssub.s32 1, %s18
  %s21 = scalar_select 0, %s20, %s18
  $region1: #{text_encoder_forward.1} parent=0
    #allocation2 [shape = 'u8[1024]{0}', space=vmem, size = 0x400, scoped, tag = 'output window, operand 0, single buffered']
    #allocation3 [shape = 's32[1]{0}', space=sflag, size = 0x4, scoped, tag = 'scoped memory for text_encoder_forward.1']
    %22 = vsyncpa [#allocation3], 0
    // Predicated region
    $region2: #{text_encoder_forward.1} parent=1 // pred_check
      _
    $region3: #{text_encoder_forward.1} parent=1 // pred_check_branch
      %24 = sbr.rel (0) target = $region5
    $region4: #{text_encoder_forward.1} parent=1 // pred_region
      _
    $region5: #{text_encoder_forward.1} parent=1 // pred_fallthru
      _
    // Predicated region
    $region6: #{text_encoder_forward.1} parent=1 // pred_check
      _
    $region7: #{text_encoder_forward.1} parent=1 // pred_check_branch
      %26 = sbr.rel (0) target = $region9
    $region8: #{text_encoder_forward.1} parent=1 // pred_region
      _
    $region9: #{text_encoder_forward.1} parent=1 // pred_fallthru
      _
    // Predicated region
    $region10: #{text_encoder_forward.1} parent=1 // pred_check
      _
    $region11: #{text_encoder_forward.1} parent=1 // pred_check_branch
      %28 = sbr.rel (0) target = $region13
    $region12: #{text_encoder_forward.1} parent=1 // pred_region
      _
    $region13: #{text_encoder_forward.1} parent=1 // pred_fallthru
      _
    // Predicated region
    $region14: #{text_encoder_forward.1} parent=1 // pred_check
      _
    $region15: #{text_encoder_forward.1} parent=1 // pred_check_branch
      %30 = sbr.rel (0) target = $region17
    $region16: #{text_encoder_forward.1} parent=1 // pred_region
      _
    $region17: #{text_encoder_forward.1} parent=1 // pred_fallthru
      _
    // Predicated region
    $region18: #{text_encoder_forward.1} parent=1 // pred_check
      _
    $region19: #{text_encoder_forward.1} parent=1 // pred_check_branch
      %32 = sbr.rel (0) target = $region21
    $region20: #{text_encoder_forward.1} parent=1 // pred_region
      _
    $region21: #{text_encoder_forward.1} parent=1 // pred_fallthru
      _
    // Predicated region
    $region22: #{text_encoder_forward.1} parent=1 // pred_check
      _
    $region23: #{text_encoder_forward.1} parent=1 // pred_check_branch
      %34 = sbr.rel (0) target = $region25
    $region24: #{text_encoder_forward.1} parent=1 // pred_region
      _
    $region25: #{text_encoder_forward.1} parent=1 // pred_fallthru
      _
    // Predicated region
    $region26: #{text_encoder_forward.1} parent=1 // pred_check
      _
    $region27: #{text_encoder_forward.1} parent=1 // pred_check_branch
      %36 = sbr.rel (0) target = $region29
    $region28: #{text_encoder_forward.1} parent=1 // pred_region
      _
    $region29: #{text_encoder_forward.1} parent=1 // pred_fallthru
      _
    // Predicated region
    $region30: #{text_encoder_forward.1} parent=1 // pred_check
      _
    $region31: #{text_encoder_forward.1} parent=1 // pred_check_branch
      %38 = sbr.rel (0) target = $region33
    $region32: #{text_encoder_forward.1} parent=1 // pred_region
      _
    $region33: #{text_encoder_forward.1} parent=1 // pred_fallthru
      _
    // Predicated region
    $region34: #{text_encoder_forward.1} parent=1 // pred_check
      _
    $region35: #{text_encoder_forward.1} parent=1 // pred_check_branch
      %40 = sbr.rel (0) target = $region37
    $region36: #{text_encoder_forward.1} parent=1 // pred_region
      _
    $region37: #{text_encoder_forward.1} parent=1 // pred_fallthru
      _
    // Predicated region
    $region38: #{text_encoder_forward.1} parent=1 // pred_check
      _
    $region39: #{text_encoder_forward.1} parent=1 // pred_check_branch
      %42 = sbr.rel (0) target = $region41
    $region40: #{text_encoder_forward.1} parent=1 // pred_region
      _
    $region41: #{text_encoder_forward.1} parent=1 // pred_fallthru
      _
    // Predicated region
    $region42: #{text_encoder_forward.1} parent=1 // pred_check
      _
    $region43: #{text_encoder_forward.1} parent=1 // pred_check_branch
      %44 = sbr.rel (0) target = $region45
    $region44: #{text_encoder_forward.1} parent=1 // pred_region
      _
    $region45: #{text_encoder_forward.1} parent=1 // pred_fallthru
      _
    // Predicated region
    $region46: #{text_encoder_forward.1} parent=1 // pred_check
      _
    $region47: #{text_encoder_forward.1} parent=1 // pred_check_branch
      %46 = sbr.rel (0) target = $region49
    $region48: #{text_encoder_forward.1} parent=1 // pred_region
      _
    $region49: #{text_encoder_forward.1} parent=1 // pred_fallthru
      _
    // Predicated region
    $region50: #{text_encoder_forward.1} parent=1 // pred_check
      _
    $region51: #{text_encoder_forward.1} parent=1 // pred_check_branch
      %48 = sbr.rel (0) target = $region53
    $region52: #{text_encoder_forward.1} parent=1 // pred_region
      _
    $region53: #{text_encoder_forward.1} parent=1 // pred_fallthru
      _
    // Predicated region
    $region54: #{text_encoder_forward.1} parent=1 // pred_check
      _
    $region55: #{text_encoder_forward.1} parent=1 // pred_check_branch
      %50 = sbr.rel (0) target = $region57
    $region56: #{text_encoder_forward.1} parent=1 // pred_region
      _
    $region57: #{text_encoder_forward.1} parent=1 // pred_fallthru
      _
    // Predicated region
    $region58: #{text_encoder_forward.1} parent=1 // pred_check
      _
    $region59: #{text_encoder_forward.1} parent=1 // pred_check_branch
      %52 = sbr.rel (0) target = $region61
    $region60: #{text_encoder_forward.1} parent=1 // pred_region
      _
    $region61: #{text_encoder_forward.1} parent=1 // pred_fallthru
      _
    // Predicated region
    $region62: #{text_encoder_forward.1} parent=1 // pred_check
      _
    $region63: #{text_encoder_forward.1} parent=1 // pred_check_branch
      %54 = sbr.rel (0) target = $region65
    $region64: #{text_encoder_forward.1} parent=1 // pred_region
      _
    $region65: #{text_encoder_forward.1} parent=1 // pred_fallthru
      _
    // Predicated region
    $region66: #{text_encoder_forward.1} parent=1 // pred_check
      _
    $region67: #{text_encoder_forward.1} parent=1 // pred_check_branch
      %56 = sbr.rel (0) target = $region69
    $region68: #{text_encoder_forward.1} parent=1 // pred_region
      _
    $region69: #{text_encoder_forward.1} parent=1 // pred_fallthru
      _
    %v58 = vld [vmem:[%s0] sm:$0xff]
    %v59 = vld [vmem:[%s0 + $0x8] sm:$0xff]
    %v60 = vlaneseq
    %v61 = vand.u32 %v60, 127
    %62 = vset.pattern.permute.xlu0 0
    %63 = vperm.xlu0 %62, %v58
    %v64 = vpop.permute.xlu0 %63
    %65 = vset.pattern.permute.xlu0 0
    %66 = vperm.xlu0 %65, %v59
    %v67 = vpop.permute.xlu0 %66
    %vm68 = vcmp.eq.s32.totalorder %v64, %v61
    %vm69 = vcmp.eq.s32.totalorder %v67, %v61
    %v70 = vsel %vm68, 1.0, 0.0
    %v71 = vsel %vm69, 1.0, 0.0
    %v72 = vpack.c.bf16 %v71, %v70
    %v73 = vld [vmem:[%s1] sm:$0xf]
    %v74 = vld [vmem:[%s1 + $0x4] sm:$0xf]
    %v75 = vld [vmem:[%s1 + $0x8] sm:$0xf]
    %v76 = vld [vmem:[%s1 + $0xc] sm:$0xf]
    %v77 = vld [vmem:[%s1 + $0x10] sm:$0xf]
    %v78 = vld [vmem:[%s1 + $0x14] sm:$0xf]
    %v79 = vld [vmem:[%s1 + $0x18] sm:$0xf]
    %v80 = vld [vmem:[%s1 + $0x1c] sm:$0xf]
    %v89 = vunpack.c.l.b16 %v73
    %v90 = vunpack.c.l.b16 %v74
    %v91 = vunpack.c.l.b16 %v75
    %v92 = vunpack.c.l.b16 %v76
    %v93 = vunpack.c.l.b16 %v77
    %v94 = vunpack.c.l.b16 %v78
    %v95 = vunpack.c.l.b16 %v79
    %v96 = vunpack.c.l.b16 %v80
    %v97 = vpack.c.b16 %v90, %v89
    %v98 = vpack.c.b16 %v92, %v91
    %v99 = vpack.c.b16 %v94, %v93
    %v100 = vpack.c.b16 %v96, %v95
    %vm105 = vcmask 523264
    %v107 = vsel %vm105, %v72, 0
    %109 = vmatprep.subr.bf16.mxu0 0
    %110 = vmatpush1.bf16.msra.mxu0 %v97
    %111 = vmatprep.subr.bf16.mxu0 0
    %112 = vmatpush1.bf16.msra.mxu0 %v98
    %113 = vmatprep.subr.bf16.mxu0 0
    %114 = vmatpush1.bf16.msra.mxu0 %v99
    %115 = vmatprep.subr.bf16.mxu0 0
    %116 = vmatpush1.bf16.msra.mxu0 %v100
    %117 = vmatprep.subr.bf16.mxu0 0
    %118 = vmatpush1.bf16.msra.mxu0 0
    %119 = vmatprep.subr.bf16.mxu0 0
    %120 = vmatpush1.bf16.msra.mxu0 0
    %121 = vmatprep.subr.bf16.mxu0 0
    %122 = vmatpush1.bf16.msra.mxu0 0
    %123 = vmatprep.subr.bf16.mxu0 0
    %124 = vmatpush1.bf16.msra.mxu0 0
    %125 = vmatprep.subr.bf16.mxu0 0
    %126 = vmatpush1.bf16.msra.mxu0 0
    %127 = vmatprep.subr.bf16.mxu0 0
    %128 = vmatpush1.bf16.msra.mxu0 0
    %129 = vmatprep.subr.bf16.mxu0 0
    %130 = vmatpush1.bf16.msra.mxu0 0
    %131 = vmatprep.subr.bf16.mxu0 0
    %132 = vmatpush1.bf16.msra.mxu0 0
    %133 = vmatprep.subr.bf16.mxu0 0
    %134 = vmatpush1.bf16.msra.mxu0 0
    %135 = vmatprep.subr.bf16.mxu0 0
    %136 = vmatpush1.bf16.msra.mxu0 0
    %137 = vmatprep.subr.bf16.mxu0 0
    %138 = vmatpush1.bf16.msra.mxu0 0
    %139 = vmatprep.subr.bf16.mxu0 0
    %140 = vmatpush1.bf16.msra.mxu0 0
    %141 = vmatprep.mubr.bf16.mxu0 0
    %142 = vmatmul.mubr.bf16.gmra.mrb[0].mxu0 %v107
    %v143 = vpop.f32.mrb[0].mxu0
    %v144 = vadd.f32 0.0, %v143
    %v145 = vpop.f32.mrb[0].mxu0
    %v146 = vpop.f32.mrb[0].mxu0
    %v147 = vadd.f32 0.0, %v146
    %v148 = vpop.f32.mrb[0].mxu0
    %149 = vdwg.mxu0
    %v150 = vld [vmem:[%s2] sm:$0xff]
    %v151 = vadd.f32 %v144, %v150
    %v152 = vadd.f32 %v147, %v150
    %v153 = vld [vmem:[%s3] sm:$0x1]
    %v154 = vld [vmem:[%s4] sm:$0x1]
    %vm155 = vcmask 261120
    %v156 = vsel %vm155, %v151, 0.0
    %157 = vadd.xlane.f32.xlu0 %v156
    %v158 = vpop.xlane.xlu0 %157
    %v159 = vsel %vm155, %v152, 0.0
    %160 = vadd.xlane.f32.xlu0 %v159
    %v161 = vpop.xlane.xlu0 %160
    %v162 = vrcp.pop 32.0
    %v163 = vmul.f32 %v158, %v162
    %v164 = vmul.f32 %v161, %v162
    %v165 = vsub.f32 %v151, %v163
    %v166 = vsub.f32 %v152, %v164
    %v167 = vmul.f32 %v165, %v165
    %v168 = vmul.f32 %v166, %v166
    %v169 = vsel %vm155, %v167, 0.0
    %170 = vadd.xlane.f32.xlu0 %v169
    %v171 = vpop.xlane.xlu0 %170
    %v172 = vsel %vm155, %v168, 0.0
    %173 = vadd.xlane.f32.xlu0 %v172
    %v174 = vpop.xlane.xlu0 %173
    %v175 = vmul.f32 %v171, %v162
    %v176 = vmul.f32 %v174, %v162
    %v177 = vadd.f32 %v175, 1e-12
    %v178 = vadd.f32 %v176, 1e-12
    %v179 = vrsqrt.pop %v177
    %v180 = vrsqrt.pop %v178
    %v181 = vmul.f32 %v165, %v179
    %v182 = vmul.f32 %v166, %v180
    %v184 = vlaneseq
    %v185 = vshrl.u32 %v184, 7
    %v186 = vsub.s32 0, %v185
    %v187 = vrot.slane %v153, %v186
    %v189 = vmul.f32 %v181, %v187
    %v190 = vmul.f32 %v182, %v187
    %v192 = vlaneseq
    %v193 = vshrl.u32 %v192, 7
    %v194 = vsub.s32 0, %v193
    %v195 = vrot.slane %v154, %v194
    %v197 = vadd.f32 %v189, %v195
    %v198 = vadd.f32 %v190, %v195
    %v199 = vpack.c.bf16 %v198, %v197
    %v200 = vld [vmem:[%s5] sm:$0xf]
    %v201 = vld [vmem:[%s5 + $0x4] sm:$0xf]
    %v202 = vld [vmem:[%s5 + $0x8] sm:$0xf]
    %v203 = vld [vmem:[%s5 + $0xc] sm:$0xf]
    %v204 = vld [vmem:[%s6] sm:$0x1]
    %v206 = vlaneseq
    %v207 = vshrl.u32 %v206, 7
    %v208 = vsub.s32 0, %v207
    %v209 = vrot.slane %v204, %v208
    %v215 = vunpack.c.l.b16 %v200
    %v216 = vunpack.c.l.b16 %v201
    %v217 = vunpack.c.l.b16 %v202
    %v218 = vunpack.c.l.b16 %v203
    %v219 = vpack.c.b16 %v216, %v215
    %v220 = vpack.c.b16 %v218, %v217
    %v224 = vsel %vm155, %v199, 0
    %226 = vmatprep.subr.bf16.mxu0 0
    %227 = vmatpush1.bf16.msra.mxu0 %v219
    %228 = vmatprep.subr.bf16.mxu0 0
    %229 = vmatpush1.bf16.msra.mxu0 %v220
    %230 = vmatprep.subr.bf16.mxu0 0
    %231 = vmatpush1.bf16.msra.mxu0 0
    %232 = vmatprep.subr.bf16.mxu0 0
    %233 = vmatpush1.bf16.msra.mxu0 0
    %234 = vmatprep.subr.bf16.mxu0 0
    %235 = vmatpush1.bf16.msra.mxu0 0
    %236 = vmatprep.subr.bf16.mxu0 0
    %237 = vmatpush1.bf16.msra.mxu0 0
    %238 = vmatprep.subr.bf16.mxu0 0
    %239 = vmatpush1.bf16.msra.mxu0 0
    %240 = vmatprep.subr.bf16.mxu0 0
    %241 = vmatpush1.bf16.msra.mxu0 0
    %242 = vmatprep.subr.bf16.mxu0 0
    %243 = vmatpush1.bf16.msra.mxu0 0
    %244 = vmatprep.subr.bf16.mxu0 0
    %245 = vmatpush1.bf16.msra.mxu0 0
    %246 = vmatprep.subr.bf16.mxu0 0
    %247 = vmatpush1.bf16.msra.mxu0 0
    %248 = vmatprep.subr.bf16.mxu0 0
    %249 = vmatpush1.bf16.msra.mxu0 0
    %250 = vmatprep.subr.bf16.mxu0 0
    %251 = vmatpush1.bf16.msra.mxu0 0
    %252 = vmatprep.subr.bf16.mxu0 0
    %253 = vmatpush1.bf16.msra.mxu0 0
    %254 = vmatprep.subr.bf16.mxu0 0
    %255 = vmatpush1.bf16.msra.mxu0 0
    %256 = vmatprep.subr.bf16.mxu0 0
    %257 = vmatpush1.bf16.msra.mxu0 0
    %258 = vmatprep.mubr.bf16.mxu0 0
    %259 = vmatmul.mubr.bf16.gmra.mrb[0].mxu0 %v224
    %v260 = vpop.f32.mrb[0].mxu0
    %v261 = vadd.f32 %v209, %v260
    %v262 = vpop.f32.mrb[0].mxu0
    %v263 = vpop.f32.mrb[0].mxu0
    %v264 = vadd.f32 %v209, %v263
    %v265 = vpop.f32.mrb[0].mxu0
    %266 = vdwg.mxu0
    %v267 = vpack.c.bf16 %v261, %v261
    %v268 = vpack.c.bf16 %v264, %v264
    %270 = vrot.lane.b32.xlu0 %v267, 96
    %v271 = vpop.permute.xlu0 %270
    %vm272 = vcmask 64512
    %v274 = vsel %vm272, %v267, 0
    %v277 = vsel %vm272, %v271, 0
    %279 = vmatprep.subr.bf16.mxu0 0
    %280 = vmatpush1.bf16.xpose.msra.mxu0 %v277
    %281 = vmatprep.subr.bf16.mxu0 0
    %282 = vmatpush1.bf16.xpose.msra.mxu0 0
    %283 = vmatprep.subr.bf16.mxu0 0
    %284 = vmatpush1.bf16.xpose.msra.mxu0 0
    %285 = vmatprep.subr.bf16.mxu0 0
    %286 = vmatpush1.bf16.xpose.msra.mxu0 0
    %287 = vmatprep.subr.bf16.mxu0 0
    %288 = vmatpush1.bf16.xpose.msra.mxu0 0
    %289 = vmatprep.subr.bf16.mxu0 0
    %290 = vmatpush1.bf16.xpose.msra.mxu0 0
    %291 = vmatprep.subr.bf16.mxu0 0
    %292 = vmatpush1.bf16.xpose.msra.mxu0 0
    %293 = vmatprep.subr.bf16.mxu0 0
    %294 = vmatpush1.bf16.xpose.msra.mxu0 0
    %295 = vmatprep.subr.bf16.mxu0 0
    %296 = vmatpush1.bf16.xpose.msra.mxu0 0
    %297 = vmatprep.subr.bf16.mxu0 0
    %298 = vmatpush1.bf16.xpose.msra.mxu0 0
    %299 = vmatprep.subr.bf16.mxu0 0
    %300 = vmatpush1.bf16.xpose.msra.mxu0 0
    %301 = vmatprep.subr.bf16.mxu0 0
    %302 = vmatpush1.bf16.xpose.msra.mxu0 0
    %303 = vmatprep.subr.bf16.mxu0 0
    %304 = vmatpush1.bf16.xpose.msra.mxu0 0
    %305 = vmatprep.subr.bf16.mxu0 0
    %306 = vmatpush1.bf16.xpose.msra.mxu0 0
    %307 = vmatprep.subr.bf16.mxu0 0
    %308 = vmatpush1.bf16.xpose.msra.mxu0 0
    %309 = vmatprep.subr.bf16.mxu0 0
    %310 = vmatpush1.bf16.xpose.msra.mxu0 0
    %311 = vmatprep.mubr.bf16.mxu0 0
    %312 = vmatmul.mubr.bf16.gmra.mrb[0].mxu0 %v274
    %v313 = vpop.f32.mrb[0].mxu0
    %v314 = vadd.f32 0.0, %v313
    %v315 = vpop.f32.mrb[0].mxu0
    %v316 = vpop.f32.mrb[0].mxu0
    %v317 = vpop.f32.mrb[0].mxu0
    %318 = vdwg.mxu0
    %320 = vrot.lane.b32.xlu0 %v268, 96
    %v321 = vpop.permute.xlu0 %320
    %v323 = vsel %vm272, %v268, 0
    %v326 = vsel %vm272, %v321, 0
    %328 = vmatprep.subr.bf16.mxu0 0
    %329 = vmatpush1.bf16.xpose.msra.mxu0 %v326
    %330 = vmatprep.subr.bf16.mxu0 0
    %331 = vmatpush1.bf16.xpose.msra.mxu0 0
    %332 = vmatprep.subr.bf16.mxu0 0
    %333 = vmatpush1.bf16.xpose.msra.mxu0 0
    %334 = vmatprep.subr.bf16.mxu0 0
    %335 = vmatpush1.bf16.xpose.msra.mxu0 0
    %336 = vmatprep.subr.bf16.mxu0 0
    %337 = vmatpush1.bf16.xpose.msra.mxu0 0
    %338 = vmatprep.subr.bf16.mxu0 0
    %339 = vmatpush1.bf16.xpose.msra.mxu0 0
    %340 = vmatprep.subr.bf16.mxu0 0
    %341 = vmatpush1.bf16.xpose.msra.mxu0 0
    %342 = vmatprep.subr.bf16.mxu0 0
    %343 = vmatpush1.bf16.xpose.msra.mxu0 0
    %344 = vmatprep.subr.bf16.mxu0 0
    %345 = vmatpush1.bf16.xpose.msra.mxu0 0
    %346 = vmatprep.subr.bf16.mxu0 0
    %347 = vmatpush1.bf16.xpose.msra.mxu0 0
    %348 = vmatprep.subr.bf16.mxu0 0
    %349 = vmatpush1.bf16.xpose.msra.mxu0 0
    %350 = vmatprep.subr.bf16.mxu0 0
    %351 = vmatpush1.bf16.xpose.msra.mxu0 0
    %352 = vmatprep.subr.bf16.mxu0 0
    %353 = vmatpush1.bf16.xpose.msra.mxu0 0
    %354 = vmatprep.subr.bf16.mxu0 0
    %355 = vmatpush1.bf16.xpose.msra.mxu0 0
    %356 = vmatprep.subr.bf16.mxu0 0
    %357 = vmatpush1.bf16.xpose.msra.mxu0 0
    %358 = vmatprep.subr.bf16.mxu0 0
    %359 = vmatpush1.bf16.xpose.msra.mxu0 0
    %360 = vmatprep.mubr.bf16.mxu0 0
    %361 = vmatmul.mubr.bf16.gmra.mrb[0].mxu0 %v323
    %v362 = vpop.f32.mrb[0].mxu0
    %v363 = vadd.f32 0.0, %v362
    %v364 = vpop.f32.mrb[0].mxu0
    %v365 = vpop.f32.mrb[0].mxu0
    %v366 = vpop.f32.mrb[0].mxu0
    %367 = vdwg.mxu0
    %v368 = vmul.f32 %v314, 0.35355338
    %v369 = vmul.f32 %v363, 0.35355338
    %v370 = vsel %vm272, %v368, -inf
    %371 = vmax.xlane.f32.xlu0 %v370
    %v372 = vpop.xlane.xlu0 %371
    %v373 = vsel %vm272, %v369, -inf
    %374 = vmax.xlane.f32.xlu0 %v373
    %v375 = vpop.xlane.xlu0 %374
    %v376 = vsub.f32 %v368, %v372
    %v377 = vsub.f32 %v369, %v375
    %v378 = vmul.f32 %v376, 1.442695
    %v379 = vpow.pop %v378
    %v380 = vmul.f32 %v377, 1.442695
    %v381 = vpow.pop %v380
    %v382 = vsel %vm272, %v379, 0.0
    %383 = vadd.xlane.f32.xlu0 %v382
    %v384 = vpop.xlane.xlu0 %383
    %v385 = vsel %vm272, %v381, 0.0
    %386 = vadd.xlane.f32.xlu0 %v385
    %v387 = vpop.xlane.xlu0 %386
    %v388 = vrcp.pop %v384
    %v389 = vrcp.pop %v387
    %v390 = vmul.f32 %v379, %v388
    %v391 = vmul.f32 %v381, %v389
    %v392 = vpack.c.bf16 %v390, %v390
    %v393 = vpack.c.bf16 %v391, %v391
    %394 = vrot.lane.b32.xlu0 %v267, 64
    %v395 = vpop.permute.xlu0 %394
    %v397 = vsel %vm272, %v392, 0
    %vm399 = vcmask 1043456
    %v401 = vsel %vm399, %v395, 0
    %403 = vmatprep.subr.bf16.mxu0 0
    %404 = vmatpush1.bf16.msra.mxu0 %v401
    %405 = vmatprep.subr.bf16.mxu0 0
    %406 = vmatpush1.bf16.msra.mxu0 0
    %407 = vmatprep.subr.bf16.mxu0 0
    %408 = vmatpush1.bf16.msra.mxu0 0
    %409 = vmatprep.subr.bf16.mxu0 0
    %410 = vmatpush1.bf16.msra.mxu0 0
    %411 = vmatprep.subr.bf16.mxu0 0
    %412 = vmatpush1.bf16.msra.mxu0 0
    %413 = vmatprep.subr.bf16.mxu0 0
    %414 = vmatpush1.bf16.msra.mxu0 0
    %415 = vmatprep.subr.bf16.mxu0 0
    %416 = vmatpush1.bf16.msra.mxu0 0
    %417 = vmatprep.subr.bf16.mxu0 0
    %418 = vmatpush1.bf16.msra.mxu0 0
    %419 = vmatprep.subr.bf16.mxu0 0
    %420 = vmatpush1.bf16.msra.mxu0 0
    %421 = vmatprep.subr.bf16.mxu0 0
    %422 = vmatpush1.bf16.msra.mxu0 0
    %423 = vmatprep.subr.bf16.mxu0 0
    %424 = vmatpush1.bf16.msra.mxu0 0
    %425 = vmatprep.subr.bf16.mxu0 0
    %426 = vmatpush1.bf16.msra.mxu0 0
    %427 = vmatprep.subr.bf16.mxu0 0
    %428 = vmatpush1.bf16.msra.mxu0 0
    %429 = vmatprep.subr.bf16.mxu0 0
    %430 = vmatpush1.bf16.msra.mxu0 0
    %431 = vmatprep.subr.bf16.mxu0 0
    %432 = vmatpush1.bf16.msra.mxu0 0
    %433 = vmatprep.subr.bf16.mxu0 0
    %434 = vmatpush1.bf16.msra.mxu0 0
    %435 = vmatprep.mubr.bf16.mxu0 0
    %436 = vmatmul.mubr.bf16.gmra.mrb[0].mxu0 %v397
    %v437 = vpop.f32.mrb[0].mxu0
    %v438 = vadd.f32 0.0, %v437
    %v439 = vpop.f32.mrb[0].mxu0
    %v440 = vpop.f32.mrb[0].mxu0
    %v441 = vpop.f32.mrb[0].mxu0
    %442 = vdwg.mxu0
    %443 = vrot.lane.b32.xlu0 %v268, 64
    %v444 = vpop.permute.xlu0 %443
    %v446 = vsel %vm272, %v393, 0
    %v449 = vsel %vm399, %v444, 0
    %451 = vmatprep.subr.bf16.mxu0 0
    %452 = vmatpush1.bf16.msra.mxu0 %v449
    %453 = vmatprep.subr.bf16.mxu0 0
    %454 = vmatpush1.bf16.msra.mxu0 0
    %455 = vmatprep.subr.bf16.mxu0 0
    %456 = vmatpush1.bf16.msra.mxu0 0
    %457 = vmatprep.subr.bf16.mxu0 0
    %458 = vmatpush1.bf16.msra.mxu0 0
    %459 = vmatprep.subr.bf16.mxu0 0
    %460 = vmatpush1.bf16.msra.mxu0 0
    %461 = vmatprep.subr.bf16.mxu0 0
    %462 = vmatpush1.bf16.msra.mxu0 0
    %463 = vmatprep.subr.bf16.mxu0 0
    %464 = vmatpush1.bf16.msra.mxu0 0
    %465 = vmatprep.subr.bf16.mxu0 0
    %466 = vmatpush1.bf16.msra.mxu0 0
    %467 = vmatprep.subr.bf16.mxu0 0
    %468 = vmatpush1.bf16.msra.mxu0 0
    %469 = vmatprep.subr.bf16.mxu0 0
    %470 = vmatpush1.bf16.msra.mxu0 0
    %471 = vmatprep.subr.bf16.mxu0 0
    %472 = vmatpush1.bf16.msra.mxu0 0
    %473 = vmatprep.subr.bf16.mxu0 0
    %474 = vmatpush1.bf16.msra.mxu0 0
    %475 = vmatprep.subr.bf16.mxu0 0
    %476 = vmatpush1.bf16.msra.mxu0 0
    %477 = vmatprep.subr.bf16.mxu0 0
    %478 = vmatpush1.bf16.msra.mxu0 0
    %479 = vmatprep.subr.bf16.mxu0 0
    %480 = vmatpush1.bf16.msra.mxu0 0
    %481 = vmatprep.subr.bf16.mxu0 0
    %482 = vmatpush1.bf16.msra.mxu0 0
    %483 = vmatprep.mubr.bf16.mxu0 0
    %484 = vmatmul.mubr.bf16.gmra.mrb[0].mxu0 %v446
    %v485 = vpop.f32.mrb[0].mxu0
    %v486 = vadd.f32 0.0, %v485
    %v487 = vpop.f32.mrb[0].mxu0
    %v488 = vpop.f32.mrb[0].mxu0
    %v489 = vpop.f32.mrb[0].mxu0
    %490 = vdwg.mxu0
    %491 = vrot.lane.b32.xlu0 %v267, 120
    %v492 = vpop.permute.xlu0 %491
    %493 = vrot.lane.b32.xlu0 %v267, 88
    %v494 = vpop.permute.xlu0 %493
    %v496 = vsel %vm272, %v492, 0
    %v499 = vsel %vm272, %v494, 0
    %501 = vmatprep.subr.bf16.mxu0 0
    %502 = vmatpush1.bf16.xpose.msra.mxu0 %v499
    %503 = vmatprep.subr.bf16.mxu0 0
    %504 = vmatpush1.bf16.xpose.msra.mxu0 0
    %505 = vmatprep.subr.bf16.mxu0 0
    %506 = vmatpush1.bf16.xpose.msra.mxu0 0
    %507 = vmatprep.subr.bf16.mxu0 0
    %508 = vmatpush1.bf16.xpose.msra.mxu0 0
    %509 = vmatprep.subr.bf16.mxu0 0
    %510 = vmatpush1.bf16.xpose.msra.mxu0 0
    %511 = vmatprep.subr.bf16.mxu0 0
    %512 = vmatpush1.bf16.xpose.msra.mxu0 0
    %513 = vmatprep.subr.bf16.mxu0 0
    %514 = vmatpush1.bf16.xpose.msra.mxu0 0
    %515 = vmatprep.subr.bf16.mxu0 0
    %516 = vmatpush1.bf16.xpose.msra.mxu0 0
    %517 = vmatprep.subr.bf16.mxu0 0
    %518 = vmatpush1.bf16.xpose.msra.mxu0 0
    %519 = vmatprep.subr.bf16.mxu0 0
    %520 = vmatpush1.bf16.xpose.msra.mxu0 0
    %521 = vmatprep.subr.bf16.mxu0 0
    %522 = vmatpush1.bf16.xpose.msra.mxu0 0
    %523 = vmatprep.subr.bf16.mxu0 0
    %524 = vmatpush1.bf16.xpose.msra.mxu0 0
    %525 = vmatprep.subr.bf16.mxu0 0
    %526 = vmatpush1.bf16.xpose.msra.mxu0 0
    %527 = vmatprep.subr.bf16.mxu0 0
    %528 = vmatpush1.bf16.xpose.msra.mxu0 0
    %529 = vmatprep.subr.bf16.mxu0 0
    %530 = vmatpush1.bf16.xpose.msra.mxu0 0
    %531 = vmatprep.subr.bf16.mxu0 0
    %532 = vmatpush1.bf16.xpose.msra.mxu0 0
    %533 = vmatprep.mubr.bf16.mxu0 0
    %534 = vmatmul.mubr.bf16.gmra.mrb[0].mxu0 %v496
    %v535 = vpop.f32.mrb[0].mxu0
    %v536 = vadd.f32 0.0, %v535
    %v537 = vpop.f32.mrb[0].mxu0
    %v538 = vpop.f32.mrb[0].mxu0
    %v539 = vpop.f32.mrb[0].mxu0
    %540 = vdwg.mxu0
    %541 = vrot.lane.b32.xlu0 %v268, 120
    %v542 = vpop.permute.xlu0 %541
    %543 = vrot.lane.b32.xlu0 %v268, 88
    %v544 = vpop.permute.xlu0 %543
    %v546 = vsel %vm272, %v542, 0
    %v549 = vsel %vm272, %v544, 0
    %551 = vmatprep.subr.bf16.mxu0 0
    %552 = vmatpush1.bf16.xpose.msra.mxu0 %v549
    %553 = vmatprep.subr.bf16.mxu0 0
    %554 = vmatpush1.bf16.xpose.msra.mxu0 0
    %555 = vmatprep.subr.bf16.mxu0 0
    %556 = vmatpush1.bf16.xpose.msra.mxu0 0
    %557 = vmatprep.subr.bf16.mxu0 0
    %558 = vmatpush1.bf16.xpose.msra.mxu0 0
    %559 = vmatprep.subr.bf16.mxu0 0
    %560 = vmatpush1.bf16.xpose.msra.mxu0 0
    %561 = vmatprep.subr.bf16.mxu0 0
    %562 = vmatpush1.bf16.xpose.msra.mxu0 0
    %563 = vmatprep.subr.bf16.mxu0 0
    %564 = vmatpush1.bf16.xpose.msra.mxu0 0
    %565 = vmatprep.subr.bf16.mxu0 0
    %566 = vmatpush1.bf16.xpose.msra.mxu0 0
    %567 = vmatprep.subr.bf16.mxu0 0
    %568 = vmatpush1.bf16.xpose.msra.mxu0 0
    %569 = vmatprep.subr.bf16.mxu0 0
    %570 = vmatpush1.bf16.xpose.msra.mxu0 0
    %571 = vmatprep.subr.bf16.mxu0 0
    %572 = vmatpush1.bf16.xpose.msra.mxu0 0
    %573 = vmatprep.subr.bf16.mxu0 0
    %574 = vmatpush1.bf16.xpose.msra.mxu0 0
    %575 = vmatprep.subr.bf16.mxu0 0
    %576 = vmatpush1.bf16.xpose.msra.mxu0 0
    %577 = vmatprep.subr.bf16.mxu0 0
    %578 = vmatpush1.bf16.xpose.msra.mxu0 0
    %579 = vmatprep.subr.bf16.mxu0 0
    %580 = vmatpush1.bf16.xpose.msra.mxu0 0
    %581 = vmatprep.subr.bf16.mxu0 0
    %582 = vmatpush1.bf16.xpose.msra.mxu0 0
    %583 = vmatprep.mubr.bf16.mxu0 0
    %584 = vmatmul.mubr.bf16.gmra.mrb[0].mxu0 %v546
    %v585 = vpop.f32.mrb[0].mxu0
    %v586 = vadd.f32 0.0, %v585
    %v587 = vpop.f32.mrb[0].mxu0
    %v588 = vpop.f32.mrb[0].mxu0
    %v589 = vpop.f32.mrb[0].mxu0
    %590 = vdwg.mxu0
    %v591 = vmul.f32 %v536, 0.35355338
    %v592 = vmul.f32 %v586, 0.35355338
    %v593 = vsel %vm272, %v591, -inf
    %594 = vmax.xlane.f32.xlu0 %v593
    %v595 = vpop.xlane.xlu0 %594
    %v596 = vsel %vm272, %v592, -inf
    %597 = vmax.xlane.f32.xlu0 %v596
    %v598 = vpop.xlane.xlu0 %597
    %v599 = vsub.f32 %v591, %v595
    %v600 = vsub.f32 %v592, %v598
    %v601 = vmul.f32 %v599, 1.442695
    %v602 = vpow.pop %v601
    %v603 = vmul.f32 %v600, 1.442695
    %v604 = vpow.pop %v603
    %v605 = vsel %vm272, %v602, 0.0
    %606 = vadd.xlane.f32.xlu0 %v605
    %v607 = vpop.xlane.xlu0 %606
    %v608 = vsel %vm272, %v604, 0.0
    %609 = vadd.xlane.f32.xlu0 %v608
    %v610 = vpop.xlane.xlu0 %609
    %v611 = vrcp.pop %v607
    %v612 = vrcp.pop %v610
    %v613 = vmul.f32 %v602, %v611
    %v614 = vmul.f32 %v604, %v612
    %v615 = vpack.c.bf16 %v613, %v613
    %v616 = vpack.c.bf16 %v614, %v614
    %617 = vrot.lane.b32.xlu0 %v267, 56
    %v618 = vpop.permute.xlu0 %617
    %v620 = vsel %vm272, %v615, 0
    %v623 = vsel %vm399, %v618, 0
    %625 = vmatprep.subr.bf16.mxu0 0
    %626 = vmatpush1.bf16.msra.mxu0 %v623
    %627 = vmatprep.subr.bf16.mxu0 0
    %628 = vmatpush1.bf16.msra.mxu0 0
    %629 = vmatprep.subr.bf16.mxu0 0
    %630 = vmatpush1.bf16.msra.mxu0 0
    %631 = vmatprep.subr.bf16.mxu0 0
    %632 = vmatpush1.bf16.msra.mxu0 0
    %633 = vmatprep.subr.bf16.mxu0 0
    %634 = vmatpush1.bf16.msra.mxu0 0
    %635 = vmatprep.subr.bf16.mxu0 0
    %636 = vmatpush1.bf16.msra.mxu0 0
    %637 = vmatprep.subr.bf16.mxu0 0
    %638 = vmatpush1.bf16.msra.mxu0 0
    %639 = vmatprep.subr.bf16.mxu0 0
    %640 = vmatpush1.bf16.msra.mxu0 0
    %641 = vmatprep.subr.bf16.mxu0 0
    %642 = vmatpush1.bf16.msra.mxu0 0
    %643 = vmatprep.subr.bf16.mxu0 0
    %644 = vmatpush1.bf16.msra.mxu0 0
    %645 = vmatprep.subr.bf16.mxu0 0
    %646 = vmatpush1.bf16.msra.mxu0 0
    %647 = vmatprep.subr.bf16.mxu0 0
    %648 = vmatpush1.bf16.msra.mxu0 0
    %649 = vmatprep.subr.bf16.mxu0 0
    %650 = vmatpush1.bf16.msra.mxu0 0
    %651 = vmatprep.subr.bf16.mxu0 0
    %652 = vmatpush1.bf16.msra.mxu0 0
    %653 = vmatprep.subr.bf16.mxu0 0
    %654 = vmatpush1.bf16.msra.mxu0 0
    %655 = vmatprep.subr.bf16.mxu0 0
    %656 = vmatpush1.bf16.msra.mxu0 0
    %657 = vmatprep.mubr.bf16.mxu0 0
    %658 = vmatmul.mubr.bf16.gmra.mrb[0].mxu0 %v620
    %v659 = vpop.f32.mrb[0].mxu0
    %v660 = vadd.f32 0.0, %v659
    %v661 = vpop.f32.mrb[0].mxu0
    %v662 = vpop.f32.mrb[0].mxu0
    %v663 = vpop.f32.mrb[0].mxu0
    %664 = vdwg.mxu0
    %665 = vrot.lane.b32.xlu0 %v268, 56
    %v666 = vpop.permute.xlu0 %665
    %v668 = vsel %vm272, %v616, 0
    %v671 = vsel %vm399, %v666, 0
    %673 = vmatprep.subr.bf16.mxu0 0
    %674 = vmatpush1.bf16.msra.mxu0 %v671
    %675 = vmatprep.subr.bf16.mxu0 0
    %676 = vmatpush1.bf16.msra.mxu0 0
    %677 = vmatprep.subr.bf16.mxu0 0
    %678 = vmatpush1.bf16.msra.mxu0 0
    %679 = vmatprep.subr.bf16.mxu0 0
    %680 = vmatpush1.bf16.msra.mxu0 0
    %681 = vmatprep.subr.bf16.mxu0 0
    %682 = vmatpush1.bf16.msra.mxu0 0
    %683 = vmatprep.subr.bf16.mxu0 0
    %684 = vmatpush1.bf16.msra.mxu0 0
    %685 = vmatprep.subr.bf16.mxu0 0
    %686 = vmatpush1.bf16.msra.mxu0 0
    %687 = vmatprep.subr.bf16.mxu0 0
    %688 = vmatpush1.bf16.msra.mxu0 0
    %689 = vmatprep.subr.bf16.mxu0 0
    %690 = vmatpush1.bf16.msra.mxu0 0
    %691 = vmatprep.subr.bf16.mxu0 0
    %692 = vmatpush1.bf16.msra.mxu0 0
    %693 = vmatprep.subr.bf16.mxu0 0
    %694 = vmatpush1.bf16.msra.mxu0 0
    %695 = vmatprep.subr.bf16.mxu0 0
    %696 = vmatpush1.bf16.msra.mxu0 0
    %697 = vmatprep.subr.bf16.mxu0 0
    %698 = vmatpush1.bf16.msra.mxu0 0
    %699 = vmatprep.subr.bf16.mxu0 0
    %700 = vmatpush1.bf16.msra.mxu0 0
    %701 = vmatprep.subr.bf16.mxu0 0
    %702 = vmatpush1.bf16.msra.mxu0 0
    %703 = vmatprep.subr.bf16.mxu0 0
    %704 = vmatpush1.bf16.msra.mxu0 0
    %705 = vmatprep.mubr.bf16.mxu0 0
    %706 = vmatmul.mubr.bf16.gmra.mrb[0].mxu0 %v668
    %v707 = vpop.f32.mrb[0].mxu0
    %v708 = vadd.f32 0.0, %v707
    %v709 = vpop.f32.mrb[0].mxu0
    %v710 = vpop.f32.mrb[0].mxu0
    %v711 = vpop.f32.mrb[0].mxu0
    %712 = vdwg.mxu0
    %713 = vrot.lane.b32.xlu0 %v267, 112
    %v714 = vpop.permute.xlu0 %713
    %715 = vrot.lane.b32.xlu0 %v267, 80
    %v716 = vpop.permute.xlu0 %715
    %v718 = vsel %vm272, %v714, 0
    %v721 = vsel %vm272, %v716, 0
    %723 = vmatprep.subr.bf16.mxu0 0
    %724 = vmatpush1.bf16.xpose.msra.mxu0 %v721
    %725 = vmatprep.subr.bf16.mxu0 0
    %726 = vmatpush1.bf16.xpose.msra.mxu0 0
    %727 = vmatprep.subr.bf16.mxu0 0
    %728 = vmatpush1.bf16.xpose.msra.mxu0 0
    %729 = vmatprep.subr.bf16.mxu0 0
    %730 = vmatpush1.bf16.xpose.msra.mxu0 0
    %731 = vmatprep.subr.bf16.mxu0 0
    %732 = vmatpush1.bf16.xpose.msra.mxu0 0
    %733 = vmatprep.subr.bf16.mxu0 0
    %734 = vmatpush1.bf16.xpose.msra.mxu0 0
    %735 = vmatprep.subr.bf16.mxu0 0
    %736 = vmatpush1.bf16.xpose.msra.mxu0 0
    %737 = vmatprep.subr.bf16.mxu0 0
    %738 = vmatpush1.bf16.xpose.msra.mxu0 0
    %739 = vmatprep.subr.bf16.mxu0 0
    %740 = vmatpush1.bf16.xpose.msra.mxu0 0
    %741 = vmatprep.subr.bf16.mxu0 0
    %742 = vmatpush1.bf16.xpose.msra.mxu0 0
    %743 = vmatprep.subr.bf16.mxu0 0
    %744 = vmatpush1.bf16.xpose.msra.mxu0 0
    %745 = vmatprep.subr.bf16.mxu0 0
    %746 = vmatpush1.bf16.xpose.msra.mxu0 0
    %747 = vmatprep.subr.bf16.mxu0 0
    %748 = vmatpush1.bf16.xpose.msra.mxu0 0
    %749 = vmatprep.subr.bf16.mxu0 0
    %750 = vmatpush1.bf16.xpose.msra.mxu0 0
    %751 = vmatprep.subr.bf16.mxu0 0
    %752 = vmatpush1.bf16.xpose.msra.mxu0 0
    %753 = vmatprep.subr.bf16.mxu0 0
    %754 = vmatpush1.bf16.xpose.msra.mxu0 0
    %755 = vmatprep.mubr.bf16.mxu0 0
    %756 = vmatmul.mubr.bf16.gmra.mrb[0].mxu0 %v718
    %v757 = vpop.f32.mrb[0].mxu0
    %v758 = vadd.f32 0.0, %v757
    %v759 = vpop.f32.mrb[0].mxu0
    %v760 = vpop.f32.mrb[0].mxu0
    %v761 = vpop.f32.mrb[0].mxu0
    %762 = vdwg.mxu0
    %763 = vrot.lane.b32.xlu0 %v268, 112
    %v764 = vpop.permute.xlu0 %763
    %765 = vrot.lane.b32.xlu0 %v268, 80
    %v766 = vpop.permute.xlu0 %765
    %v768 = vsel %vm272, %v764, 0
    %v771 = vsel %vm272, %v766, 0
    %773 = vmatprep.subr.bf16.mxu0 0
    %774 = vmatpush1.bf16.xpose.msra.mxu0 %v771
    %775 = vmatprep.subr.bf16.mxu0 0
    %776 = vmatpush1.bf16.xpose.msra.mxu0 0
    %777 = vmatprep.subr.bf16.mxu0 0
    %778 = vmatpush1.bf16.xpose.msra.mxu0 0
    %779 = vmatprep.subr.bf16.mxu0 0
    %780 = vmatpush1.bf16.xpose.msra.mxu0 0
    %781 = vmatprep.subr.bf16.mxu0 0
    %782 = vmatpush1.bf16.xpose.msra.mxu0 0
    %783 = vmatprep.subr.bf16.mxu0 0
    %784 = vmatpush1.bf16.xpose.msra.mxu0 0
    %785 = vmatprep.subr.bf16.mxu0 0
    %786 = vmatpush1.bf16.xpose.msra.mxu0 0
    %787 = vmatprep.subr.bf16.mxu0 0
    %788 = vmatpush1.bf16.xpose.msra.mxu0 0
    %789 = vmatprep.subr.bf16.mxu0 0
    %790 = vmatpush1.bf16.xpose.msra.mxu0 0
    %791 = vmatprep.subr.bf16.mxu0 0
    %792 = vmatpush1.bf16.xpose.msra.mxu0 0
    %793 = vmatprep.subr.bf16.mxu0 0
    %794 = vmatpush1.bf16.xpose.msra.mxu0 0
    %795 = vmatprep.subr.bf16.mxu0 0
    %796 = vmatpush1.bf16.xpose.msra.mxu0 0
    %797 = vmatprep.subr.bf16.mxu0 0
    %798 = vmatpush1.bf16.xpose.msra.mxu0 0
    %799 = vmatprep.subr.bf16.mxu0 0
    %800 = vmatpush1.bf16.xpose.msra.mxu0 0
    %801 = vmatprep.subr.bf16.mxu0 0
    %802 = vmatpush1.bf16.xpose.msra.mxu0 0
    %803 = vmatprep.subr.bf16.mxu0 0
    %804 = vmatpush1.bf16.xpose.msra.mxu0 0
    %805 = vmatprep.mubr.bf16.mxu0 0
    %806 = vmatmul.mubr.bf16.gmra.mrb[0].mxu0 %v768
    %v807 = vpop.f32.mrb[0].mxu0
    %v808 = vadd.f32 0.0, %v807
    %v809 = vpop.f32.mrb[0].mxu0
    %v810 = vpop.f32.mrb[0].mxu0
    %v811 = vpop.f32.mrb[0].mxu0
    %812 = vdwg.mxu0
    %v813 = vmul.f32 %v758, 0.35355338
    %v814 = vmul.f32 %v808, 0.35355338
    %v815 = vsel %vm272, %v813, -inf
    %816 = vmax.xlane.f32.xlu0 %v815
    %v817 = vpop.xlane.xlu0 %816
    %v818 = vsel %vm272, %v814, -inf
    %819 = vmax.xlane.f32.xlu0 %v818
    %v820 = vpop.xlane.xlu0 %819
    %v821 = vsub.f32 %v813, %v817
    %v822 = vsub.f32 %v814, %v820
    %v823 = vmul.f32 %v821, 1.442695
    %v824 = vpow.pop %v823
    %v825 = vmul.f32 %v822, 1.442695
    %v826 = vpow.pop %v825
    %v827 = vsel %vm272, %v824, 0.0
    %828 = vadd.xlane.f32.xlu0 %v827
    %v829 = vpop.xlane.xlu0 %828
    %v830 = vsel %vm272, %v826, 0.0
    %831 = vadd.xlane.f32.xlu0 %v830
    %v832 = vpop.xlane.xlu0 %831
    %v833 = vrcp.pop %v829
    %v834 = vrcp.pop %v832
    %v835 = vmul.f32 %v824, %v833
    %v836 = vmul.f32 %v826, %v834
    %v837 = vpack.c.bf16 %v835, %v835
    %v838 = vpack.c.bf16 %v836, %v836
    %839 = vrot.lane.b32.xlu0 %v267, 48
    %v840 = vpop.permute.xlu0 %839
    %v842 = vsel %vm272, %v837, 0
    %v845 = vsel %vm399, %v840, 0
    %847 = vmatprep.subr.bf16.mxu0 0
    %848 = vmatpush1.bf16.msra.mxu0 %v845
    %849 = vmatprep.subr.bf16.mxu0 0
    %850 = vmatpush1.bf16.msra.mxu0 0
    %851 = vmatprep.subr.bf16.mxu0 0
    %852 = vmatpush1.bf16.msra.mxu0 0
    %853 = vmatprep.subr.bf16.mxu0 0
    %854 = vmatpush1.bf16.msra.mxu0 0
    %855 = vmatprep.subr.bf16.mxu0 0
    %856 = vmatpush1.bf16.msra.mxu0 0
    %857 = vmatprep.subr.bf16.mxu0 0
    %858 = vmatpush1.bf16.msra.mxu0 0
    %859 = vmatprep.subr.bf16.mxu0 0
    %860 = vmatpush1.bf16.msra.mxu0 0
    %861 = vmatprep.subr.bf16.mxu0 0
    %862 = vmatpush1.bf16.msra.mxu0 0
    %863 = vmatprep.subr.bf16.mxu0 0
    %864 = vmatpush1.bf16.msra.mxu0 0
    %865 = vmatprep.subr.bf16.mxu0 0
    %866 = vmatpush1.bf16.msra.mxu0 0
    %867 = vmatprep.subr.bf16.mxu0 0
    %868 = vmatpush1.bf16.msra.mxu0 0
    %869 = vmatprep.subr.bf16.mxu0 0
    %870 = vmatpush1.bf16.msra.mxu0 0
    %871 = vmatprep.subr.bf16.mxu0 0
    %872 = vmatpush1.bf16.msra.mxu0 0
    %873 = vmatprep.subr.bf16.mxu0 0
    %874 = vmatpush1.bf16.msra.mxu0 0
    %875 = vmatprep.subr.bf16.mxu0 0
    %876 = vmatpush1.bf16.msra.mxu0 0
    %877 = vmatprep.subr.bf16.mxu0 0
    %878 = vmatpush1.bf16.msra.mxu0 0
    %879 = vmatprep.mubr.bf16.mxu0 0
    %880 = vmatmul.mubr.bf16.gmra.mrb[0].mxu0 %v842
    %v881 = vpop.f32.mrb[0].mxu0
    %v882 = vadd.f32 0.0, %v881
    %v883 = vpop.f32.mrb[0].mxu0
    %v884 = vpop.f32.mrb[0].mxu0
    %v885 = vpop.f32.mrb[0].mxu0
    %886 = vdwg.mxu0
    %887 = vrot.lane.b32.xlu0 %v268, 48
    %v888 = vpop.permute.xlu0 %887
    %v890 = vsel %vm272, %v838, 0
    %v893 = vsel %vm399, %v888, 0
    %895 = vmatprep.subr.bf16.mxu0 0
    %896 = vmatpush1.bf16.msra.mxu0 %v893
    %897 = vmatprep.subr.bf16.mxu0 0
    %898 = vmatpush1.bf16.msra.mxu0 0
    %899 = vmatprep.subr.bf16.mxu0 0
    %900 = vmatpush1.bf16.msra.mxu0 0
    %901 = vmatprep.subr.bf16.mxu0 0
    %902 = vmatpush1.bf16.msra.mxu0 0
    %903 = vmatprep.subr.bf16.mxu0 0
    %904 = vmatpush1.bf16.msra.mxu0 0
    %905 = vmatprep.subr.bf16.mxu0 0
    %906 = vmatpush1.bf16.msra.mxu0 0
    %907 = vmatprep.subr.bf16.mxu0 0
    %908 = vmatpush1.bf16.msra.mxu0 0
    %909 = vmatprep.subr.bf16.mxu0 0
    %910 = vmatpush1.bf16.msra.mxu0 0
    %911 = vmatprep.subr.bf16.mxu0 0
    %912 = vmatpush1.bf16.msra.mxu0 0
    %913 = vmatprep.subr.bf16.mxu0 0
    %914 = vmatpush1.bf16.msra.mxu0 0
    %915 = vmatprep.subr.bf16.mxu0 0
    %916 = vmatpush1.bf16.msra.mxu0 0
    %917 = vmatprep.subr.bf16.mxu0 0
    %918 = vmatpush1.bf16.msra.mxu0 0
    %919 = vmatprep.subr.bf16.mxu0 0
    %920 = vmatpush1.bf16.msra.mxu0 0
    %921 = vmatprep.subr.bf16.mxu0 0
    %922 = vmatpush1.bf16.msra.mxu0 0
    %923 = vmatprep.subr.bf16.mxu0 0
    %924 = vmatpush1.bf16.msra.mxu0 0
    %925 = vmatprep.subr.bf16.mxu0 0
    %926 = vmatpush1.bf16.msra.mxu0 0
    %927 = vmatprep.mubr.bf16.mxu0 0
    %928 = vmatmul.mubr.bf16.gmra.mrb[0].mxu0 %v890
    %v929 = vpop.f32.mrb[0].mxu0
    %v930 = vadd.f32 0.0, %v929
    %v931 = vpop.f32.mrb[0].mxu0
    %v932 = vpop.f32.mrb[0].mxu0
    %v933 = vpop.f32.mrb[0].mxu0
    %934 = vdwg.mxu0
    %935 = vrot.lane.b32.xlu0 %v267, 104
    %v936 = vpop.permute.xlu0 %935
    %937 = vrot.lane.b32.xlu0 %v267, 72
    %v938 = vpop.permute.xlu0 %937
    %v940 = vsel %vm272, %v936, 0
    %v943 = vsel %vm272, %v938, 0
    %945 = vmatprep.subr.bf16.mxu0 0
    %946 = vmatpush1.bf16.xpose.msra.mxu0 %v943
    %947 = vmatprep.subr.bf16.mxu0 0
    %948 = vmatpush1.bf16.xpose.msra.mxu0 0
    %949 = vmatprep.subr.bf16.mxu0 0
    %950 = vmatpush1.bf16.xpose.msra.mxu0 0
    %951 = vmatprep.subr.bf16.mxu0 0
    %952 = vmatpush1.bf16.xpose.msra.mxu0 0
    %953 = vmatprep.subr.bf16.mxu0 0
    %954 = vmatpush1.bf16.xpose.msra.mxu0 0
    %955 = vmatprep.subr.bf16.mxu0 0
    %956 = vmatpush1.bf16.xpose.msra.mxu0 0
    %957 = vmatprep.subr.bf16.mxu0 0
    %958 = vmatpush1.bf16.xpose.msra.mxu0 0
    %959 = vmatprep.subr.bf16.mxu0 0
    %960 = vmatpush1.bf16.xpose.msra.mxu0 0
    %961 = vmatprep.subr.bf16.mxu0 0
    %962 = vmatpush1.bf16.xpose.msra.mxu0 0
    %963 = vmatprep.subr.bf16.mxu0 0
    %964 = vmatpush1.bf16.xpose.msra.mxu0 0
    %965 = vmatprep.subr.bf16.mxu0 0
    %966 = vmatpush1.bf16.xpose.msra.mxu0 0
    %967 = vmatprep.subr.bf16.mxu0 0
    %968 = vmatpush1.bf16.xpose.msra.mxu0 0
    %969 = vmatprep.subr.bf16.mxu0 0
    %970 = vmatpush1.bf16.xpose.msra.mxu0 0
    %971 = vmatprep.subr.bf16.mxu0 0
    %972 = vmatpush1.bf16.xpose.msra.mxu0 0
    %973 = vmatprep.subr.bf16.mxu0 0
    %974 = vmatpush1.bf16.xpose.msra.mxu0 0
    %975 = vmatprep.subr.bf16.mxu0 0
    %976 = vmatpush1.bf16.xpose.msra.mxu0 0
    %977 = vmatprep.mubr.bf16.mxu0 0
    %978 = vmatmul.mubr.bf16.gmra.mrb[0].mxu0 %v940
    %v979 = vpop.f32.mrb[0].mxu0
    %v980 = vadd.f32 0.0, %v979
    %v981 = vpop.f32.mrb[0].mxu0
    %v982 = vpop.f32.mrb[0].mxu0
    %v983 = vpop.f32.mrb[0].mxu0
    %984 = vdwg.mxu0
    %985 = vrot.lane.b32.xlu0 %v268, 104
    %v986 = vpop.permute.xlu0 %985
    %987 = vrot.lane.b32.xlu0 %v268, 72
    %v988 = vpop.permute.xlu0 %987
    %v990 = vsel %vm272, %v986, 0
    %v993 = vsel %vm272, %v988, 0
    %995 = vmatprep.subr.bf16.mxu0 0
    %996 = vmatpush1.bf16.xpose.msra.mxu0 %v993
    %997 = vmatprep.subr.bf16.mxu0 0
    %998 = vmatpush1.bf16.xpose.msra.mxu0 0
    %999 = vmatprep.subr.bf16.mxu0 0
    %1000 = vmatpush1.bf16.xpose.msra.mxu0 0
    %1001 = vmatprep.subr.bf16.mxu0 0
    %1002 = vmatpush1.bf16.xpose.msra.mxu0 0
    %1003 = vmatprep.subr.bf16.mxu0 0
    %1004 = vmatpush1.bf16.xpose.msra.mxu0 0
    %1005 = vmatprep.subr.bf16.mxu0 0
    %1006 = vmatpush1.bf16.xpose.msra.mxu0 0
    %1007 = vmatprep.subr.bf16.mxu0 0
    %1008 = vmatpush1.bf16.xpose.msra.mxu0 0
    %1009 = vmatprep.subr.bf16.mxu0 0
    %1010 = vmatpush1.bf16.xpose.msra.mxu0 0
    %1011 = vmatprep.subr.bf16.mxu0 0
    %1012 = vmatpush1.bf16.xpose.msra.mxu0 0
    %1013 = vmatprep.subr.bf16.mxu0 0
    %1014 = vmatpush1.bf16.xpose.msra.mxu0 0
    %1015 = vmatprep.subr.bf16.mxu0 0
    %1016 = vmatpush1.bf16.xpose.msra.mxu0 0
    %1017 = vmatprep.subr.bf16.mxu0 0
    %1018 = vmatpush1.bf16.xpose.msra.mxu0 0
    %1019 = vmatprep.subr.bf16.mxu0 0
    %1020 = vmatpush1.bf16.xpose.msra.mxu0 0
    %1021 = vmatprep.subr.bf16.mxu0 0
    %1022 = vmatpush1.bf16.xpose.msra.mxu0 0
    %1023 = vmatprep.subr.bf16.mxu0 0
    %1024 = vmatpush1.bf16.xpose.msra.mxu0 0
    %1025 = vmatprep.subr.bf16.mxu0 0
    %1026 = vmatpush1.bf16.xpose.msra.mxu0 0
    %1027 = vmatprep.mubr.bf16.mxu0 0
    %1028 = vmatmul.mubr.bf16.gmra.mrb[0].mxu0 %v990
    %v1029 = vpop.f32.mrb[0].mxu0
    %v1030 = vadd.f32 0.0, %v1029
    %v1031 = vpop.f32.mrb[0].mxu0
    %v1032 = vpop.f32.mrb[0].mxu0
    %v1033 = vpop.f32.mrb[0].mxu0
    %1034 = vdwg.mxu0
    %v1035 = vmul.f32 %v980, 0.35355338
    %v1036 = vmul.f32 %v1030, 0.35355338
    %v1037 = vsel %vm272, %v1035, -inf
    %1038 = vmax.xlane.f32.xlu0 %v1037
    %v1039 = vpop.xlane.xlu0 %1038
    %v1040 = vsel %vm272, %v1036, -inf
    %1041 = vmax.xlane.f32.xlu0 %v1040
    %v1042 = vpop.xlane.xlu0 %1041
    %v1043 = vsub.f32 %v1035, %v1039
    %v1044 = vsub.f32 %v1036, %v1042
    %v1045 = vmul.f32 %v1043, 1.442695
    %v1046 = vpow.pop %v1045
    %v1047 = vmul.f32 %v1044, 1.442695
    %v1048 = vpow.pop %v1047
    %v1049 = vsel %vm272, %v1046, 0.0
    %1050 = vadd.xlane.f32.xlu0 %v1049
    %v1051 = vpop.xlane.xlu0 %1050
    %v1052 = vsel %vm272, %v1048, 0.0
    %1053 = vadd.xlane.f32.xlu0 %v1052
    %v1054 = vpop.xlane.xlu0 %1053
    %v1055 = vrcp.pop %v1051
    %v1056 = vrcp.pop %v1054
    %v1057 = vmul.f32 %v1046, %v1055
    %v1058 = vmul.f32 %v1048, %v1056
    %v1059 = vpack.c.bf16 %v1057, %v1057
    %v1060 = vpack.c.bf16 %v1058, %v1058
    %1061 = vrot.lane.b32.xlu0 %v267, 40
    %v1062 = vpop.permute.xlu0 %1061
    %v1064 = vsel %vm272, %v1059, 0
    %v1067 = vsel %vm399, %v1062, 0
    %1069 = vmatprep.subr.bf16.mxu0 0
    %1070 = vmatpush1.bf16.msra.mxu0 %v1067
    %1071 = vmatprep.subr.bf16.mxu0 0
    %1072 = vmatpush1.bf16.msra.mxu0 0
    %1073 = vmatprep.subr.bf16.mxu0 0
    %1074 = vmatpush1.bf16.msra.mxu0 0
    %1075 = vmatprep.subr.bf16.mxu0 0
    %1076 = vmatpush1.bf16.msra.mxu0 0
    %1077 = vmatprep.subr.bf16.mxu0 0
    %1078 = vmatpush1.bf16.msra.mxu0 0
    %1079 = vmatprep.subr.bf16.mxu0 0
    %1080 = vmatpush1.bf16.msra.mxu0 0
    %1081 = vmatprep.subr.bf16.mxu0 0
    %1082 = vmatpush1.bf16.msra.mxu0 0
    %1083 = vmatprep.subr.bf16.mxu0 0
    %1084 = vmatpush1.bf16.msra.mxu0 0
    %1085 = vmatprep.subr.bf16.mxu0 0
    %1086 = vmatpush1.bf16.msra.mxu0 0
    %1087 = vmatprep.subr.bf16.mxu0 0
    %1088 = vmatpush1.bf16.msra.mxu0 0
    %1089 = vmatprep.subr.bf16.mxu0 0
    %1090 = vmatpush1.bf16.msra.mxu0 0
    %1091 = vmatprep.subr.bf16.mxu0 0
    %1092 = vmatpush1.bf16.msra.mxu0 0
    %1093 = vmatprep.subr.bf16.mxu0 0
    %1094 = vmatpush1.bf16.msra.mxu0 0
    %1095 = vmatprep.subr.bf16.mxu0 0
    %1096 = vmatpush1.bf16.msra.mxu0 0
    %1097 = vmatprep.subr.bf16.mxu0 0
    %1098 = vmatpush1.bf16.msra.mxu0 0
    %1099 = vmatprep.subr.bf16.mxu0 0
    %1100 = vmatpush1.bf16.msra.mxu0 0
    %1101 = vmatprep.mubr.bf16.mxu0 0
    %1102 = vmatmul.mubr.bf16.gmra.mrb[0].mxu0 %v1064
    %v1103 = vpop.f32.mrb[0].mxu0
    %v1104 = vadd.f32 0.0, %v1103
    %v1105 = vpop.f32.mrb[0].mxu0
    %v1106 = vpop.f32.mrb[0].mxu0
    %v1107 = vpop.f32.mrb[0].mxu0
    %1108 = vdwg.mxu0
    %1109 = vrot.lane.b32.xlu0 %v268, 40
    %v1110 = vpop.permute.xlu0 %1109
    %v1112 = vsel %vm272, %v1060, 0
    %v1115 = vsel %vm399, %v1110, 0
    %1117 = vmatprep.subr.bf16.mxu0 0
    %1118 = vmatpush1.bf16.msra.mxu0 %v1115
    %1119 = vmatprep.subr.bf16.mxu0 0
    %1120 = vmatpush1.bf16.msra.mxu0 0
    %1121 = vmatprep.subr.bf16.mxu0 0
    %1122 = vmatpush1.bf16.msra.mxu0 0
    %1123 = vmatprep.subr.bf16.mxu0 0
    %1124 = vmatpush1.bf16.msra.mxu0 0
    %1125 = vmatprep.subr.bf16.mxu0 0
    %1126 = vmatpush1.bf16.msra.mxu0 0
    %1127 = vmatprep.subr.bf16.mxu0 0
    %1128 = vmatpush1.bf16.msra.mxu0 0
    %1129 = vmatprep.subr.bf16.mxu0 0
    %1130 = vmatpush1.bf16.msra.mxu0 0
    %1131 = vmatprep.subr.bf16.mxu0 0
    %1132 = vmatpush1.bf16.msra.mxu0 0
    %1133 = vmatprep.subr.bf16.mxu0 0
    %1134 = vmatpush1.bf16.msra.mxu0 0
    %1135 = vmatprep.subr.bf16.mxu0 0
    %1136 = vmatpush1.bf16.msra.mxu0 0
    %1137 = vmatprep.subr.bf16.mxu0 0
    %1138 = vmatpush1.bf16.msra.mxu0 0
    %1139 = vmatprep.subr.bf16.mxu0 0
    %1140 = vmatpush1.bf16.msra.mxu0 0
    %1141 = vmatprep.subr.bf16.mxu0 0
    %1142 = vmatpush1.bf16.msra.mxu0 0
    %1143 = vmatprep.subr.bf16.mxu0 0
    %1144 = vmatpush1.bf16.msra.mxu0 0
    %1145 = vmatprep.subr.bf16.mxu0 0
    %1146 = vmatpush1.bf16.msra.mxu0 0
    %1147 = vmatprep.subr.bf16.mxu0 0
    %1148 = vmatpush1.bf16.msra.mxu0 0
    %1149 = vmatprep.mubr.bf16.mxu0 0
    %1150 = vmatmul.mubr.bf16.gmra.mrb[0].mxu0 %v1112
    %v1151 = vpop.f32.mrb[0].mxu0
    %v1152 = vadd.f32 0.0, %v1151
    %v1153 = vpop.f32.mrb[0].mxu0
    %v1154 = vpop.f32.mrb[0].mxu0
    %v1155 = vpop.f32.mrb[0].mxu0
    %1156 = vdwg.mxu0
    %1159 = vrot.lane.b32.xlu0 %v660, 8
    %v1160 = vpop.permute.xlu0 %1159
    %1161 = vrot.lane.b32.xlu0 %v708, 8
    %v1162 = vpop.permute.xlu0 %1161
    %1167 = vrot.lane.b32.xlu0 %v882, 16
    %v1168 = vpop.permute.xlu0 %1167
    %1169 = vrot.lane.b32.xlu0 %v930, 16
    %v1170 = vpop.permute.xlu0 %1169
    %1175 = vrot.lane.b32.xlu0 %v1104, 24
    %v1176 = vpop.permute.xlu0 %1175
    %1177 = vrot.lane.b32.xlu0 %v1152, 24
    %v1178 = vpop.permute.xlu0 %1177
    %v1181 = vsel %vm272, %v438, %v1160
    %v1182 = vsel %vm272, %v486, %v1162
    %vm1183 = vcmask 130048
    %v1184 = vsel %vm1183, %v1181, %v1168
    %v1185 = vsel %vm1183, %v1182, %v1170
    %vm1186 = vcmask 195584
    %v1187 = vsel %vm1186, %v1184, %v1176
    %v1188 = vsel %vm1186, %v1185, %v1178
    %v1189 = vpack.c.bf16 %v1188, %v1187
    %v1190 = vld [vmem:[%s7] sm:$0xf]
    %v1191 = vld [vmem:[%s7 + $0x4] sm:$0xf]
    %v1192 = vld [vmem:[%s7 + $0x8] sm:$0xf]
    %v1193 = vld [vmem:[%s7 + $0xc] sm:$0xf]
    %v1194 = vld [vmem:[%s8] sm:$0x1]
    %v1196 = vlaneseq
    %v1197 = vshrl.u32 %v1196, 7
    %v1198 = vsub.s32 0, %v1197
    %v1199 = vrot.slane %v1194, %v1198
    %v1205 = vunpack.c.l.b16 %v1190
    %v1206 = vunpack.c.l.b16 %v1191
    %v1207 = vunpack.c.l.b16 %v1192
    %v1208 = vunpack.c.l.b16 %v1193
    %v1209 = vpack.c.b16 %v1206, %v1205
    %v1210 = vpack.c.b16 %v1208, %v1207
    %v1214 = vsel %vm155, %v1189, 0
    %1216 = vmatprep.subr.bf16.mxu0 0
    %1217 = vmatpush1.bf16.msra.mxu0 %v1209
    %1218 = vmatprep.subr.bf16.mxu0 0
    %1219 = vmatpush1.bf16.msra.mxu0 %v1210
    %1220 = vmatprep.subr.bf16.mxu0 0
    %1221 = vmatpush1.bf16.msra.mxu0 0
    %1222 = vmatprep.subr.bf16.mxu0 0
    %1223 = vmatpush1.bf16.msra.mxu0 0
    %1224 = vmatprep.subr.bf16.mxu0 0
    %1225 = vmatpush1.bf16.msra.mxu0 0
    %1226 = vmatprep.subr.bf16.mxu0 0
    %1227 = vmatpush1.bf16.msra.mxu0 0
    %1228 = vmatprep.subr.bf16.mxu0 0
    %1229 = vmatpush1.bf16.msra.mxu0 0
    %1230 = vmatprep.subr.bf16.mxu0 0
    %1231 = vmatpush1.bf16.msra.mxu0 0
    %1232 = vmatprep.subr.bf16.mxu0 0
    %1233 = vmatpush1.bf16.msra.mxu0 0
    %1234 = vmatprep.subr.bf16.mxu0 0
    %1235 = vmatpush1.bf16.msra.mxu0 0
    %1236 = vmatprep.subr.bf16.mxu0 0
    %1237 = vmatpush1.bf16.msra.mxu0 0
    %1238 = vmatprep.subr.bf16.mxu0 0
    %1239 = vmatpush1.bf16.msra.mxu0 0
    %1240 = vmatprep.subr.bf16.mxu0 0
    %1241 = vmatpush1.bf16.msra.mxu0 0
    %1242 = vmatprep.subr.bf16.mxu0 0
    %1243 = vmatpush1.bf16.msra.mxu0 0
    %1244 = vmatprep.subr.bf16.mxu0 0
    %1245 = vmatpush1.bf16.msra.mxu0 0
    %1246 = vmatprep.subr.bf16.mxu0 0
    %1247 = vmatpush1.bf16.msra.mxu0 0
    %1248 = vmatprep.mubr.bf16.mxu0 0
    %1249 = vmatmul.mubr.bf16.gmra.mrb[0].mxu0 %v1214
    %v1250 = vpop.f32.mrb[0].mxu0
    %v1251 = vadd.f32 %v1199, %v1250
    %v1252 = vpop.f32.mrb[0].mxu0
    %v1253 = vpop.f32.mrb[0].mxu0
    %v1254 = vadd.f32 %v1199, %v1253
    %v1255 = vpop.f32.mrb[0].mxu0
    %1256 = vdwg.mxu0
    %v1257 = vadd.f32 %v197, %v1251
    %v1258 = vadd.f32 %v198, %v1254
    %v1259 = vld [vmem:[%s9] sm:$0x1]
    %v1260 = vld [vmem:[%s10] sm:$0x1]
    %v1261 = vsel %vm155, %v1257, 0.0
    %1262 = vadd.xlane.f32.xlu0 %v1261
    %v1263 = vpop.xlane.xlu0 %1262
    %v1264 = vsel %vm155, %v1258, 0.0
    %1265 = vadd.xlane.f32.xlu0 %v1264
    %v1266 = vpop.xlane.xlu0 %1265
    %v1267 = vmul.f32 %v1263, %v162
    %v1268 = vmul.f32 %v1266, %v162
    %v1269 = vsub.f32 %v1257, %v1267
    %v1270 = vsub.f32 %v1258, %v1268
    %v1271 = vmul.f32 %v1269, %v1269
    %v1272 = vmul.f32 %v1270, %v1270
    %v1273 = vsel %vm155, %v1271, 0.0
    %1274 = vadd.xlane.f32.xlu0 %v1273
    %v1275 = vpop.xlane.xlu0 %1274
    %v1276 = vsel %vm155, %v1272, 0.0
    %1277 = vadd.xlane.f32.xlu0 %v1276
    %v1278 = vpop.xlane.xlu0 %1277
    %v1279 = vmul.f32 %v1275, %v162
    %v1280 = vmul.f32 %v1278, %v162
    %v1281 = vadd.f32 %v1279, 1e-12
    %v1282 = vadd.f32 %v1280, 1e-12
    %v1283 = vrsqrt.pop %v1281
    %v1284 = vrsqrt.pop %v1282
    %v1285 = vmul.f32 %v1269, %v1283
    %v1286 = vmul.f32 %v1270, %v1284
    %v1288 = vlaneseq
    %v1289 = vshrl.u32 %v1288, 7
    %v1290 = vsub.s32 0, %v1289
    %v1291 = vrot.slane %v1259, %v1290
    %v1293 = vmul.f32 %v1285, %v1291
    %v1294 = vmul.f32 %v1286, %v1291
    %v1296 = vlaneseq
    %v1297 = vshrl.u32 %v1296, 7
    %v1298 = vsub.s32 0, %v1297
    %v1299 = vrot.slane %v1260, %v1298
    %v1301 = vadd.f32 %v1293, %v1299
    %v1302 = vadd.f32 %v1294, %v1299
    %v1303 = vpack.c.bf16 %v1302, %v1301
    %v1304 = vld [vmem:[%s11] sm:$0xf]
    %v1305 = vld [vmem:[%s11 + $0x4] sm:$0xf]
    %v1306 = vld [vmem:[%s11 + $0x8] sm:$0xf]
    %v1307 = vld [vmem:[%s11 + $0xc] sm:$0xf]
    %v1308 = vld [vmem:[%s12] sm:$0x1]
    %v1310 = vlaneseq
    %v1311 = vshrl.u32 %v1310, 7
    %v1312 = vsub.s32 0, %v1311
    %v1313 = vrot.slane %v1308, %v1312
    %v1319 = vunpack.c.l.b16 %v1304
    %v1320 = vunpack.c.l.b16 %v1305
    %v1321 = vunpack.c.l.b16 %v1306
    %v1322 = vunpack.c.l.b16 %v1307
    %v1323 = vpack.c.b16 %v1320, %v1319
    %v1324 = vpack.c.b16 %v1322, %v1321
    %v1328 = vsel %vm155, %v1303, 0
    %1330 = vmatprep.subr.bf16.mxu0 0
    %1331 = vmatpush1.bf16.msra.mxu0 %v1323
    %1332 = vmatprep.subr.bf16.mxu0 0
    %1333 = vmatpush1.bf16.msra.mxu0 %v1324
    %1334 = vmatprep.subr.bf16.mxu0 0
    %1335 = vmatpush1.bf16.msra.mxu0 0
    %1336 = vmatprep.subr.bf16.mxu0 0
    %1337 = vmatpush1.bf16.msra.mxu0 0
    %1338 = vmatprep.subr.bf16.mxu0 0
    %1339 = vmatpush1.bf16.msra.mxu0 0
    %1340 = vmatprep.subr.bf16.mxu0 0
    %1341 = vmatpush1.bf16.msra.mxu0 0
    %1342 = vmatprep.subr.bf16.mxu0 0
    %1343 = vmatpush1.bf16.msra.mxu0 0
    %1344 = vmatprep.subr.bf16.mxu0 0
    %1345 = vmatpush1.bf16.msra.mxu0 0
    %1346 = vmatprep.subr.bf16.mxu0 0
    %1347 = vmatpush1.bf16.msra.mxu0 0
    %1348 = vmatprep.subr.bf16.mxu0 0
    %1349 = vmatpush1.bf16.msra.mxu0 0
    %1350 = vmatprep.subr.bf16.mxu0 0
    %1351 = vmatpush1.bf16.msra.mxu0 0
    %1352 = vmatprep.subr.bf16.mxu0 0
    %1353 = vmatpush1.bf16.msra.mxu0 0
    %1354 = vmatprep.subr.bf16.mxu0 0
    %1355 = vmatpush1.bf16.msra.mxu0 0
    %1356 = vmatprep.subr.bf16.mxu0 0
    %1357 = vmatpush1.bf16.msra.mxu0 0
    %1358 = vmatprep.subr.bf16.mxu0 0
    %1359 = vmatpush1.bf16.msra.mxu0 0
    %1360 = vmatprep.subr.bf16.mxu0 0
    %1361 = vmatpush1.bf16.msra.mxu0 0
    %1362 = vmatprep.mubr.bf16.mxu0 0
    %1363 = vmatmul.mubr.bf16.gmra.mrb[0].mxu0 %v1328
    %v1364 = vpop.f32.mrb[0].mxu0
    %v1365 = vadd.f32 %v1313, %v1364
    %v1366 = vpop.f32.mrb[0].mxu0
    %v1367 = vpop.f32.mrb[0].mxu0
    %v1368 = vadd.f32 %v1313, %v1367
    %v1369 = vpop.f32.mrb[0].mxu0
    %1370 = vdwg.mxu0
    %v1371 = vmul.f32 %v1365, 0.5
    %v1372 = vmul.f32 %v1368, 0.5
    %v1373 = vmul.f32 %v1365, 0.044715
    %v1374 = vmul.f32 %v1368, 0.044715
    %v1375 = vmul.f32 %v1373, %v1365
    %v1376 = vmul.f32 %v1374, %v1368
    %v1377 = vmul.f32 %v1375, %v1365
    %v1378 = vmul.f32 %v1376, %v1368
    %v1379 = vadd.f32 %v1365, %v1377
    %v1380 = vadd.f32 %v1368, %v1378
    %v1381 = vmul.f32 %v1379, 0.7978846
    %v1382 = vmul.f32 %v1380, 0.7978846
    %v1383 = vtanh.pop %v1381
    %v1384 = vtanh.pop %v1382
    %v1385 = vadd.f32 %v1383, 1.0
    %v1386 = vadd.f32 %v1384, 1.0
    %v1387 = vmul.f32 %v1371, %v1385
    %v1388 = vmul.f32 %v1372, %v1386
    %v1389 = vpack.c.bf16 %v1388, %v1387
    %v1390 = vld [vmem:[%s13] sm:$0xf]
    %v1391 = vld [vmem:[%s13 + $0x4] sm:$0xf]
    %v1392 = vld [vmem:[%s13 + $0x8] sm:$0xf]
    %v1393 = vld [vmem:[%s13 + $0xc] sm:$0xf]
    %v1394 = vld [vmem:[%s13 + $0x10] sm:$0xf]
    %v1395 = vld [vmem:[%s13 + $0x14] sm:$0xf]
    %v1396 = vld [vmem:[%s13 + $0x18] sm:$0xf]
    %v1397 = vld [vmem:[%s13 + $0x1c] sm:$0xf]
    %v1398 = vld [vmem:[%s14] sm:$0x1]
    %v1400 = vlaneseq
    %v1401 = vshrl.u32 %v1400, 7
    %v1402 = vsub.s32 0, %v1401
    %v1403 = vrot.slane %v1398, %v1402
    %v1413 = vunpack.c.l.b16 %v1390
    %v1414 = vunpack.c.l.b16 %v1391
    %v1415 = vunpack.c.l.b16 %v1392
    %v1416 = vunpack.c.l.b16 %v1393
    %v1417 = vunpack.c.l.b16 %v1394
    %v1418 = vunpack.c.l.b16 %v1395
    %v1419 = vunpack.c.l.b16 %v1396
    %v1420 = vunpack.c.l.b16 %v1397
    %v1421 = vpack.c.b16 %v1414, %v1413
    %v1422 = vpack.c.b16 %v1416, %v1415
    %v1423 = vpack.c.b16 %v1418, %v1417
    %v1424 = vpack.c.b16 %v1420, %v1419
    %v1430 = vsel %vm105, %v1389, 0
    %1432 = vmatprep.subr.bf16.mxu0 0
    %1433 = vmatpush1.bf16.msra.mxu0 %v1421
    %1434 = vmatprep.subr.bf16.mxu0 0
    %1435 = vmatpush1.bf16.msra.mxu0 %v1422
    %1436 = vmatprep.subr.bf16.mxu0 0
    %1437 = vmatpush1.bf16.msra.mxu0 %v1423
    %1438 = vmatprep.subr.bf16.mxu0 0
    %1439 = vmatpush1.bf16.msra.mxu0 %v1424
    %1440 = vmatprep.subr.bf16.mxu0 0
    %1441 = vmatpush1.bf16.msra.mxu0 0
    %1442 = vmatprep.subr.bf16.mxu0 0
    %1443 = vmatpush1.bf16.msra.mxu0 0
    %1444 = vmatprep.subr.bf16.mxu0 0
    %1445 = vmatpush1.bf16.msra.mxu0 0
    %1446 = vmatprep.subr.bf16.mxu0 0
    %1447 = vmatpush1.bf16.msra.mxu0 0
    %1448 = vmatprep.subr.bf16.mxu0 0
    %1449 = vmatpush1.bf16.msra.mxu0 0
    %1450 = vmatprep.subr.bf16.mxu0 0
    %1451 = vmatpush1.bf16.msra.mxu0 0
    %1452 = vmatprep.subr.bf16.mxu0 0
    %1453 = vmatpush1.bf16.msra.mxu0 0
    %1454 = vmatprep.subr.bf16.mxu0 0
    %1455 = vmatpush1.bf16.msra.mxu0 0
    %1456 = vmatprep.subr.bf16.mxu0 0
    %1457 = vmatpush1.bf16.msra.mxu0 0
    %1458 = vmatprep.subr.bf16.mxu0 0
    %1459 = vmatpush1.bf16.msra.mxu0 0
    %1460 = vmatprep.subr.bf16.mxu0 0
    %1461 = vmatpush1.bf16.msra.mxu0 0
    %1462 = vmatprep.subr.bf16.mxu0 0
    %1463 = vmatpush1.bf16.msra.mxu0 0
    %1464 = vmatprep.mubr.bf16.mxu0 0
    %1465 = vmatmul.mubr.bf16.gmra.mrb[0].mxu0 %v1430
    %v1466 = vpop.f32.mrb[0].mxu0
    %v1467 = vadd.f32 %v1403, %v1466
    %v1468 = vpop.f32.mrb[0].mxu0
    %v1469 = vpop.f32.mrb[0].mxu0
    %v1470 = vadd.f32 %v1403, %v1469
    %v1471 = vpop.f32.mrb[0].mxu0
    %1472 = vdwg.mxu0
    %v1473 = vadd.f32 %v1301, %v1467
    %v1474 = vadd.f32 %v1302, %v1470
    %v1475 = vld [vmem:[%s15] sm:$0x1]
    %v1476 = vld [vmem:[%s16] sm:$0x1]
    %v1477 = vsel %vm155, %v1473, 0.0
    %1478 = vadd.xlane.f32.xlu0 %v1477
    %v1479 = vpop.xlane.xlu0 %1478
    %v1480 = vsel %vm155, %v1474, 0.0
    %1481 = vadd.xlane.f32.xlu0 %v1480
    %v1482 = vpop.xlane.xlu0 %1481
    %v1483 = vmul.f32 %v1479, %v162
    %v1484 = vmul.f32 %v1482, %v162
    %v1485 = vsub.f32 %v1473, %v1483
    %v1486 = vsub.f32 %v1474, %v1484
    %v1487 = vmul.f32 %v1485, %v1485
    %v1488 = vmul.f32 %v1486, %v1486
    %v1489 = vsel %vm155, %v1487, 0.0
    %1490 = vadd.xlane.f32.xlu0 %v1489
    %v1491 = vpop.xlane.xlu0 %1490
    %v1492 = vsel %vm155, %v1488, 0.0
    %1493 = vadd.xlane.f32.xlu0 %v1492
    %v1494 = vpop.xlane.xlu0 %1493
    %v1495 = vmul.f32 %v1491, %v162
    %v1496 = vmul.f32 %v1494, %v162
    %v1497 = vadd.f32 %v1495, 1e-12
    %v1498 = vadd.f32 %v1496, 1e-12
    %v1499 = vrsqrt.pop %v1497
    %v1500 = vrsqrt.pop %v1498
    %v1501 = vmul.f32 %v1485, %v1499
    %v1502 = vmul.f32 %v1486, %v1500
    %v1504 = vlaneseq
    %v1505 = vshrl.u32 %v1504, 7
    %v1506 = vsub.s32 0, %v1505
    %v1507 = vrot.slane %v1475, %v1506
    %v1509 = vmul.f32 %v1501, %v1507
    %v1510 = vmul.f32 %v1502, %v1507
    %v1512 = vlaneseq
    %v1513 = vshrl.u32 %v1512, 7
    %v1514 = vsub.s32 0, %v1513
    %v1515 = vrot.slane %v1476, %v1514
    %v1517 = vadd.f32 %v1509, %v1515
    %v1518 = vadd.f32 %v1510, %v1515
    %v1519 = vpack.c.bf16 %v1518, %v1517
    %s1520 = scalar_lea.vmem %s5, 16
    %v1521 = vld [vmem:[%s1520] sm:$0xf]
    %v1522 = vld [vmem:[%s1520 + $0x4] sm:$0xf]
    %v1523 = vld [vmem:[%s1520 + $0x8] sm:$0xf]
    %v1524 = vld [vmem:[%s1520 + $0xc] sm:$0xf]
    %s1525 = scalar_lea.vmem %s6, 1
    %v1526 = vld [vmem:[%s1525] sm:$0x1]
    %v1528 = vlaneseq
    %v1529 = vshrl.u32 %v1528, 7
    %v1530 = vsub.s32 0, %v1529
    %v1531 = vrot.slane %v1526, %v1530
    %v1537 = vunpack.c.l.b16 %v1521
    %v1538 = vunpack.c.l.b16 %v1522
    %v1539 = vunpack.c.l.b16 %v1523
    %v1540 = vunpack.c.l.b16 %v1524
    %v1541 = vpack.c.b16 %v1538, %v1537
    %v1542 = vpack.c.b16 %v1540, %v1539
    %v1546 = vsel %vm155, %v1519, 0
    %1548 = vmatprep.subr.bf16.mxu0 0
    %1549 = vmatpush1.bf16.msra.mxu0 %v1541
    %1550 = vmatprep.subr.bf16.mxu0 0
    %1551 = vmatpush1.bf16.msra.mxu0 %v1542
    %1552 = vmatprep.subr.bf16.mxu0 0
    %1553 = vmatpush1.bf16.msra.mxu0 0
    %1554 = vmatprep.subr.bf16.mxu0 0
    %1555 = vmatpush1.bf16.msra.mxu0 0
    %1556 = vmatprep.subr.bf16.mxu0 0
    %1557 = vmatpush1.bf16.msra.mxu0 0
    %1558 = vmatprep.subr.bf16.mxu0 0
    %1559 = vmatpush1.bf16.msra.mxu0 0
    %1560 = vmatprep.subr.bf16.mxu0 0
    %1561 = vmatpush1.bf16.msra.mxu0 0
    %1562 = vmatprep.subr.bf16.mxu0 0
    %1563 = vmatpush1.bf16.msra.mxu0 0
    %1564 = vmatprep.subr.bf16.mxu0 0
    %1565 = vmatpush1.bf16.msra.mxu0 0
    %1566 = vmatprep.subr.bf16.mxu0 0
    %1567 = vmatpush1.bf16.msra.mxu0 0
    %1568 = vmatprep.subr.bf16.mxu0 0
    %1569 = vmatpush1.bf16.msra.mxu0 0
    %1570 = vmatprep.subr.bf16.mxu0 0
    %1571 = vmatpush1.bf16.msra.mxu0 0
    %1572 = vmatprep.subr.bf16.mxu0 0
    %1573 = vmatpush1.bf16.msra.mxu0 0
    %1574 = vmatprep.subr.bf16.mxu0 0
    %1575 = vmatpush1.bf16.msra.mxu0 0
    %1576 = vmatprep.subr.bf16.mxu0 0
    %1577 = vmatpush1.bf16.msra.mxu0 0
    %1578 = vmatprep.subr.bf16.mxu0 0
    %1579 = vmatpush1.bf16.msra.mxu0 0
    %1580 = vmatprep.mubr.bf16.mxu0 0
    %1581 = vmatmul.mubr.bf16.gmra.mrb[0].mxu0 %v1546
    %v1582 = vpop.f32.mrb[0].mxu0
    %v1583 = vadd.f32 %v1531, %v1582
    %v1584 = vpop.f32.mrb[0].mxu0
    %v1585 = vpop.f32.mrb[0].mxu0
    %v1586 = vadd.f32 %v1531, %v1585
    %v1587 = vpop.f32.mrb[0].mxu0
    %1588 = vdwg.mxu0
    %v1589 = vpack.c.bf16 %v1583, %v1583
    %v1590 = vpack.c.bf16 %v1586, %v1586
    %1592 = vrot.lane.b32.xlu0 %v1589, 96
    %v1593 = vpop.permute.xlu0 %1592
    %v1595 = vsel %vm272, %v1589, 0
    %v1598 = vsel %vm272, %v1593, 0
    %1600 = vmatprep.subr.bf16.mxu0 0
    %1601 = vmatpush1.bf16.xpose.msra.mxu0 %v1598
    %1602 = vmatprep.subr.bf16.mxu0 0
    %1603 = vmatpush1.bf16.xpose.msra.mxu0 0
    %1604 = vmatprep.subr.bf16.mxu0 0
    %1605 = vmatpush1.bf16.xpose.msra.mxu0 0
    %1606 = vmatprep.subr.bf16.mxu0 0
    %1607 = vmatpush1.bf16.xpose.msra.mxu0 0
    %1608 = vmatprep.subr.bf16.mxu0 0
    %1609 = vmatpush1.bf16.xpose.msra.mxu0 0
    %1610 = vmatprep.subr.bf16.mxu0 0
    %1611 = vmatpush1.bf16.xpose.msra.mxu0 0
    %1612 = vmatprep.subr.bf16.mxu0 0
    %1613 = vmatpush1.bf16.xpose.msra.mxu0 0
    %1614 = vmatprep.subr.bf16.mxu0 0
    %1615 = vmatpush1.bf16.xpose.msra.mxu0 0
    %1616 = vmatprep.subr.bf16.mxu0 0
    %1617 = vmatpush1.bf16.xpose.msra.mxu0 0
    %1618 = vmatprep.subr.bf16.mxu0 0
    %1619 = vmatpush1.bf16.xpose.msra.mxu0 0
    %1620 = vmatprep.subr.bf16.mxu0 0
    %1621 = vmatpush1.bf16.xpose.msra.mxu0 0
    %1622 = vmatprep.subr.bf16.mxu0 0
    %1623 = vmatpush1.bf16.xpose.msra.mxu0 0
    %1624 = vmatprep.subr.bf16.mxu0 0
    %1625 = vmatpush1.bf16.xpose.msra.mxu0 0
    %1626 = vmatprep.subr.bf16.mxu0 0
    %1627 = vmatpush1.bf16.xpose.msra.mxu0 0
    %1628 = vmatprep.subr.bf16.mxu0 0
    %1629 = vmatpush1.bf16.xpose.msra.mxu0 0
    %1630 = vmatprep.subr.bf16.mxu0 0
    %1631 = vmatpush1.bf16.xpose.msra.mxu0 0
    %1632 = vmatprep.mubr.bf16.mxu0 0
    %1633 = vmatmul.mubr.bf16.gmra.mrb[0].mxu0 %v1595
    %v1634 = vpop.f32.mrb[0].mxu0
    %v1635 = vadd.f32 0.0, %v1634
    %v1636 = vpop.f32.mrb[0].mxu0
    %v1637 = vpop.f32.mrb[0].mxu0
    %v1638 = vpop.f32.mrb[0].mxu0
    %1639 = vdwg.mxu0
    %1641 = vrot.lane.b32.xlu0 %v1590, 96
    %v1642 = vpop.permute.xlu0 %1641
    %v1644 = vsel %vm272, %v1590, 0
    %v1647 = vsel %vm272, %v1642, 0
    %1649 = vmatprep.subr.bf16.mxu0 0
    %1650 = vmatpush1.bf16.xpose.msra.mxu0 %v1647
    %1651 = vmatprep.subr.bf16.mxu0 0
    %1652 = vmatpush1.bf16.xpose.msra.mxu0 0
    %1653 = vmatprep.subr.bf16.mxu0 0
    %1654 = vmatpush1.bf16.xpose.msra.mxu0 0
    %1655 = vmatprep.subr.bf16.mxu0 0
    %1656 = vmatpush1.bf16.xpose.msra.mxu0 0
    %1657 = vmatprep.subr.bf16.mxu0 0
    %1658 = vmatpush1.bf16.xpose.msra.mxu0 0
    %1659 = vmatprep.subr.bf16.mxu0 0
    %1660 = vmatpush1.bf16.xpose.msra.mxu0 0
    %1661 = vmatprep.subr.bf16.mxu0 0
    %1662 = vmatpush1.bf16.xpose.msra.mxu0 0
    %1663 = vmatprep.subr.bf16.mxu0 0
    %1664 = vmatpush1.bf16.xpose.msra.mxu0 0
    %1665 = vmatprep.subr.bf16.mxu0 0
    %1666 = vmatpush1.bf16.xpose.msra.mxu0 0
    %1667 = vmatprep.subr.bf16.mxu0 0
    %1668 = vmatpush1.bf16.xpose.msra.mxu0 0
    %1669 = vmatprep.subr.bf16.mxu0 0
    %1670 = vmatpush1.bf16.xpose.msra.mxu0 0
    %1671 = vmatprep.subr.bf16.mxu0 0
    %1672 = vmatpush1.bf16.xpose.msra.mxu0 0
    %1673 = vmatprep.subr.bf16.mxu0 0
    %1674 = vmatpush1.bf16.xpose.msra.mxu0 0
    %1675 = vmatprep.subr.bf16.mxu0 0
    %1676 = vmatpush1.bf16.xpose.msra.mxu0 0
    %1677 = vmatprep.subr.bf16.mxu0 0
    %1678 = vmatpush1.bf16.xpose.msra.mxu0 0
    %1679 = vmatprep.subr.bf16.mxu0 0
    %1680 = vmatpush1.bf16.xpose.msra.mxu0 0
    %1681 = vmatprep.mubr.bf16.mxu0 0
    %1682 = vmatmul.mubr.bf16.gmra.mrb[0].mxu0 %v1644
    %v1683 = vpop.f32.mrb[0].mxu0
    %v1684 = vadd.f32 0.0, %v1683
    %v1685 = vpop.f32.mrb[0].mxu0
    %v1686 = vpop.f32.mrb[0].mxu0
    %v1687 = vpop.f32.mrb[0].mxu0
    %1688 = vdwg.mxu0
    %v1689 = vmul.f32 %v1635, 0.35355338
    %v1690 = vmul.f32 %v1684, 0.35355338
    %vm1691 = vcmask 57344
    %v1692 = vsel %vm1691, %v1689, -inf
    %1693 = vmax.xlane.f32.xlu0 %v1692
    %v1694 = vpop.xlane.xlu0 %1693
    %v1695 = vsel %vm1691, %v1690, -inf
    %1696 = vmax.xlane.f32.xlu0 %v1695
    %v1697 = vpop.xlane.xlu0 %1696
    %v1698 = vsub.f32 %v1689, %v1694
    %v1699 = vsub.f32 %v1690, %v1697
    %v1700 = vmul.f32 %v1698, 1.442695
    %v1701 = vpow.pop %v1700
    %v1702 = vmul.f32 %v1699, 1.442695
    %v1703 = vpow.pop %v1702
    %v1704 = vsel %vm1691, %v1701, 0.0
    %1705 = vadd.xlane.f32.xlu0 %v1704
    %v1706 = vpop.xlane.xlu0 %1705
    %v1707 = vsel %vm1691, %v1703, 0.0
    %1708 = vadd.xlane.f32.xlu0 %v1707
    %v1709 = vpop.xlane.xlu0 %1708
    %v1710 = vrcp.pop %v1706
    %v1711 = vrcp.pop %v1709
    %v1712 = vmul.f32 %v1701, %v1710
    %v1713 = vmul.f32 %v1703, %v1711
    %v1714 = vpack.c.bf16 %v1712, %v1712
    %v1715 = vpack.c.bf16 %v1713, %v1713
    %1716 = vrot.lane.b32.xlu0 %v1589, 64
    %v1717 = vpop.permute.xlu0 %1716
    %v1719 = vsel %vm272, %v1714, 0
    %v1722 = vsel %vm399, %v1717, 0
    %1724 = vmatprep.subr.bf16.mxu0 0
    %1725 = vmatpush1.bf16.msra.mxu0 %v1722
    %1726 = vmatprep.subr.bf16.mxu0 0
    %1727 = vmatpush1.bf16.msra.mxu0 0
    %1728 = vmatprep.subr.bf16.mxu0 0
    %1729 = vmatpush1.bf16.msra.mxu0 0
    %1730 = vmatprep.subr.bf16.mxu0 0
    %1731 = vmatpush1.bf16.msra.mxu0 0
    %1732 = vmatprep.subr.bf16.mxu0 0
    %1733 = vmatpush1.bf16.msra.mxu0 0
    %1734 = vmatprep.subr.bf16.mxu0 0
    %1735 = vmatpush1.bf16.msra.mxu0 0
    %1736 = vmatprep.subr.bf16.mxu0 0
    %1737 = vmatpush1.bf16.msra.mxu0 0
    %1738 = vmatprep.subr.bf16.mxu0 0
    %1739 = vmatpush1.bf16.msra.mxu0 0
    %1740 = vmatprep.subr.bf16.mxu0 0
    %1741 = vmatpush1.bf16.msra.mxu0 0
    %1742 = vmatprep.subr.bf16.mxu0 0
    %1743 = vmatpush1.bf16.msra.mxu0 0
    %1744 = vmatprep.subr.bf16.mxu0 0
    %1745 = vmatpush1.bf16.msra.mxu0 0
    %1746 = vmatprep.subr.bf16.mxu0 0
    %1747 = vmatpush1.bf16.msra.mxu0 0
    %1748 = vmatprep.subr.bf16.mxu0 0
    %1749 = vmatpush1.bf16.msra.mxu0 0
    %1750 = vmatprep.subr.bf16.mxu0 0
    %1751 = vmatpush1.bf16.msra.mxu0 0
    %1752 = vmatprep.subr.bf16.mxu0 0
    %1753 = vmatpush1.bf16.msra.mxu0 0
    %1754 = vmatprep.subr.bf16.mxu0 0
    %1755 = vmatpush1.bf16.msra.mxu0 0
    %1756 = vmatprep.mubr.bf16.mxu0 0
    %1757 = vmatmul.mubr.bf16.gmra.mrb[0].mxu0 %v1719
    %v1758 = vpop.f32.mrb[0].mxu0
    %v1759 = vadd.f32 0.0, %v1758
    %v1760 = vpop.f32.mrb[0].mxu0
    %v1761 = vpop.f32.mrb[0].mxu0
    %v1762 = vpop.f32.mrb[0].mxu0
    %1763 = vdwg.mxu0
    %1764 = vrot.lane.b32.xlu0 %v1590, 64
    %v1765 = vpop.permute.xlu0 %1764
    %v1767 = vsel %vm272, %v1715, 0
    %v1770 = vsel %vm399, %v1765, 0
    %1772 = vmatprep.subr.bf16.mxu0 0
    %1773 = vmatpush1.bf16.msra.mxu0 %v1770
    %1774 = vmatprep.subr.bf16.mxu0 0
    %1775 = vmatpush1.bf16.msra.mxu0 0
    %1776 = vmatprep.subr.bf16.mxu0 0
    %1777 = vmatpush1.bf16.msra.mxu0 0
    %1778 = vmatprep.subr.bf16.mxu0 0
    %1779 = vmatpush1.bf16.msra.mxu0 0
    %1780 = vmatprep.subr.bf16.mxu0 0
    %1781 = vmatpush1.bf16.msra.mxu0 0
    %1782 = vmatprep.subr.bf16.mxu0 0
    %1783 = vmatpush1.bf16.msra.mxu0 0
    %1784 = vmatprep.subr.bf16.mxu0 0
    %1785 = vmatpush1.bf16.msra.mxu0 0
    %1786 = vmatprep.subr.bf16.mxu0 0
    %1787 = vmatpush1.bf16.msra.mxu0 0
    %1788 = vmatprep.subr.bf16.mxu0 0
    %1789 = vmatpush1.bf16.msra.mxu0 0
    %1790 = vmatprep.subr.bf16.mxu0 0
    %1791 = vmatpush1.bf16.msra.mxu0 0
    %1792 = vmatprep.subr.bf16.mxu0 0
    %1793 = vmatpush1.bf16.msra.mxu0 0
    %1794 = vmatprep.subr.bf16.mxu0 0
    %1795 = vmatpush1.bf16.msra.mxu0 0
    %1796 = vmatprep.subr.bf16.mxu0 0
    %1797 = vmatpush1.bf16.msra.mxu0 0
    %1798 = vmatprep.subr.bf16.mxu0 0
    %1799 = vmatpush1.bf16.msra.mxu0 0
    %1800 = vmatprep.subr.bf16.mxu0 0
    %1801 = vmatpush1.bf16.msra.mxu0 0
    %1802 = vmatprep.subr.bf16.mxu0 0
    %1803 = vmatpush1.bf16.msra.mxu0 0
    %1804 = vmatprep.mubr.bf16.mxu0 0
    %1805 = vmatmul.mubr.bf16.gmra.mrb[0].mxu0 %v1767
    %v1806 = vpop.f32.mrb[0].mxu0
    %v1807 = vadd.f32 0.0, %v1806
    %v1808 = vpop.f32.mrb[0].mxu0
    %v1809 = vpop.f32.mrb[0].mxu0
    %v1810 = vpop.f32.mrb[0].mxu0
    %1811 = vdwg.mxu0
    %1812 = vrot.lane.b32.xlu0 %v1589, 120
    %v1813 = vpop.permute.xlu0 %1812
    %1814 = vrot.lane.b32.xlu0 %v1589, 88
    %v1815 = vpop.permute.xlu0 %1814
    %v1817 = vsel %vm272, %v1813, 0
    %v1820 = vsel %vm272, %v1815, 0
    %1822 = vmatprep.subr.bf16.mxu0 0
    %1823 = vmatpush1.bf16.xpose.msra.mxu0 %v1820
    %1824 = vmatprep.subr.bf16.mxu0 0
    %1825 = vmatpush1.bf16.xpose.msra.mxu0 0
    %1826 = vmatprep.subr.bf16.mxu0 0
    %1827 = vmatpush1.bf16.xpose.msra.mxu0 0
    %1828 = vmatprep.subr.bf16.mxu0 0
    %1829 = vmatpush1.bf16.xpose.msra.mxu0 0
    %1830 = vmatprep.subr.bf16.mxu0 0
    %1831 = vmatpush1.bf16.xpose.msra.mxu0 0
    %1832 = vmatprep.subr.bf16.mxu0 0
    %1833 = vmatpush1.bf16.xpose.msra.mxu0 0
    %1834 = vmatprep.subr.bf16.mxu0 0
    %1835 = vmatpush1.bf16.xpose.msra.mxu0 0
    %1836 = vmatprep.subr.bf16.mxu0 0
    %1837 = vmatpush1.bf16.xpose.msra.mxu0 0
    %1838 = vmatprep.subr.bf16.mxu0 0
    %1839 = vmatpush1.bf16.xpose.msra.mxu0 0
    %1840 = vmatprep.subr.bf16.mxu0 0
    %1841 = vmatpush1.bf16.xpose.msra.mxu0 0
    %1842 = vmatprep.subr.bf16.mxu0 0
    %1843 = vmatpush1.bf16.xpose.msra.mxu0 0
    %1844 = vmatprep.subr.bf16.mxu0 0
    %1845 = vmatpush1.bf16.xpose.msra.mxu0 0
    %1846 = vmatprep.subr.bf16.mxu0 0
    %1847 = vmatpush1.bf16.xpose.msra.mxu0 0
    %1848 = vmatprep.subr.bf16.mxu0 0
    %1849 = vmatpush1.bf16.xpose.msra.mxu0 0
    %1850 = vmatprep.subr.bf16.mxu0 0
    %1851 = vmatpush1.bf16.xpose.msra.mxu0 0
    %1852 = vmatprep.subr.bf16.mxu0 0
    %1853 = vmatpush1.bf16.xpose.msra.mxu0 0
    %1854 = vmatprep.mubr.bf16.mxu0 0
    %1855 = vmatmul.mubr.bf16.gmra.mrb[0].mxu0 %v1817
    %v1856 = vpop.f32.mrb[0].mxu0
    %v1857 = vadd.f32 0.0, %v1856
    %v1858 = vpop.f32.mrb[0].mxu0
    %v1859 = vpop.f32.mrb[0].mxu0
    %v1860 = vpop.f32.mrb[0].mxu0
    %1861 = vdwg.mxu0
    %1862 = vrot.lane.b32.xlu0 %v1590, 120
    %v1863 = vpop.permute.xlu0 %1862
    %1864 = vrot.lane.b32.xlu0 %v1590, 88
    %v1865 = vpop.permute.xlu0 %1864
    %v1867 = vsel %vm272, %v1863, 0
    %v1870 = vsel %vm272, %v1865, 0
    %1872 = vmatprep.subr.bf16.mxu0 0
    %1873 = vmatpush1.bf16.xpose.msra.mxu0 %v1870
    %1874 = vmatprep.subr.bf16.mxu0 0
    %1875 = vmatpush1.bf16.xpose.msra.mxu0 0
    %1876 = vmatprep.subr.bf16.mxu0 0
    %1877 = vmatpush1.bf16.xpose.msra.mxu0 0
    %1878 = vmatprep.subr.bf16.mxu0 0
    %1879 = vmatpush1.bf16.xpose.msra.mxu0 0
    %1880 = vmatprep.subr.bf16.mxu0 0
    %1881 = vmatpush1.bf16.xpose.msra.mxu0 0
    %1882 = vmatprep.subr.bf16.mxu0 0
    %1883 = vmatpush1.bf16.xpose.msra.mxu0 0
    %1884 = vmatprep.subr.bf16.mxu0 0
    %1885 = vmatpush1.bf16.xpose.msra.mxu0 0
    %1886 = vmatprep.subr.bf16.mxu0 0
    %1887 = vmatpush1.bf16.xpose.msra.mxu0 0
    %1888 = vmatprep.subr.bf16.mxu0 0
    %1889 = vmatpush1.bf16.xpose.msra.mxu0 0
    %1890 = vmatprep.subr.bf16.mxu0 0
    %1891 = vmatpush1.bf16.xpose.msra.mxu0 0
    %1892 = vmatprep.subr.bf16.mxu0 0
    %1893 = vmatpush1.bf16.xpose.msra.mxu0 0
    %1894 = vmatprep.subr.bf16.mxu0 0
    %1895 = vmatpush1.bf16.xpose.msra.mxu0 0
    %1896 = vmatprep.subr.bf16.mxu0 0
    %1897 = vmatpush1.bf16.xpose.msra.mxu0 0
    %1898 = vmatprep.subr.bf16.mxu0 0
    %1899 = vmatpush1.bf16.xpose.msra.mxu0 0
    %1900 = vmatprep.subr.bf16.mxu0 0
    %1901 = vmatpush1.bf16.xpose.msra.mxu0 0
    %1902 = vmatprep.subr.bf16.mxu0 0
    %1903 = vmatpush1.bf16.xpose.msra.mxu0 0
    %1904 = vmatprep.mubr.bf16.mxu0 0
    %1905 = vmatmul.mubr.bf16.gmra.mrb[0].mxu0 %v1867
    %v1906 = vpop.f32.mrb[0].mxu0
    %v1907 = vadd.f32 0.0, %v1906
    %v1908 = vpop.f32.mrb[0].mxu0
    %v1909 = vpop.f32.mrb[0].mxu0
    %v1910 = vpop.f32.mrb[0].mxu0
    %1911 = vdwg.mxu0
    %v1912 = vmul.f32 %v1857, 0.35355338
    %v1913 = vmul.f32 %v1907, 0.35355338
    %v1914 = vsel %vm1691, %v1912, -inf
    %1915 = vmax.xlane.f32.xlu0 %v1914
    %v1916 = vpop.xlane.xlu0 %1915
    %v1917 = vsel %vm1691, %v1913, -inf
    %1918 = vmax.xlane.f32.xlu0 %v1917
    %v1919 = vpop.xlane.xlu0 %1918
    %v1920 = vsub.f32 %v1912, %v1916
    %v1921 = vsub.f32 %v1913, %v1919
    %v1922 = vmul.f32 %v1920, 1.442695
    %v1923 = vpow.pop %v1922
    %v1924 = vmul.f32 %v1921, 1.442695
    %v1925 = vpow.pop %v1924
    %v1926 = vsel %vm1691, %v1923, 0.0
    %1927 = vadd.xlane.f32.xlu0 %v1926
    %v1928 = vpop.xlane.xlu0 %1927
    %v1929 = vsel %vm1691, %v1925, 0.0
    %1930 = vadd.xlane.f32.xlu0 %v1929
    %v1931 = vpop.xlane.xlu0 %1930
    %v1932 = vrcp.pop %v1928
    %v1933 = vrcp.pop %v1931
    %v1934 = vmul.f32 %v1923, %v1932
    %v1935 = vmul.f32 %v1925, %v1933
    %v1936 = vpack.c.bf16 %v1934, %v1934
    %v1937 = vpack.c.bf16 %v1935, %v1935
    %1938 = vrot.lane.b32.xlu0 %v1589, 56
    %v1939 = vpop.permute.xlu0 %1938
    %v1941 = vsel %vm272, %v1936, 0
    %v1944 = vsel %vm399, %v1939, 0
    %1946 = vmatprep.subr.bf16.mxu0 0
    %1947 = vmatpush1.bf16.msra.mxu0 %v1944
    %1948 = vmatprep.subr.bf16.mxu0 0
    %1949 = vmatpush1.bf16.msra.mxu0 0
    %1950 = vmatprep.subr.bf16.mxu0 0
    %1951 = vmatpush1.bf16.msra.mxu0 0
    %1952 = vmatprep.subr.bf16.mxu0 0
    %1953 = vmatpush1.bf16.msra.mxu0 0
    %1954 = vmatprep.subr.bf16.mxu0 0
    %1955 = vmatpush1.bf16.msra.mxu0 0
    %1956 = vmatprep.subr.bf16.mxu0 0
    %1957 = vmatpush1.bf16.msra.mxu0 0
    %1958 = vmatprep.subr.bf16.mxu0 0
    %1959 = vmatpush1.bf16.msra.mxu0 0
    %1960 = vmatprep.subr.bf16.mxu0 0
    %1961 = vmatpush1.bf16.msra.mxu0 0
    %1962 = vmatprep.subr.bf16.mxu0 0
    %1963 = vmatpush1.bf16.msra.mxu0 0
    %1964 = vmatprep.subr.bf16.mxu0 0
    %1965 = vmatpush1.bf16.msra.mxu0 0
    %1966 = vmatprep.subr.bf16.mxu0 0
    %1967 = vmatpush1.bf16.msra.mxu0 0
    %1968 = vmatprep.subr.bf16.mxu0 0
    %1969 = vmatpush1.bf16.msra.mxu0 0
    %1970 = vmatprep.subr.bf16.mxu0 0
    %1971 = vmatpush1.bf16.msra.mxu0 0
    %1972 = vmatprep.subr.bf16.mxu0 0
    %1973 = vmatpush1.bf16.msra.mxu0 0
    %1974 = vmatprep.subr.bf16.mxu0 0
    %1975 = vmatpush1.bf16.msra.mxu0 0
    %1976 = vmatprep.subr.bf16.mxu0 0
    %1977 = vmatpush1.bf16.msra.mxu0 0
    %1978 = vmatprep.mubr.bf16.mxu0 0
    %1979 = vmatmul.mubr.bf16.gmra.mrb[0].mxu0 %v1941
    %v1980 = vpop.f32.mrb[0].mxu0
    %v1981 = vadd.f32 0.0, %v1980
    %v1982 = vpop.f32.mrb[0].mxu0
    %v1983 = vpop.f32.mrb[0].mxu0
    %v1984 = vpop.f32.mrb[0].mxu0
    %1985 = vdwg.mxu0
    %1986 = vrot.lane.b32.xlu0 %v1590, 56
    %v1987 = vpop.permute.xlu0 %1986
    %v1989 = vsel %vm272, %v1937, 0
    %v1992 = vsel %vm399, %v1987, 0
    %1994 = vmatprep.subr.bf16.mxu0 0
    %1995 = vmatpush1.bf16.msra.mxu0 %v1992
    %1996 = vmatprep.subr.bf16.mxu0 0
    %1997 = vmatpush1.bf16.msra.mxu0 0
    %1998 = vmatprep.subr.bf16.mxu0 0
    %1999 = vmatpush1.bf16.msra.mxu0 0
    %2000 = vmatprep.subr.bf16.mxu0 0
    %2001 = vmatpush1.bf16.msra.mxu0 0
    %2002 = vmatprep.subr.bf16.mxu0 0
    %2003 = vmatpush1.bf16.msra.mxu0 0
    %2004 = vmatprep.subr.bf16.mxu0 0
    %2005 = vmatpush1.bf16.msra.mxu0 0
    %2006 = vmatprep.subr.bf16.mxu0 0
    %2007 = vmatpush1.bf16.msra.mxu0 0
    %2008 = vmatprep.subr.bf16.mxu0 0
    %2009 = vmatpush1.bf16.msra.mxu0 0
    %2010 = vmatprep.subr.bf16.mxu0 0
    %2011 = vmatpush1.bf16.msra.mxu0 0
    %2012 = vmatprep.subr.bf16.mxu0 0
    %2013 = vmatpush1.bf16.msra.mxu0 0
    %2014 = vmatprep.subr.bf16.mxu0 0
    %2015 = vmatpush1.bf16.msra.mxu0 0
    %2016 = vmatprep.subr.bf16.mxu0 0
    %2017 = vmatpush1.bf16.msra.mxu0 0
    %2018 = vmatprep.subr.bf16.mxu0 0
    %2019 = vmatpush1.bf16.msra.mxu0 0
    %2020 = vmatprep.subr.bf16.mxu0 0
    %2021 = vmatpush1.bf16.msra.mxu0 0
    %2022 = vmatprep.subr.bf16.mxu0 0
    %2023 = vmatpush1.bf16.msra.mxu0 0
    %2024 = vmatprep.subr.bf16.mxu0 0
    %2025 = vmatpush1.bf16.msra.mxu0 0
    %2026 = vmatprep.mubr.bf16.mxu0 0
    %2027 = vmatmul.mubr.bf16.gmra.mrb[0].mxu0 %v1989
    %v2028 = vpop.f32.mrb[0].mxu0
    %v2029 = vadd.f32 0.0, %v2028
    %v2030 = vpop.f32.mrb[0].mxu0
    %v2031 = vpop.f32.mrb[0].mxu0
    %v2032 = vpop.f32.mrb[0].mxu0
    %2033 = vdwg.mxu0
    %2034 = vrot.lane.b32.xlu0 %v1589, 112
    %v2035 = vpop.permute.xlu0 %2034
    %2036 = vrot.lane.b32.xlu0 %v1589, 80
    %v2037 = vpop.permute.xlu0 %2036
    %v2039 = vsel %vm272, %v2035, 0
    %v2042 = vsel %vm272, %v2037, 0
    %2044 = vmatprep.subr.bf16.mxu0 0
    %2045 = vmatpush1.bf16.xpose.msra.mxu0 %v2042
    %2046 = vmatprep.subr.bf16.mxu0 0
    %2047 = vmatpush1.bf16.xpose.msra.mxu0 0
    %2048 = vmatprep.subr.bf16.mxu0 0
    %2049 = vmatpush1.bf16.xpose.msra.mxu0 0
    %2050 = vmatprep.subr.bf16.mxu0 0
    %2051 = vmatpush1.bf16.xpose.msra.mxu0 0
    %2052 = vmatprep.subr.bf16.mxu0 0
    %2053 = vmatpush1.bf16.xpose.msra.mxu0 0
    %2054 = vmatprep.subr.bf16.mxu0 0
    %2055 = vmatpush1.bf16.xpose.msra.mxu0 0
    %2056 = vmatprep.subr.bf16.mxu0 0
    %2057 = vmatpush1.bf16.xpose.msra.mxu0 0
    %2058 = vmatprep.subr.bf16.mxu0 0
    %2059 = vmatpush1.bf16.xpose.msra.mxu0 0
    %2060 = vmatprep.subr.bf16.mxu0 0
    %2061 = vmatpush1.bf16.xpose.msra.mxu0 0
    %2062 = vmatprep.subr.bf16.mxu0 0
    %2063 = vmatpush1.bf16.xpose.msra.mxu0 0
    %2064 = vmatprep.subr.bf16.mxu0 0
    %2065 = vmatpush1.bf16.xpose.msra.mxu0 0
    %2066 = vmatprep.subr.bf16.mxu0 0
    %2067 = vmatpush1.bf16.xpose.msra.mxu0 0
    %2068 = vmatprep.subr.bf16.mxu0 0
    %2069 = vmatpush1.bf16.xpose.msra.mxu0 0
    %2070 = vmatprep.subr.bf16.mxu0 0
    %2071 = vmatpush1.bf16.xpose.msra.mxu0 0
    %2072 = vmatprep.subr.bf16.mxu0 0
    %2073 = vmatpush1.bf16.xpose.msra.mxu0 0
    %2074 = vmatprep.subr.bf16.mxu0 0
    %2075 = vmatpush1.bf16.xpose.msra.mxu0 0
    %2076 = vmatprep.mubr.bf16.mxu0 0
    %2077 = vmatmul.mubr.bf16.gmra.mrb[0].mxu0 %v2039
    %v2078 = vpop.f32.mrb[0].mxu0
    %v2079 = vadd.f32 0.0, %v2078
    %v2080 = vpop.f32.mrb[0].mxu0
    %v2081 = vpop.f32.mrb[0].mxu0
    %v2082 = vpop.f32.mrb[0].mxu0
    %2083 = vdwg.mxu0
    %2084 = vrot.lane.b32.xlu0 %v1590, 112
    %v2085 = vpop.permute.xlu0 %2084
    %2086 = vrot.lane.b32.xlu0 %v1590, 80
    %v2087 = vpop.permute.xlu0 %2086
    %v2089 = vsel %vm272, %v2085, 0
    %v2092 = vsel %vm272, %v2087, 0
    %2094 = vmatprep.subr.bf16.mxu0 0
    %2095 = vmatpush1.bf16.xpose.msra.mxu0 %v2092
    %2096 = vmatprep.subr.bf16.mxu0 0
    %2097 = vmatpush1.bf16.xpose.msra.mxu0 0
    %2098 = vmatprep.subr.bf16.mxu0 0
    %2099 = vmatpush1.bf16.xpose.msra.mxu0 0
    %2100 = vmatprep.subr.bf16.mxu0 0
    %2101 = vmatpush1.bf16.xpose.msra.mxu0 0
    %2102 = vmatprep.subr.bf16.mxu0 0
    %2103 = vmatpush1.bf16.xpose.msra.mxu0 0
    %2104 = vmatprep.subr.bf16.mxu0 0
    %2105 = vmatpush1.bf16.xpose.msra.mxu0 0
    %2106 = vmatprep.subr.bf16.mxu0 0
    %2107 = vmatpush1.bf16.xpose.msra.mxu0 0
    %2108 = vmatprep.subr.bf16.mxu0 0
    %2109 = vmatpush1.bf16.xpose.msra.mxu0 0
    %2110 = vmatprep.subr.bf16.mxu0 0
    %2111 = vmatpush1.bf16.xpose.msra.mxu0 0
    %2112 = vmatprep.subr.bf16.mxu0 0
    %2113 = vmatpush1.bf16.xpose.msra.mxu0 0
    %2114 = vmatprep.subr.bf16.mxu0 0
    %2115 = vmatpush1.bf16.xpose.msra.mxu0 0
    %2116 = vmatprep.subr.bf16.mxu0 0
    %2117 = vmatpush1.bf16.xpose.msra.mxu0 0
    %2118 = vmatprep.subr.bf16.mxu0 0
    %2119 = vmatpush1.bf16.xpose.msra.mxu0 0
    %2120 = vmatprep.subr.bf16.mxu0 0
    %2121 = vmatpush1.bf16.xpose.msra.mxu0 0
    %2122 = vmatprep.subr.bf16.mxu0 0
    %2123 = vmatpush1.bf16.xpose.msra.mxu0 0
    %2124 = vmatprep.subr.bf16.mxu0 0
    %2125 = vmatpush1.bf16.xpose.msra.mxu0 0
    %2126 = vmatprep.mubr.bf16.mxu0 0
    %2127 = vmatmul.mubr.bf16.gmra.mrb[0].mxu0 %v2089
    %v2128 = vpop.f32.mrb[0].mxu0
    %v2129 = vadd.f32 0.0, %v2128
    %v2130 = vpop.f32.mrb[0].mxu0
    %v2131 = vpop.f32.mrb[0].mxu0
    %v2132 = vpop.f32.mrb[0].mxu0
    %2133 = vdwg.mxu0
    %v2134 = vmul.f32 %v2079, 0.35355338
    %v2135 = vmul.f32 %v2129, 0.35355338
    %v2136 = vsel %vm1691, %v2134, -inf
    %2137 = vmax.xlane.f32.xlu0 %v2136
    %v2138 = vpop.xlane.xlu0 %2137
    %v2139 = vsel %vm1691, %v2135, -inf
    %2140 = vmax.xlane.f32.xlu0 %v2139
    %v2141 = vpop.xlane.xlu0 %2140
    %v2142 = vsub.f32 %v2134, %v2138
    %v2143 = vsub.f32 %v2135, %v2141
    %v2144 = vmul.f32 %v2142, 1.442695
    %v2145 = vpow.pop %v2144
    %v2146 = vmul.f32 %v2143, 1.442695
    %v2147 = vpow.pop %v2146
    %v2148 = vsel %vm1691, %v2145, 0.0
    %2149 = vadd.xlane.f32.xlu0 %v2148
    %v2150 = vpop.xlane.xlu0 %2149
    %v2151 = vsel %vm1691, %v2147, 0.0
    %2152 = vadd.xlane.f32.xlu0 %v2151
    %v2153 = vpop.xlane.xlu0 %2152
    %v2154 = vrcp.pop %v2150
    %v2155 = vrcp.pop %v2153
    %v2156 = vmul.f32 %v2145, %v2154
    %v2157 = vmul.f32 %v2147, %v2155
    %v2158 = vpack.c.bf16 %v2156, %v2156
    %v2159 = vpack.c.bf16 %v2157, %v2157
    %2160 = vrot.lane.b32.xlu0 %v1589, 48
    %v2161 = vpop.permute.xlu0 %2160
    %v2163 = vsel %vm272, %v2158, 0
    %v2166 = vsel %vm399, %v2161, 0
    %2168 = vmatprep.subr.bf16.mxu0 0
    %2169 = vmatpush1.bf16.msra.mxu0 %v2166
    %2170 = vmatprep.subr.bf16.mxu0 0
    %2171 = vmatpush1.bf16.msra.mxu0 0
    %2172 = vmatprep.subr.bf16.mxu0 0
    %2173 = vmatpush1.bf16.msra.mxu0 0
    %2174 = vmatprep.subr.bf16.mxu0 0
    %2175 = vmatpush1.bf16.msra.mxu0 0
    %2176 = vmatprep.subr.bf16.mxu0 0
    %2177 = vmatpush1.bf16.msra.mxu0 0
    %2178 = vmatprep.subr.bf16.mxu0 0
    %2179 = vmatpush1.bf16.msra.mxu0 0
    %2180 = vmatprep.subr.bf16.mxu0 0
    %2181 = vmatpush1.bf16.msra.mxu0 0
    %2182 = vmatprep.subr.bf16.mxu0 0
    %2183 = vmatpush1.bf16.msra.mxu0 0
    %2184 = vmatprep.subr.bf16.mxu0 0
    %2185 = vmatpush1.bf16.msra.mxu0 0
    %2186 = vmatprep.subr.bf16.mxu0 0
    %2187 = vmatpush1.bf16.msra.mxu0 0
    %2188 = vmatprep.subr.bf16.mxu0 0
    %2189 = vmatpush1.bf16.msra.mxu0 0
    %2190 = vmatprep.subr.bf16.mxu0 0
    %2191 = vmatpush1.bf16.msra.mxu0 0
    %2192 = vmatprep.subr.bf16.mxu0 0
    %2193 = vmatpush1.bf16.msra.mxu0 0
    %2194 = vmatprep.subr.bf16.mxu0 0
    %2195 = vmatpush1.bf16.msra.mxu0 0
    %2196 = vmatprep.subr.bf16.mxu0 0
    %2197 = vmatpush1.bf16.msra.mxu0 0
    %2198 = vmatprep.subr.bf16.mxu0 0
    %2199 = vmatpush1.bf16.msra.mxu0 0
    %2200 = vmatprep.mubr.bf16.mxu0 0
    %2201 = vmatmul.mubr.bf16.gmra.mrb[0].mxu0 %v2163
    %v2202 = vpop.f32.mrb[0].mxu0
    %v2203 = vadd.f32 0.0, %v2202
    %v2204 = vpop.f32.mrb[0].mxu0
    %v2205 = vpop.f32.mrb[0].mxu0
    %v2206 = vpop.f32.mrb[0].mxu0
    %2207 = vdwg.mxu0
    %2208 = vrot.lane.b32.xlu0 %v1590, 48
    %v2209 = vpop.permute.xlu0 %2208
    %v2211 = vsel %vm272, %v2159, 0
    %v2214 = vsel %vm399, %v2209, 0
    %2216 = vmatprep.subr.bf16.mxu0 0
    %2217 = vmatpush1.bf16.msra.mxu0 %v2214
    %2218 = vmatprep.subr.bf16.mxu0 0
    %2219 = vmatpush1.bf16.msra.mxu0 0
    %2220 = vmatprep.subr.bf16.mxu0 0
    %2221 = vmatpush1.bf16.msra.mxu0 0
    %2222 = vmatprep.subr.bf16.mxu0 0
    %2223 = vmatpush1.bf16.msra.mxu0 0
    %2224 = vmatprep.subr.bf16.mxu0 0
    %2225 = vmatpush1.bf16.msra.mxu0 0
    %2226 = vmatprep.subr.bf16.mxu0 0
    %2227 = vmatpush1.bf16.msra.mxu0 0
    %2228 = vmatprep.subr.bf16.mxu0 0
    %2229 = vmatpush1.bf16.msra.mxu0 0
    %2230 = vmatprep.subr.bf16.mxu0 0
    %2231 = vmatpush1.bf16.msra.mxu0 0
    %2232 = vmatprep.subr.bf16.mxu0 0
    %2233 = vmatpush1.bf16.msra.mxu0 0
    %2234 = vmatprep.subr.bf16.mxu0 0
    %2235 = vmatpush1.bf16.msra.mxu0 0
    %2236 = vmatprep.subr.bf16.mxu0 0
    %2237 = vmatpush1.bf16.msra.mxu0 0
    %2238 = vmatprep.subr.bf16.mxu0 0
    %2239 = vmatpush1.bf16.msra.mxu0 0
    %2240 = vmatprep.subr.bf16.mxu0 0
    %2241 = vmatpush1.bf16.msra.mxu0 0
    %2242 = vmatprep.subr.bf16.mxu0 0
    %2243 = vmatpush1.bf16.msra.mxu0 0
    %2244 = vmatprep.subr.bf16.mxu0 0
    %2245 = vmatpush1.bf16.msra.mxu0 0
    %2246 = vmatprep.subr.bf16.mxu0 0
    %2247 = vmatpush1.bf16.msra.mxu0 0
    %2248 = vmatprep.mubr.bf16.mxu0 0
    %2249 = vmatmul.mubr.bf16.gmra.mrb[0].mxu0 %v2211
    %v2250 = vpop.f32.mrb[0].mxu0
    %v2251 = vadd.f32 0.0, %v2250
    %v2252 = vpop.f32.mrb[0].mxu0
    %v2253 = vpop.f32.mrb[0].mxu0
    %v2254 = vpop.f32.mrb[0].mxu0
    %2255 = vdwg.mxu0
    %2256 = vrot.lane.b32.xlu0 %v1589, 104
    %v2257 = vpop.permute.xlu0 %2256
    %2258 = vrot.lane.b32.xlu0 %v1589, 72
    %v2259 = vpop.permute.xlu0 %2258
    %v2261 = vsel %vm272, %v2257, 0
    %v2264 = vsel %vm272, %v2259, 0
    %2266 = vmatprep.subr.bf16.mxu0 0
    %2267 = vmatpush1.bf16.xpose.msra.mxu0 %v2264
    %2268 = vmatprep.subr.bf16.mxu0 0
    %2269 = vmatpush1.bf16.xpose.msra.mxu0 0
    %2270 = vmatprep.subr.bf16.mxu0 0
    %2271 = vmatpush1.bf16.xpose.msra.mxu0 0
    %2272 = vmatprep.subr.bf16.mxu0 0
    %2273 = vmatpush1.bf16.xpose.msra.mxu0 0
    %2274 = vmatprep.subr.bf16.mxu0 0
    %2275 = vmatpush1.bf16.xpose.msra.mxu0 0
    %2276 = vmatprep.subr.bf16.mxu0 0
    %2277 = vmatpush1.bf16.xpose.msra.mxu0 0
    %2278 = vmatprep.subr.bf16.mxu0 0
    %2279 = vmatpush1.bf16.xpose.msra.mxu0 0
    %2280 = vmatprep.subr.bf16.mxu0 0
    %2281 = vmatpush1.bf16.xpose.msra.mxu0 0
    %2282 = vmatprep.subr.bf16.mxu0 0
    %2283 = vmatpush1.bf16.xpose.msra.mxu0 0
    %2284 = vmatprep.subr.bf16.mxu0 0
    %2285 = vmatpush1.bf16.xpose.msra.mxu0 0
    %2286 = vmatprep.subr.bf16.mxu0 0
    %2287 = vmatpush1.bf16.xpose.msra.mxu0 0
    %2288 = vmatprep.subr.bf16.mxu0 0
    %2289 = vmatpush1.bf16.xpose.msra.mxu0 0
    %2290 = vmatprep.subr.bf16.mxu0 0
    %2291 = vmatpush1.bf16.xpose.msra.mxu0 0
    %2292 = vmatprep.subr.bf16.mxu0 0
    %2293 = vmatpush1.bf16.xpose.msra.mxu0 0
    %2294 = vmatprep.subr.bf16.mxu0 0
    %2295 = vmatpush1.bf16.xpose.msra.mxu0 0
    %2296 = vmatprep.subr.bf16.mxu0 0
    %2297 = vmatpush1.bf16.xpose.msra.mxu0 0
    %2298 = vmatprep.mubr.bf16.mxu0 0
    %2299 = vmatmul.mubr.bf16.gmra.mrb[0].mxu0 %v2261
    %v2300 = vpop.f32.mrb[0].mxu0
    %v2301 = vadd.f32 0.0, %v2300
    %v2302 = vpop.f32.mrb[0].mxu0
    %v2303 = vpop.f32.mrb[0].mxu0
    %v2304 = vpop.f32.mrb[0].mxu0
    %2305 = vdwg.mxu0
    %2306 = vrot.lane.b32.xlu0 %v1590, 104
    %v2307 = vpop.permute.xlu0 %2306
    %2308 = vrot.lane.b32.xlu0 %v1590, 72
    %v2309 = vpop.permute.xlu0 %2308
    %v2311 = vsel %vm272, %v2307, 0
    %v2314 = vsel %vm272, %v2309, 0
    %2316 = vmatprep.subr.bf16.mxu0 0
    %2317 = vmatpush1.bf16.xpose.msra.mxu0 %v2314
    %2318 = vmatprep.subr.bf16.mxu0 0
    %2319 = vmatpush1.bf16.xpose.msra.mxu0 0
    %2320 = vmatprep.subr.bf16.mxu0 0
    %2321 = vmatpush1.bf16.xpose.msra.mxu0 0
    %2322 = vmatprep.subr.bf16.mxu0 0
    %2323 = vmatpush1.bf16.xpose.msra.mxu0 0
    %2324 = vmatprep.subr.bf16.mxu0 0
    %2325 = vmatpush1.bf16.xpose.msra.mxu0 0
    %2326 = vmatprep.subr.bf16.mxu0 0
    %2327 = vmatpush1.bf16.xpose.msra.mxu0 0
    %2328 = vmatprep.subr.bf16.mxu0 0
    %2329 = vmatpush1.bf16.xpose.msra.mxu0 0
    %2330 = vmatprep.subr.bf16.mxu0 0
    %2331 = vmatpush1.bf16.xpose.msra.mxu0 0
    %2332 = vmatprep.subr.bf16.mxu0 0
    %2333 = vmatpush1.bf16.xpose.msra.mxu0 0
    %2334 = vmatprep.subr.bf16.mxu0 0
    %2335 = vmatpush1.bf16.xpose.msra.mxu0 0
    %2336 = vmatprep.subr.bf16.mxu0 0
    %2337 = vmatpush1.bf16.xpose.msra.mxu0 0
    %2338 = vmatprep.subr.bf16.mxu0 0
    %2339 = vmatpush1.bf16.xpose.msra.mxu0 0
    %2340 = vmatprep.subr.bf16.mxu0 0
    %2341 = vmatpush1.bf16.xpose.msra.mxu0 0
    %2342 = vmatprep.subr.bf16.mxu0 0
    %2343 = vmatpush1.bf16.xpose.msra.mxu0 0
    %2344 = vmatprep.subr.bf16.mxu0 0
    %2345 = vmatpush1.bf16.xpose.msra.mxu0 0
    %2346 = vmatprep.subr.bf16.mxu0 0
    %2347 = vmatpush1.bf16.xpose.msra.mxu0 0
    %2348 = vmatprep.mubr.bf16.mxu0 0
    %2349 = vmatmul.mubr.bf16.gmra.mrb[0].mxu0 %v2311
    %v2350 = vpop.f32.mrb[0].mxu0
    %v2351 = vadd.f32 0.0, %v2350
    %v2352 = vpop.f32.mrb[0].mxu0
    %v2353 = vpop.f32.mrb[0].mxu0
    %v2354 = vpop.f32.mrb[0].mxu0
    %2355 = vdwg.mxu0
    %v2356 = vmul.f32 %v2301, 0.35355338
    %v2357 = vmul.f32 %v2351, 0.35355338
    %v2358 = vsel %vm1691, %v2356, -inf
    %2359 = vmax.xlane.f32.xlu0 %v2358
    %v2360 = vpop.xlane.xlu0 %2359
    %v2361 = vsel %vm1691, %v2357, -inf
    %2362 = vmax.xlane.f32.xlu0 %v2361
    %v2363 = vpop.xlane.xlu0 %2362
    %v2364 = vsub.f32 %v2356, %v2360
    %v2365 = vsub.f32 %v2357, %v2363
    %v2366 = vmul.f32 %v2364, 1.442695
    %v2367 = vpow.pop %v2366
    %v2368 = vmul.f32 %v2365, 1.442695
    %v2369 = vpow.pop %v2368
    %v2370 = vsel %vm1691, %v2367, 0.0
    %2371 = vadd.xlane.f32.xlu0 %v2370
    %v2372 = vpop.xlane.xlu0 %2371
    %v2373 = vsel %vm1691, %v2369, 0.0
    %2374 = vadd.xlane.f32.xlu0 %v2373
    %v2375 = vpop.xlane.xlu0 %2374
    %v2376 = vrcp.pop %v2372
    %v2377 = vrcp.pop %v2375
    %v2378 = vmul.f32 %v2367, %v2376
    %v2379 = vmul.f32 %v2369, %v2377
    %v2380 = vpack.c.bf16 %v2378, %v2378
    %v2381 = vpack.c.bf16 %v2379, %v2379
    %2382 = vrot.lane.b32.xlu0 %v1589, 40
    %v2383 = vpop.permute.xlu0 %2382
    %v2385 = vsel %vm272, %v2380, 0
    %v2388 = vsel %vm399, %v2383, 0
    %2390 = vmatprep.subr.bf16.mxu0 0
    %2391 = vmatpush1.bf16.msra.mxu0 %v2388
    %2392 = vmatprep.subr.bf16.mxu0 0
    %2393 = vmatpush1.bf16.msra.mxu0 0
    %2394 = vmatprep.subr.bf16.mxu0 0
    %2395 = vmatpush1.bf16.msra.mxu0 0
    %2396 = vmatprep.subr.bf16.mxu0 0
    %2397 = vmatpush1.bf16.msra.mxu0 0
    %2398 = vmatprep.subr.bf16.mxu0 0
    %2399 = vmatpush1.bf16.msra.mxu0 0
    %2400 = vmatprep.subr.bf16.mxu0 0
    %2401 = vmatpush1.bf16.msra.mxu0 0
    %2402 = vmatprep.subr.bf16.mxu0 0
    %2403 = vmatpush1.bf16.msra.mxu0 0
    %2404 = vmatprep.subr.bf16.mxu0 0
    %2405 = vmatpush1.bf16.msra.mxu0 0
    %2406 = vmatprep.subr.bf16.mxu0 0
    %2407 = vmatpush1.bf16.msra.mxu0 0
    %2408 = vmatprep.subr.bf16.mxu0 0
    %2409 = vmatpush1.bf16.msra.mxu0 0
    %2410 = vmatprep.subr.bf16.mxu0 0
    %2411 = vmatpush1.bf16.msra.mxu0 0
    %2412 = vmatprep.subr.bf16.mxu0 0
    %2413 = vmatpush1.bf16.msra.mxu0 0
    %2414 = vmatprep.subr.bf16.mxu0 0
    %2415 = vmatpush1.bf16.msra.mxu0 0
    %2416 = vmatprep.subr.bf16.mxu0 0
    %2417 = vmatpush1.bf16.msra.mxu0 0
    %2418 = vmatprep.subr.bf16.mxu0 0
    %2419 = vmatpush1.bf16.msra.mxu0 0
    %2420 = vmatprep.subr.bf16.mxu0 0
    %2421 = vmatpush1.bf16.msra.mxu0 0
    %2422 = vmatprep.mubr.bf16.mxu0 0
    %2423 = vmatmul.mubr.bf16.gmra.mrb[0].mxu0 %v2385
    %v2424 = vpop.f32.mrb[0].mxu0
    %v2425 = vadd.f32 0.0, %v2424
    %v2426 = vpop.f32.mrb[0].mxu0
    %v2427 = vpop.f32.mrb[0].mxu0
    %v2428 = vpop.f32.mrb[0].mxu0
    %2429 = vdwg.mxu0
    %2430 = vrot.lane.b32.xlu0 %v1590, 40
    %v2431 = vpop.permute.xlu0 %2430
    %v2433 = vsel %vm272, %v2381, 0
    %v2436 = vsel %vm399, %v2431, 0
    %2438 = vmatprep.subr.bf16.mxu0 0
    %2439 = vmatpush1.bf16.msra.mxu0 %v2436
    %2440 = vmatprep.subr.bf16.mxu0 0
    %2441 = vmatpush1.bf16.msra.mxu0 0
    %2442 = vmatprep.subr.bf16.mxu0 0
    %2443 = vmatpush1.bf16.msra.mxu0 0
    %2444 = vmatprep.subr.bf16.mxu0 0
    %2445 = vmatpush1.bf16.msra.mxu0 0
    %2446 = vmatprep.subr.bf16.mxu0 0
    %2447 = vmatpush1.bf16.msra.mxu0 0
    %2448 = vmatprep.subr.bf16.mxu0 0
    %2449 = vmatpush1.bf16.msra.mxu0 0
    %2450 = vmatprep.subr.bf16.mxu0 0
    %2451 = vmatpush1.bf16.msra.mxu0 0
    %2452 = vmatprep.subr.bf16.mxu0 0
    %2453 = vmatpush1.bf16.msra.mxu0 0
    %2454 = vmatprep.subr.bf16.mxu0 0
    %2455 = vmatpush1.bf16.msra.mxu0 0
    %2456 = vmatprep.subr.bf16.mxu0 0
    %2457 = vmatpush1.bf16.msra.mxu0 0
    %2458 = vmatprep.subr.bf16.mxu0 0
    %2459 = vmatpush1.bf16.msra.mxu0 0
    %2460 = vmatprep.subr.bf16.mxu0 0
    %2461 = vmatpush1.bf16.msra.mxu0 0
    %2462 = vmatprep.subr.bf16.mxu0 0
    %2463 = vmatpush1.bf16.msra.mxu0 0
    %2464 = vmatprep.subr.bf16.mxu0 0
    %2465 = vmatpush1.bf16.msra.mxu0 0
    %2466 = vmatprep.subr.bf16.mxu0 0
    %2467 = vmatpush1.bf16.msra.mxu0 0
    %2468 = vmatprep.subr.bf16.mxu0 0
    %2469 = vmatpush1.bf16.msra.mxu0 0
    %2470 = vmatprep.mubr.bf16.mxu0 0
    %2471 = vmatmul.mubr.bf16.gmra.mrb[0].mxu0 %v2433
    %v2472 = vpop.f32.mrb[0].mxu0
    %v2473 = vadd.f32 0.0, %v2472
    %v2474 = vpop.f32.mrb[0].mxu0
    %v2475 = vpop.f32.mrb[0].mxu0
    %v2476 = vpop.f32.mrb[0].mxu0
    %2477 = vdwg.mxu0
    %2480 = vrot.lane.b32.xlu0 %v1981, 8
    %v2481 = vpop.permute.xlu0 %2480
    %2482 = vrot.lane.b32.xlu0 %v2029, 8
    %v2483 = vpop.permute.xlu0 %2482
    %2488 = vrot.lane.b32.xlu0 %v2203, 16
    %v2489 = vpop.permute.xlu0 %2488
    %2490 = vrot.lane.b32.xlu0 %v2251, 16
    %v2491 = vpop.permute.xlu0 %2490
    %2496 = vrot.lane.b32.xlu0 %v2425, 24
    %v2497 = vpop.permute.xlu0 %2496
    %2498 = vrot.lane.b32.xlu0 %v2473, 24
    %v2499 = vpop.permute.xlu0 %2498
    %v2502 = vsel %vm272, %v1759, %v2481
    %v2503 = vsel %vm272, %v1807, %v2483
    %v2504 = vsel %vm1183, %v2502, %v2489
    %v2505 = vsel %vm1183, %v2503, %v2491
    %v2506 = vsel %vm1186, %v2504, %v2497
    %v2507 = vsel %vm1186, %v2505, %v2499
    %v2508 = vpack.c.bf16 %v2506, %v2506
    %v2509 = vpack.c.bf16 %v2507, %v2507
    %s2510 = scalar_lea.vmem %s7, 16
    %v2511 = vld [vmem:[%s2510] sm:$0xf]
    %v2512 = vld [vmem:[%s2510 + $0x4] sm:$0xf]
    %v2513 = vld [vmem:[%s2510 + $0x8] sm:$0xf]
    %v2514 = vld [vmem:[%s2510 + $0xc] sm:$0xf]
    %s2515 = scalar_lea.vmem %s8, 1
    %v2516 = vld [vmem:[%s2515] sm:$0x1]
    %v2518 = vlaneseq
    %v2519 = vshrl.u32 %v2518, 7
    %v2520 = vsub.s32 0, %v2519
    %v2521 = vrot.slane %v2516, %v2520
    %v2525 = vunpack.c.l.b16 %v2508
    %v2526 = vunpack.c.l.b16 %v2509
    %v2527 = vrot.slane %v2526, 7
    %vm2528 = vcmask 1041409
    %v2529 = vsel %vm2528, %v2527, %v2525
    %v2530 = vpack.c.b16 %v2529, %v2529
    %v2535 = vunpack.c.l.b16 %v2511
    %v2536 = vunpack.c.l.b16 %v2512
    %v2537 = vunpack.c.l.b16 %v2513
    %v2538 = vunpack.c.l.b16 %v2514
    %v2539 = vpack.c.b16 %v2536, %v2535
    %v2540 = vpack.c.b16 %v2538, %v2537
    %v2544 = vsel %vm155, %v2530, 0
    %2546 = vmatprep.subr.bf16.mxu0 0
    %2547 = vmatpush1.bf16.msra.mxu0 %v2539
    %2548 = vmatprep.subr.bf16.mxu0 0
    %2549 = vmatpush1.bf16.msra.mxu0 %v2540
    %2550 = vmatprep.subr.bf16.mxu0 0
    %2551 = vmatpush1.bf16.msra.mxu0 0
    %2552 = vmatprep.subr.bf16.mxu0 0
    %2553 = vmatpush1.bf16.msra.mxu0 0
    %2554 = vmatprep.subr.bf16.mxu0 0
    %2555 = vmatpush1.bf16.msra.mxu0 0
    %2556 = vmatprep.subr.bf16.mxu0 0
    %2557 = vmatpush1.bf16.msra.mxu0 0
    %2558 = vmatprep.subr.bf16.mxu0 0
    %2559 = vmatpush1.bf16.msra.mxu0 0
    %2560 = vmatprep.subr.bf16.mxu0 0
    %2561 = vmatpush1.bf16.msra.mxu0 0
    %2562 = vmatprep.subr.bf16.mxu0 0
    %2563 = vmatpush1.bf16.msra.mxu0 0
    %2564 = vmatprep.subr.bf16.mxu0 0
    %2565 = vmatpush1.bf16.msra.mxu0 0
    %2566 = vmatprep.subr.bf16.mxu0 0
    %2567 = vmatpush1.bf16.msra.mxu0 0
    %2568 = vmatprep.subr.bf16.mxu0 0
    %2569 = vmatpush1.bf16.msra.mxu0 0
    %2570 = vmatprep.subr.bf16.mxu0 0
    %2571 = vmatpush1.bf16.msra.mxu0 0
    %2572 = vmatprep.subr.bf16.mxu0 0
    %2573 = vmatpush1.bf16.msra.mxu0 0
    %2574 = vmatprep.subr.bf16.mxu0 0
    %2575 = vmatpush1.bf16.msra.mxu0 0
    %2576 = vmatprep.subr.bf16.mxu0 0
    %2577 = vmatpush1.bf16.msra.mxu0 0
    %2578 = vmatprep.mubr.bf16.mxu0 0
    %2579 = vmatmul.mubr.bf16.gmra.mrb[0].mxu0 %v2544
    %v2580 = vpop.f32.mrb[0].mxu0
    %v2581 = vadd.f32 %v2521, %v2580
    %v2582 = vpop.f32.mrb[0].mxu0
    %v2583 = vpop.f32.mrb[0].mxu0
    %v2584 = vpop.f32.mrb[0].mxu0
    %2585 = vdwg.mxu0
    %v2587 = vrot.slane %v2581, 1
    %v2590 = vadd.f32 %v1517, %v2581
    %v2591 = vadd.f32 %v1518, %v2587
    %s2592 = scalar_lea.vmem %s9, 1
    %v2593 = vld [vmem:[%s2592] sm:$0x1]
    %s2594 = scalar_lea.vmem %s10, 1
    %v2595 = vld [vmem:[%s2594] sm:$0x1]
    %v2598 = vrot.slane %v2591, 7
    %v2599 = vsel %vm2528, %v2598, %v2590
    %vm2601 = vcmask 254976
    %v2602 = vsel %vm2601, %v2599, 0.0
    %2603 = vadd.xlane.f32.xlu0 %v2602
    %v2604 = vpop.xlane.xlu0 %2603
    %v2605 = vmul.f32 %v2604, %v162
    %v2607 = vrot.slane %v2605, 1
    %v2610 = vsub.f32 %v2590, %v2605
    %v2611 = vsub.f32 %v2591, %v2607
    %v2612 = vmul.f32 %v2610, %v2610
    %v2613 = vmul.f32 %v2611, %v2611
    %v2616 = vrot.slane %v2613, 7
    %v2617 = vsel %vm2528, %v2616, %v2612
    %v2619 = vsel %vm2601, %v2617, 0.0
    %2620 = vadd.xlane.f32.xlu0 %v2619
    %v2621 = vpop.xlane.xlu0 %2620
    %v2622 = vmul.f32 %v2621, %v162
    %v2623 = vadd.f32 %v2622, 1e-12
    %v2624 = vrsqrt.pop %v2623
    %v2626 = vrot.slane %v2624, 1
    %v2629 = vmul.f32 %v2610, %v2624
    %v2630 = vmul.f32 %v2611, %v2626
    %v2632 = vlaneseq
    %v2633 = vshrl.u32 %v2632, 7
    %v2634 = vsub.s32 0, %v2633
    %v2635 = vrot.slane %v2593, %v2634
    %v2637 = vmul.f32 %v2629, %v2635
    %v2638 = vmul.f32 %v2630, %v2635
    %v2640 = vlaneseq
    %v2641 = vshrl.u32 %v2640, 7
    %v2642 = vsub.s32 0, %v2641
    %v2643 = vrot.slane %v2595, %v2642
    %v2645 = vadd.f32 %v2637, %v2643
    %v2646 = vadd.f32 %v2638, %v2643
    %v2647 = vpack.c.bf16 %v2645, %v2645
    %v2648 = vpack.c.bf16 %v2646, %v2646
    %s2649 = scalar_lea.vmem %s11, 16
    %v2650 = vld [vmem:[%s2649] sm:$0xf]
    %v2651 = vld [vmem:[%s2649 + $0x4] sm:$0xf]
    %v2652 = vld [vmem:[%s2649 + $0x8] sm:$0xf]
    %v2653 = vld [vmem:[%s2649 + $0xc] sm:$0xf]
    %s2654 = scalar_lea.vmem %s12, 1
    %v2655 = vld [vmem:[%s2654] sm:$0x1]
    %v2657 = vlaneseq
    %v2658 = vshrl.u32 %v2657, 7
    %v2659 = vsub.s32 0, %v2658
    %v2660 = vrot.slane %v2655, %v2659
    %v2664 = vunpack.c.l.b16 %v2647
    %v2665 = vunpack.c.l.b16 %v2648
    %v2666 = vrot.slane %v2665, 7
    %v2667 = vsel %vm2528, %v2666, %v2664
    %v2668 = vpack.c.b16 %v2667, %v2667
    %v2673 = vunpack.c.l.b16 %v2650
    %v2674 = vunpack.c.l.b16 %v2651
    %v2675 = vunpack.c.l.b16 %v2652
    %v2676 = vunpack.c.l.b16 %v2653
    %v2677 = vpack.c.b16 %v2674, %v2673
    %v2678 = vpack.c.b16 %v2676, %v2675
    %v2682 = vsel %vm155, %v2668, 0
    %2684 = vmatprep.subr.bf16.mxu0 0
    %2685 = vmatpush1.bf16.msra.mxu0 %v2677
    %2686 = vmatprep.subr.bf16.mxu0 0
    %2687 = vmatpush1.bf16.msra.mxu0 %v2678
    %2688 = vmatprep.subr.bf16.mxu0 0
    %2689 = vmatpush1.bf16.msra.mxu0 0
    %2690 = vmatprep.subr.bf16.mxu0 0
    %2691 = vmatpush1.bf16.msra.mxu0 0
    %2692 = vmatprep.subr.bf16.mxu0 0
    %2693 = vmatpush1.bf16.msra.mxu0 0
    %2694 = vmatprep.subr.bf16.mxu0 0
    %2695 = vmatpush1.bf16.msra.mxu0 0
    %2696 = vmatprep.subr.bf16.mxu0 0
    %2697 = vmatpush1.bf16.msra.mxu0 0
    %2698 = vmatprep.subr.bf16.mxu0 0
    %2699 = vmatpush1.bf16.msra.mxu0 0
    %2700 = vmatprep.subr.bf16.mxu0 0
    %2701 = vmatpush1.bf16.msra.mxu0 0
    %2702 = vmatprep.subr.bf16.mxu0 0
    %2703 = vmatpush1.bf16.msra.mxu0 0
    %2704 = vmatprep.subr.bf16.mxu0 0
    %2705 = vmatpush1.bf16.msra.mxu0 0
    %2706 = vmatprep.subr.bf16.mxu0 0
    %2707 = vmatpush1.bf16.msra.mxu0 0
    %2708 = vmatprep.subr.bf16.mxu0 0
    %2709 = vmatpush1.bf16.msra.mxu0 0
    %2710 = vmatprep.subr.bf16.mxu0 0
    %2711 = vmatpush1.bf16.msra.mxu0 0
    %2712 = vmatprep.subr.bf16.mxu0 0
    %2713 = vmatpush1.bf16.msra.mxu0 0
    %2714 = vmatprep.subr.bf16.mxu0 0
    %2715 = vmatpush1.bf16.msra.mxu0 0
    %2716 = vmatprep.mubr.bf16.mxu0 0
    %2717 = vmatmul.mubr.bf16.gmra.mrb[0].mxu0 %v2682
    %v2718 = vpop.f32.mrb[0].mxu0
    %v2719 = vadd.f32 %v2660, %v2718
    %v2720 = vpop.f32.mrb[0].mxu0
    %v2721 = vpop.f32.mrb[0].mxu0
    %v2722 = vpop.f32.mrb[0].mxu0
    %2723 = vdwg.mxu0
    %v2724 = vmul.f32 %v2719, 0.5
    %v2725 = vmul.f32 %v2719, 0.044715
    %v2726 = vmul.f32 %v2725, %v2719
    %v2727 = vmul.f32 %v2726, %v2719
    %v2728 = vadd.f32 %v2719, %v2727
    %v2729 = vmul.f32 %v2728, 0.7978846
    %v2730 = vtanh.pop %v2729
    %v2731 = vadd.f32 %v2730, 1.0
    %v2732 = vmul.f32 %v2724, %v2731
    %v2733 = vpack.c.bf16 %v2732, %v2732
    %s2734 = scalar_lea.vmem %s13, 32
    %v2735 = vld [vmem:[%s2734] sm:$0xf]
    %v2736 = vld [vmem:[%s2734 + $0x4] sm:$0xf]
    %v2737 = vld [vmem:[%s2734 + $0x8] sm:$0xf]
    %v2738 = vld [vmem:[%s2734 + $0xc] sm:$0xf]
    %v2739 = vld [vmem:[%s2734 + $0x10] sm:$0xf]
    %v2740 = vld [vmem:[%s2734 + $0x14] sm:$0xf]
    %v2741 = vld [vmem:[%s2734 + $0x18] sm:$0xf]
    %v2742 = vld [vmem:[%s2734 + $0x1c] sm:$0xf]
    %s2743 = scalar_lea.vmem %s14, 1
    %v2744 = vld [vmem:[%s2743] sm:$0x1]
    %v2746 = vlaneseq
    %v2747 = vshrl.u32 %v2746, 7
    %v2748 = vsub.s32 0, %v2747
    %v2749 = vrot.slane %v2744, %v2748
    %v2759 = vunpack.c.l.b16 %v2735
    %v2760 = vunpack.c.l.b16 %v2736
    %v2761 = vunpack.c.l.b16 %v2737
    %v2762 = vunpack.c.l.b16 %v2738
    %v2763 = vunpack.c.l.b16 %v2739
    %v2764 = vunpack.c.l.b16 %v2740
    %v2765 = vunpack.c.l.b16 %v2741
    %v2766 = vunpack.c.l.b16 %v2742
    %v2767 = vpack.c.b16 %v2760, %v2759
    %v2768 = vpack.c.b16 %v2762, %v2761
    %v2769 = vpack.c.b16 %v2764, %v2763
    %v2770 = vpack.c.b16 %v2766, %v2765
    %v2776 = vsel %vm105, %v2733, 0
    %2778 = vmatprep.subr.bf16.mxu0 0
    %2779 = vmatpush1.bf16.msra.mxu0 %v2767
    %2780 = vmatprep.subr.bf16.mxu0 0
    %2781 = vmatpush1.bf16.msra.mxu0 %v2768
    %2782 = vmatprep.subr.bf16.mxu0 0
    %2783 = vmatpush1.bf16.msra.mxu0 %v2769
    %2784 = vmatprep.subr.bf16.mxu0 0
    %2785 = vmatpush1.bf16.msra.mxu0 %v2770
    %2786 = vmatprep.subr.bf16.mxu0 0
    %2787 = vmatpush1.bf16.msra.mxu0 0
    %2788 = vmatprep.subr.bf16.mxu0 0
    %2789 = vmatpush1.bf16.msra.mxu0 0
    %2790 = vmatprep.subr.bf16.mxu0 0
    %2791 = vmatpush1.bf16.msra.mxu0 0
    %2792 = vmatprep.subr.bf16.mxu0 0
    %2793 = vmatpush1.bf16.msra.mxu0 0
    %2794 = vmatprep.subr.bf16.mxu0 0
    %2795 = vmatpush1.bf16.msra.mxu0 0
    %2796 = vmatprep.subr.bf16.mxu0 0
    %2797 = vmatpush1.bf16.msra.mxu0 0
    %2798 = vmatprep.subr.bf16.mxu0 0
    %2799 = vmatpush1.bf16.msra.mxu0 0
    %2800 = vmatprep.subr.bf16.mxu0 0
    %2801 = vmatpush1.bf16.msra.mxu0 0
    %2802 = vmatprep.subr.bf16.mxu0 0
    %2803 = vmatpush1.bf16.msra.mxu0 0
    %2804 = vmatprep.subr.bf16.mxu0 0
    %2805 = vmatpush1.bf16.msra.mxu0 0
    %2806 = vmatprep.subr.bf16.mxu0 0
    %2807 = vmatpush1.bf16.msra.mxu0 0
    %2808 = vmatprep.subr.bf16.mxu0 0
    %2809 = vmatpush1.bf16.msra.mxu0 0
    %2810 = vmatprep.mubr.bf16.mxu0 0
    %2811 = vmatmul.mubr.bf16.gmra.mrb[0].mxu0 %v2776
    %v2812 = vpop.f32.mrb[0].mxu0
    %v2813 = vadd.f32 %v2749, %v2812
    %v2814 = vpop.f32.mrb[0].mxu0
    %v2815 = vpop.f32.mrb[0].mxu0
    %v2816 = vpop.f32.mrb[0].mxu0
    %2817 = vdwg.mxu0
    %v2819 = vrot.slane %v2813, 1
    %v2822 = vadd.f32 %v2645, %v2813
    %v2823 = vadd.f32 %v2646, %v2819
    %s2824 = scalar_lea.vmem %s15, 1
    %v2825 = vld [vmem:[%s2824] sm:$0x1]
    %s2826 = scalar_lea.vmem %s16, 1
    %v2827 = vld [vmem:[%s2826] sm:$0x1]
    %v2830 = vrot.slane %v2823, 7
    %v2831 = vsel %vm2528, %v2830, %v2822
    %v2833 = vsel %vm2601, %v2831, 0.0
    %2834 = vadd.xlane.f32.xlu0 %v2833
    %v2835 = vpop.xlane.xlu0 %2834
    %v2836 = vmul.f32 %v2835, %v162
    %v2838 = vrot.slane %v2836, 1
    %v2841 = vsub.f32 %v2822, %v2836
    %v2842 = vsub.f32 %v2823, %v2838
    %v2843 = vmul.f32 %v2841, %v2841
    %v2844 = vmul.f32 %v2842, %v2842
    %v2847 = vrot.slane %v2844, 7
    %v2848 = vsel %vm2528, %v2847, %v2843
    %v2850 = vsel %vm2601, %v2848, 0.0
    %2851 = vadd.xlane.f32.xlu0 %v2850
    %v2852 = vpop.xlane.xlu0 %2851
    %v2853 = vmul.f32 %v2852, %v162
    %v2854 = vadd.f32 %v2853, 1e-12
    %v2855 = vrsqrt.pop %v2854
    %v2857 = vrot.slane %v2855, 1
    %v2860 = vmul.f32 %v2841, %v2855
    %v2861 = vmul.f32 %v2842, %v2857
    %v2863 = vlaneseq
    %v2864 = vshrl.u32 %v2863, 7
    %v2865 = vsub.s32 0, %v2864
    %v2866 = vrot.slane %v2825, %v2865
    %v2868 = vmul.f32 %v2860, %v2866
    %v2869 = vmul.f32 %v2861, %v2866
    %v2871 = vlaneseq
    %v2872 = vshrl.u32 %v2871, 7
    %v2873 = vsub.s32 0, %v2872
    %v2874 = vrot.slane %v2827, %v2873
    %v2876 = vadd.f32 %v2868, %v2874
    %v2877 = vadd.f32 %v2869, %v2874
    %v2880 = vrot.slane %v2877, 7
    %v2881 = vsel %vm2528, %v2880, %v2876
    %2883 = vst.msk [vmem:[#allocation2] sm:$0x3] %vm2601, %v2881
    // Predicated region
    $region70: #{text_encoder_forward.1} parent=1 // pred_check
      _
    $region71: #{text_encoder_forward.1} parent=1 // pred_check_branch
      %2885 = sbr.rel (0) target = $region73
    $region72: #{text_encoder_forward.1} parent=1 // pred_region
      %s2887 = ssub.s32 32, 32
      %2888 = vsyncadd [#allocation3], %s2887
      %s2890 = sshll.u32 [#allocation2], 4
      %s2891 = int_to_ptr.vmem [resolvable:$true] %s2890
      %2893 = dma.vmem_to_hbm [thread:$0]  %s2891, 32, %s17, [#allocation3]
    $region73: #{text_encoder_forward.1} parent=1 // pred_fallthru
      _
    // Predicated region
    $region74: #{text_encoder_forward.1} parent=1 // pred_check
      _
    $region75: #{text_encoder_forward.1} parent=1 // pred_check_branch
      %2895 = sbr.rel (0) target = $region77
    $region76: #{text_encoder_forward.1} parent=1 // pred_region
      %2896 = dma.done [#allocation3], 32
    $region77: #{text_encoder_forward.1} parent=1 // pred_fallthru
      _
    %2897 = vsyncpa [#allocation3], 1

</llo_original>
